<compile_context>
chip_gen: v7x
topology: tpu7x:2x2x1
jax: 0.10.0
libtpu: 0.0.40
codegen_flags: <defaults>
</compile_context>

<pallas_src>
import functools

import jax
import jax.numpy as jnp
from jax.experimental import pallas as pl
from jax.experimental.pallas import tpu as pltpu


# ----------------------------------------------------------------------------
# Hardware-derived sizing (v5e/v6e: 128 MiB VMEM, v7x: 64 MiB per TensorCore).
# ----------------------------------------------------------------------------
try:
    _VMEM_CAP = int(pltpu.get_tpu_info().vmem_capacity_bytes)
except Exception:                      # conservative fallback: assume v7x-sized VMEM
    _VMEM_CAP = 64 * 1024 * 1024
_VMEM_LIMIT = min(int(_VMEM_CAP * 0.8), 100 * 1024 * 1024)
_BIG_VMEM = _VMEM_CAP >= 100 * 1024 * 1024          # v5e / v6e class parts


def _cdiv(a, b):
    return -(-a // b)


def _round_up(x, m):
    return _cdiv(x, m) * m


def _pick_tile(c):
    cands = (512, 256, 128) if _BIG_VMEM else (256, 128)
    for t in cands:
        if c % t == 0:
            return t
    return c


def _conv_band_rows(Ho, Wp, t_ci, t_co, KH):
    """Output rows per H band so that acc + double-buffered input band fit VMEM."""
    acc_rows = (_VMEM_LIMIT // 8) // (Wp * t_co * 4)
    in_rows = (_VMEM_LIMIT // 6) // (Wp * t_ci * 2 * 2) - (KH - 1)
    rows = max(8, min(acc_rows, in_rows))
    if rows >= Ho:
        return Ho, 1
    n_hb = _cdiv(Ho, rows)
    return _cdiv(Ho, n_hb), n_hb


# ----------------------------------------------------------------------------
# Pallas kernels
# ----------------------------------------------------------------------------
def _conv_kernel(x_ref, w_ref, b_ref, o_ref, acc_ref, *, TH, Wo, KH, KW, relu):
    """One (batch, H-band, Cout-tile, Cin-tile) grid step of a 'valid' convolution.

    x_ref  : (TH + KH - 1, Wp, t_ci)  bf16 input band (Wp % 16 == 0)
    w_ref  : (KH, KW, t_ci, t_co)     bf16
    b_ref  : (1, t_co)                f32
    o_ref  : (TH, Wo, t_co)           bf16
    acc_ref: (TH * Wp, t_co)          f32 accumulator over the flat (row, col) domain
    """
    ci = pl.program_id(3)

    @pl.when(ci == 0)
    def _init():
        acc_ref[...] = jnp.zeros_like(acc_ref)

    t_ci = x_ref.shape[-1]
    Wp = x_ref.shape[-2]
    n_flat = TH * Wp

    # Sum all KH*KW taps into a single f32 register tensor, then do ONE aligned
    # read-modify-write of the VMEM accumulator.  The kw column shift becomes a
    # flat-row rotation of the tap result; the wrapped rows land in the padded
    # columns (>= Wo) that _finalize slices off.
    total = None
    for kw in range(KW):
        part = None
        for kh in range(KH):
            # Aligned row-band slice + layout-preserving flat reshape (Wp % 16 == 0).
            rows = x_ref[kh:kh + TH, :, :].reshape(n_flat, t_ci)
            d = jnp.dot(rows, w_ref[kh, kw], preferred_element_type=jnp.float32)
            part = d if part is None else part + d
        if kw:
            part = jnp.concatenate([part[kw:], part[:kw]], axis=0)
        total = part if total is None else total + part
    acc_ref[...] += total

    @pl.when(ci == pl.num_programs(3) - 1)
    def _finalize():
        t_co = o_ref.shape[-1]
        out = acc_ref[...].reshape(TH, Wp, t_co)[:, :Wo, :]
        out = out + b_ref[...]
        if relu:
            out = jnp.maximum(out, 0.0)
        o_ref[...] = out.astype(o_ref.dtype)


def _maxpool_kernel(x_ref, o_ref):
    """2x2 max-pool of one (TH, W, C) band; even/odd W phases read with strided ds."""
    th, w, c = x_ref.shape
    wh = w // 2
    xe = x_ref[:, pl.ds(0, wh, stride=2), :]
    xo = x_ref[:, pl.ds(1, wh, stride=2), :]
    m = jnp.maximum(xe, xo)                      # (th, wh, c)
    m = m.reshape(th // 2, 2, wh, c)             # split leading dim only
    o_ref[...] = jnp.maximum(m[:, 0], m[:, 1])


def _final_kernel(x_ref, w_ref, b_ref, o_ref):
    """1x1 conv to a single channel: lane reduction, W-minor f32 output band."""
    x = x_ref[...].astype(jnp.float32)           # (TH, W, C)
    w = w_ref[...].astype(jnp.float32)           # (1, C)
    o_ref[...] = jnp.sum(x * w, axis=-1) + b_ref[...]


# ----------------------------------------------------------------------------
# pallas_call wrappers
# ----------------------------------------------------------------------------
def _conv_nhwc(x, w, b, *, relu, pad):
    """Stride-1 convolution of NHWC bf16 x with HWIO bf16 w, asymmetric padding."""
    B, H, W, Cin = x.shape
    KH, KW, _, Cout = w.shape
    pt, pb, pleft, pright = pad
    Ho = H + pt + pb - KH + 1
    Wo = W + pleft + pright - KW + 1
    Wp = _round_up(W + pleft + pright, 16)       # bf16 sublane packing
    assert Wp % 16 == 0 and Wp >= Wo + KW - 1

    t_ci = _pick_tile(Cin)
    t_co = _pick_tile(Cout)
    TH, n_hb = _conv_band_rows(Ho, Wp, t_ci, t_co, KH)
    Ho_pad = TH * n_hb
    Hp = Ho_pad + KH - 1

    xp = jnp.pad(x, ((0, 0),
                     (pt, pb + (Ho_pad - Ho)),
                     (pleft, Wp - W - pleft),
                     (0, 0)))
    assert xp.shape[1] == Hp and xp.shape[2] == Wp

    if n_hb == 1:
        x_spec = pl.BlockSpec((None, Hp, Wp, t_ci),
                              lambda bb, hb, co, ci: (bb, 0, 0, ci))
    else:
        # Overlapping H bands with a (KH-1)-row halo (element-indexed start offsets).
        x_spec = pl.BlockSpec((None, pl.Element(TH + KH - 1), Wp, t_ci),
                              lambda bb, hb, co, ci: (bb, hb * TH, 0, ci))

    kern = functools.partial(_conv_kernel, TH=TH, Wo=Wo, KH=KH, KW=KW, relu=relu)
    out = pl.pallas_call(
        kern,
        out_shape=jax.ShapeDtypeStruct((B, Ho_pad, Wo, Cout), x.dtype),
        grid=(B, n_hb, Cout // t_co, Cin // t_ci),
        in_specs=[
            x_spec,
            pl.BlockSpec((KH, KW, t_ci, t_co), lambda bb, hb, co, ci: (0, 0, ci, co)),
            pl.BlockSpec((1, t_co), lambda bb, hb, co, ci: (0, co)),
        ],
        out_specs=pl.BlockSpec((None, TH, Wo, t_co),
                               lambda bb, hb, co, ci: (bb, hb, 0, co)),
        scratch_shapes=[pltpu.VMEM((TH * Wp, t_co), jnp.float32)],
        compiler_params=pltpu.CompilerParams(
            dimension_semantics=("parallel", "parallel", "parallel", "arbitrary"),
            vmem_limit_bytes=_VMEM_LIMIT),
    )(xp, w, b.reshape(1, Cout).astype(jnp.float32))
    if Ho_pad != Ho:
        out = out[:, :Ho]
    return out


def conv2d(x, w, b, *, padding=1, relu=True):
    """nn.Conv2d(KHxKW, stride=1, padding) [+ ReLU]. NHWC, bf16."""
    return _conv_nhwc(x, w, b, relu=relu, pad=(padding, padding, padding, padding))


def conv_transpose2d(x, w_t, b, *, relu=True):
    """nn.ConvTranspose2d(k=3, stride=2, padding=1, output_padding=1) [+ ReLU]. NHWC.

    All 4 sub-pixel phases fused into one pallas_call: each phase's sub-kernel is
    zero-padded to 2x2 and concatenated along Cout -> weight (2, 2, Cin, 4*Cout);
    the phases are interleaved with a single depth-to-space shuffle.
    w_t is in PyTorch layout (Cin, Cout, 3, 3).
    """
    B, H, W, Cin = x.shape
    Cout = w_t.shape[1]
    w_hwio = jnp.transpose(w_t, (2, 3, 0, 1))            # (3, 3, Cin, Cout)

    wf = jnp.zeros((2, 2, Cin, 4, Cout), w_hwio.dtype)
    for r in (0, 1):
        for s in (0, 1):
            phase = 2 * r + s
            for dh in range(r + 1):
                for dw in range(s + 1):
                    wf = wf.at[dh, dw, :, phase, :].set(
                        w_hwio[1 + r - 2 * dh, 1 + s - 2 * dw])
    wf = wf.reshape(2, 2, Cin, 4 * Cout)
    bf = jnp.tile(b, 4)

    yf = _conv_nhwc(x, wf, bf, relu=relu, pad=(0, 1, 0, 1))   # (B, H, W, 4*Cout)
    y = yf.reshape(B, H, W, 2, 2, Cout)
    y = jnp.transpose(y, (0, 1, 3, 2, 4, 5)).reshape(B, 2 * H, 2 * W, Cout)
    return y


def _pool_band_rows(H, W, C):
    rows = max(2, (_VMEM_LIMIT // 6) // (W * C * 2 * 2))
    if rows >= H:
        return H
    th = 2
    for cand in range(2, min(H, rows) + 1, 2):
        if H % cand == 0:
            th = cand
    return th


def maxpool2x2(x):
    """nn.MaxPool2d(2, 2). NHWC, H-banded, phase split done in-kernel."""
    B, H, W, C = x.shape
    th = _pool_band_rows(H, W, C)
    n_hb = H // th
    return pl.pallas_call(
        _maxpool_kernel,
        out_shape=jax.ShapeDtypeStruct((B, H // 2, W // 2, C), x.dtype),
        grid=(B, n_hb),
        in_specs=[pl.BlockSpec((None, th, W, C), lambda b, h: (b, h, 0, 0))],
        out_specs=pl.BlockSpec((None, th // 2, W // 2, C), lambda b, h: (b, h, 0, 0)),
        compiler_params=pltpu.CompilerParams(
            dimension_semantics=("parallel", "parallel"),
            vmem_limit_bytes=_VMEM_LIMIT),
    )(x)


def _final_band_rows(H, W, C):
    rows = max(8, (_VMEM_LIMIT // 8) // (W * (C * 2 * 2 + 4)))
    if rows >= H:
        return H
    th = H
    for cand in range(8, min(H, rows) + 1, 8):
        if H % cand == 0:
            th = cand
    return th


def conv1x1_final(x, w_row, b):
    """nn.Conv2d(C, 1, kernel_size=1): single-channel f32 map (B, H, W)."""
    B, H, W, C = x.shape
    th = _final_band_rows(H, W, C)
    n_hb = H // th
    return pl.pallas_call(
        _final_kernel,
        out_shape=jax.ShapeDtypeStruct((B, H, W), jnp.float32),
        grid=(B, n_hb),
        in_specs=[
            pl.BlockSpec((None, th, W, C), lambda b_, h: (b_, h, 0, 0)),
            pl.BlockSpec((1, C), lambda b_, h: (0, 0)),
            pl.BlockSpec((1, 1), lambda b_, h: (0, 0)),
        ],
        out_specs=pl.BlockSpec((None, th, W), lambda b_, h: (b_, h, 0)),
        compiler_params=pltpu.CompilerParams(
            dimension_semantics=("parallel", "parallel"),
            vmem_limit_bytes=_VMEM_LIMIT),
    )(x, w_row, b)


# ----------------------------------------------------------------------------
# Parameters (deterministic synthetic init; shapes match UNet11(num_filters=32))
# ----------------------------------------------------------------------------
def _conv_w(key, kh, kw, cin, cout):
    std = (2.0 / (kh * kw * cin)) ** 0.5
    return (jax.random.normal(key, (kh, kw, cin, cout), jnp.float32) * std
            ).astype(jnp.bfloat16)


def _convt_w(key, cin, cout):
    std = (2.0 / (3 * 3 * cout)) ** 0.5
    return (jax.random.normal(key, (cin, cout, 3, 3), jnp.float32) * std
            ).astype(jnp.bfloat16)


def init_params(key):
    nf = 32
    keys = iter(jax.random.split(key, 32))

    def cw(cin, cout, k=3):
        return (_conv_w(next(keys), k, k, cin, cout),
                jnp.zeros((cout,), jnp.float32))

    def tw(cin, cout):
        return (_convt_w(next(keys), cin, cout),
                jnp.zeros((cout,), jnp.float32))

    p = {}
    # VGG11 encoder convs
    p["conv1"] = cw(3, 64)
    p["conv2"] = cw(64, 128)
    p["conv3s"] = cw(128, 256)
    p["conv3"] = cw(256, 256)
    p["conv4s"] = cw(256, 512)
    p["conv4"] = cw(512, 512)
    p["conv5s"] = cw(512, 512)
    p["conv5"] = cw(512, 512)
    # decoder blocks: ConvRelu(in, mid) + ConvTranspose2d(mid, out) + ReLU
    p["center"] = {"conv": cw(nf * 8 * 2, nf * 8 * 2), "deconv": tw(nf * 8 * 2, nf * 8)}
    p["dec5"] = {"conv": cw(nf * (16 + 8), nf * 8 * 2), "deconv": tw(nf * 8 * 2, nf * 8)}
    p["dec4"] = {"conv": cw(nf * (16 + 8), nf * 8 * 2), "deconv": tw(nf * 8 * 2, nf * 4)}
    p["dec3"] = {"conv": cw(nf * (8 + 4), nf * 4 * 2), "deconv": tw(nf * 4 * 2, nf * 2)}
    p["dec2"] = {"conv": cw(nf * (4 + 2), nf * 2 * 2), "deconv": tw(nf * 2 * 2, nf)}
    p["dec1"] = cw(nf * (2 + 1), nf)
    # final 1x1 conv kept in f32 (single output channel, lane-reduction kernel).
    p["final"] = (jax.random.normal(next(keys), (1, nf), jnp.float32) * (2.0 / nf) ** 0.5,
                  jnp.zeros((1, 1), jnp.float32))
    return p


# ----------------------------------------------------------------------------
# UNet11 forward (semantics of Model.forward == UNet11.forward)
# ----------------------------------------------------------------------------
def unet11_forward(p, x_nchw):
    x = jnp.transpose(x_nchw, (0, 2, 3, 1)).astype(jnp.bfloat16)  # NCHW -> NHWC bf16

    conv1 = conv2d(x, *p["conv1"])
    conv2 = conv2d(maxpool2x2(conv1), *p["conv2"])
    conv3s = conv2d(maxpool2x2(conv2), *p["conv3s"])
    conv3 = conv2d(conv3s, *p["conv3"])
    conv4s = conv2d(maxpool2x2(conv3), *p["conv4s"])
    conv4 = conv2d(conv4s, *p["conv4"])
    conv5s = conv2d(maxpool2x2(conv4), *p["conv5s"])
    conv5 = conv2d(conv5s, *p["conv5"])

    def dec_block(inp, blk):
        h = conv2d(inp, *blk["conv"])                 # ConvRelu
        return conv_transpose2d(h, *blk["deconv"])    # ConvTranspose2d + ReLU

    center = dec_block(maxpool2x2(conv5), p["center"])
    dec5 = dec_block(jnp.concatenate([center, conv5], axis=-1), p["dec5"])
    dec4 = dec_block(jnp.concatenate([dec5, conv4], axis=-1), p["dec4"])
    dec3 = dec_block(jnp.concatenate([dec4, conv3], axis=-1), p["dec3"])
    dec2 = dec_block(jnp.concatenate([dec3, conv2], axis=-1), p["dec2"])
    dec1 = conv2d(jnp.concatenate([dec2, conv1], axis=-1), *p["dec1"])

    out = conv1x1_final(dec1, *p["final"])            # (B, H, W) f32
    return out[:, None, :, :]                         # NCHW (B, 1, H, W)


# ----------------------------------------------------------------------------
# Per-kernel numerical checks against XLA references (bf16-friendly tolerances)
# ----------------------------------------------------------------------------
def _check_kernels(key):
    kx, kw, kwt = jax.random.split(key, 3)
    x = jax.random.normal(kx, (2, 8, 16, 8), jnp.float32).astype(jnp.bfloat16)
    w = (jax.random.normal(kw, (3, 3, 8, 16), jnp.float32) * 0.2).astype(jnp.bfloat16)
    b = jnp.linspace(-0.1, 0.1, 16).astype(jnp.float32)
    xf, wf = x.astype(jnp.float32), w.astype(jnp.float32)

    # conv2d (3x3, pad 1, ReLU)
    y = conv2d(x, w, b).astype(jnp.float32)
    ref = jax.lax.conv_general_dilated(
        xf, wf, (1, 1), ((1, 1), (1, 1)),
        dimension_numbers=("NHWC", "HWIO", "NHWC"),
        precision=jax.lax.Precision.HIGHEST) + b
    ref = jnp.maximum(ref, 0.0)
    err = float(jnp.abs(y - ref).max())
    assert jnp.allclose(y, ref, atol=0.08, rtol=0.08), f"conv2d mismatch {err}"

    # maxpool 2x2
    pm = maxpool2x2(x).astype(jnp.float32)
    refp = xf.reshape(2, 4, 2, 8, 2, 8).max(axis=(2, 4))
    assert jnp.allclose(pm, refp, atol=1e-6), "maxpool mismatch"

    # ConvTranspose2d(k=3, s=2, p=1, op=1) + ReLU (fused 4-phase kernel)
    wt = (jax.random.normal(kwt, (8, 16, 3, 3), jnp.float32) * 0.2).astype(jnp.bfloat16)
    yt = conv_transpose2d(x, wt, b).astype(jnp.float32)
    wref = jnp.transpose(jnp.flip(wt.astype(jnp.float32), axis=(2, 3)), (2, 3, 0, 1))
    reft = jax.lax.conv_general_dilated(
        xf, wref, (1, 1), ((1, 2), (1, 2)), lhs_dilation=(2, 2),
        dimension_numbers=("NHWC", "HWIO", "NHWC"),
        precision=jax.lax.Precision.HIGHEST) + b
    reft = jnp.maximum(reft, 0.0)
    errt = float(jnp.abs(yt - reft).max())
    assert jnp.allclose(yt, reft, atol=0.08, rtol=0.08), f"deconv mismatch {errt}"


# ----------------------------------------------------------------------------
if __name__ == "__main__":
    key = jax.random.PRNGKey(0)
    k_check, k_params, k_x = jax.random.split(key, 3)

    _check_kernels(k_check)

    params = init_params(k_params)
    # 5 levels of 2x2 pooling -> H, W must be multiples of 32.
    x = jax.random.normal(k_x, (2, 3, 64, 64), jnp.float32)

    fwd = jax.jit(unet11_forward)
    y = jax.block_until_ready(fwd(params, x))

    assert y.shape == (2, 1, 64, 64), y.shape
    assert bool(jnp.isfinite(y).all())
    print("KERNEL_OK")
</pallas_src>

<mosaic_0001>
module attributes {stable_mosaic.version = 11 : i64} {
  func.func @_conv_kernel(%arg0: i32, %arg1: i32, %arg2: i32, %arg3: i32, %arg4: memref<1x10x32x8xbf16, #tpu.memory_space<vmem>>, %arg5: memref<3x3x8x16xbf16, #tpu.memory_space<vmem>>, %arg6: memref<1x16xf32, #tpu.memory_space<vmem>>, %arg7: memref<1x8x16x16xbf16, #tpu.memory_space<vmem>>, %arg8: memref<256x16xf32, #tpu.memory_space<vmem>>) attributes {dimension_semantics = [#tpu.dimension_semantics<parallel>, #tpu.dimension_semantics<parallel>, #tpu.dimension_semantics<parallel>, #tpu.dimension_semantics<arbitrary>], iteration_bounds = array<i64: 2, 1, 1, 1>, scalar_prefetch = 0 : i64, scratch_operands = 1 : i64, tpu.core_type = #tpu.core_type<tc>, window_params = [{transform_indices = @transform_0, window_bounds = array<i64: 1, 10, 32, 8>}, {transform_indices = @transform_1, window_bounds = array<i64: 3, 3, 8, 16>}, {transform_indices = @transform_2, window_bounds = array<i64: 1, 16>}, {transform_indices = @transform_3, window_bounds = array<i64: 1, 8, 16, 16>}]} {
    %c0_i32 = arith.constant 0 : i32
    %0 = arith.cmpi eq, %arg3, %c0_i32 : i32
    %1 = arith.extui %0 : i1 to i32
    %c0_i32_0 = arith.constant 0 : i32
    %2 = arith.cmpi ne, %1, %c0_i32_0 : i32
    scf.if %2 {
      %cst_84 = arith.constant 0.000000e+00 : f32
      %77 = vector.broadcast %cst_84 : f32 to vector<256x16xf32>
      %c0_85 = arith.constant 0 : index
      %c0_86 = arith.constant 0 : index
      %78 = vector.load %arg8[%c0_85, %c0_86] : memref<256x16xf32, #tpu.memory_space<vmem>>, vector<256x16xf32>
      tpu.vector_store %arg8[%c0_85, %c0_86], %77 {strides = array<i32>} : memref<256x16xf32, #tpu.memory_space<vmem>>, vector<256x16xf32>,
    } else {
    }
    %c0 = arith.constant 0 : index
    %c0_1 = arith.constant 0 : index
    %c0_2 = arith.constant 0 : index
    %c0_3 = arith.constant 0 : index
    %3 = vector.load %arg4[%c0, %c0_1, %c0_2, %c0_3] : memref<1x10x32x8xbf16, #tpu.memory_space<vmem>>, vector<1x8x32x8xbf16>
    %4 = vector.shape_cast %3 : vector<1x8x32x8xbf16> to vector<8x32x8xbf16>
    %5 = vector.shape_cast %4 : vector<8x32x8xbf16> to vector<256x8xbf16>
    %c0_4 = arith.constant 0 : index
    %c0_5 = arith.constant 0 : index
    %c0_6 = arith.constant 0 : index
    %c0_7 = arith.constant 0 : index
    %6 = vector.load %arg5[%c0_4, %c0_5, %c0_6, %c0_7] : memref<3x3x8x16xbf16, #tpu.memory_space<vmem>>, vector<1x1x8x16xbf16>
    %7 = vector.shape_cast %6 : vector<1x1x8x16xbf16> to vector<8x16xbf16>
    %cst = arith.constant dense<0.000000e+00> : vector<256x16xf32>
    %8 = tpu.matmul %5, %7, %cst {dimension_numbers = #tpu.dot_dimension_numbers<[1], [0], [0], [1], [0, 0, 1, 1], [], []>} : vector<256x8xbf16>, vector<8x16xbf16>, vector<256x16xf32> -> vector<256x16xf32>
    %c0_8 = arith.constant 0 : index
    %c1 = arith.constant 1 : index
    %c0_9 = arith.constant 0 : index
    %c0_10 = arith.constant 0 : index
    %9 = vector.load %arg4[%c0_8, %c1, %c0_9, %c0_10] : memref<1x10x32x8xbf16, #tpu.memory_space<vmem>>, vector<1x8x32x8xbf16>
    %10 = vector.shape_cast %9 : vector<1x8x32x8xbf16> to vector<8x32x8xbf16>
    %11 = vector.shape_cast %10 : vector<8x32x8xbf16> to vector<256x8xbf16>
    %c1_11 = arith.constant 1 : index
    %c0_12 = arith.constant 0 : index
    %c0_13 = arith.constant 0 : index
    %c0_14 = arith.constant 0 : index
    %12 = vector.load %arg5[%c1_11, %c0_12, %c0_13, %c0_14] : memref<3x3x8x16xbf16, #tpu.memory_space<vmem>>, vector<1x1x8x16xbf16>
    %13 = vector.shape_cast %12 : vector<1x1x8x16xbf16> to vector<8x16xbf16>
    %cst_15 = arith.constant dense<0.000000e+00> : vector<256x16xf32>
    %14 = tpu.matmul %11, %13, %cst_15 {dimension_numbers = #tpu.dot_dimension_numbers<[1], [0], [0], [1], [0, 0, 1, 1], [], []>} : vector<256x8xbf16>, vector<8x16xbf16>, vector<256x16xf32> -> vector<256x16xf32>
    %15 = arith.addf %8, %14 : vector<256x16xf32>
    %c0_16 = arith.constant 0 : index
    %c2 = arith.constant 2 : index
    %c0_17 = arith.constant 0 : index
    %c0_18 = arith.constant 0 : index
    %16 = vector.load %arg4[%c0_16, %c2, %c0_17, %c0_18] : memref<1x10x32x8xbf16, #tpu.memory_space<vmem>>, vector<1x8x32x8xbf16>
    %17 = vector.shape_cast %16 : vector<1x8x32x8xbf16> to vector<8x32x8xbf16>
    %18 = vector.shape_cast %17 : vector<8x32x8xbf16> to vector<256x8xbf16>
    %c2_19 = arith.constant 2 : index
    %c0_20 = arith.constant 0 : index
    %c0_21 = arith.constant 0 : index
    %c0_22 = arith.constant 0 : index
    %19 = vector.load %arg5[%c2_19, %c0_20, %c0_21, %c0_22] : memref<3x3x8x16xbf16, #tpu.memory_space<vmem>>, vector<1x1x8x16xbf16>
    %20 = vector.shape_cast %19 : vector<1x1x8x16xbf16> to vector<8x16xbf16>
    %cst_23 = arith.constant dense<0.000000e+00> : vector<256x16xf32>
    %21 = tpu.matmul %18, %20, %cst_23 {dimension_numbers = #tpu.dot_dimension_numbers<[1], [0], [0], [1], [0, 0, 1, 1], [], []>} : vector<256x8xbf16>, vector<8x16xbf16>, vector<256x16xf32> -> vector<256x16xf32>
    %22 = arith.addf %15, %21 : vector<256x16xf32>
    %c0_24 = arith.constant 0 : index
    %c0_25 = arith.constant 0 : index
    %c0_26 = arith.constant 0 : index
    %c0_27 = arith.constant 0 : index
    %23 = vector.load %arg4[%c0_24, %c0_25, %c0_26, %c0_27] : memref<1x10x32x8xbf16, #tpu.memory_space<vmem>>, vector<1x8x32x8xbf16>
    %24 = vector.shape_cast %23 : vector<1x8x32x8xbf16> to vector<8x32x8xbf16>
    %25 = vector.shape_cast %24 : vector<8x32x8xbf16> to vector<256x8xbf16>
    %c0_28 = arith.constant 0 : index
    %c1_29 = arith.constant 1 : index
    %c0_30 = arith.constant 0 : index
    %c0_31 = arith.constant 0 : index
    %26 = vector.load %arg5[%c0_28, %c1_29, %c0_30, %c0_31] : memref<3x3x8x16xbf16, #tpu.memory_space<vmem>>, vector<1x1x8x16xbf16>
    %27 = vector.shape_cast %26 : vector<1x1x8x16xbf16> to vector<8x16xbf16>
    %cst_32 = arith.constant dense<0.000000e+00> : vector<256x16xf32>
    %28 = tpu.matmul %25, %27, %cst_32 {dimension_numbers = #tpu.dot_dimension_numbers<[1], [0], [0], [1], [0, 0, 1, 1], [], []>} : vector<256x8xbf16>, vector<8x16xbf16>, vector<256x16xf32> -> vector<256x16xf32>
    %c0_33 = arith.constant 0 : index
    %c1_34 = arith.constant 1 : index
    %c0_35 = arith.constant 0 : index
    %c0_36 = arith.constant 0 : index
    %29 = vector.load %arg4[%c0_33, %c1_34, %c0_35, %c0_36] : memref<1x10x32x8xbf16, #tpu.memory_space<vmem>>, vector<1x8x32x8xbf16>
    %30 = vector.shape_cast %29 : vector<1x8x32x8xbf16> to vector<8x32x8xbf16>
    %31 = vector.shape_cast %30 : vector<8x32x8xbf16> to vector<256x8xbf16>
    %c1_37 = arith.constant 1 : index
    %c1_38 = arith.constant 1 : index
    %c0_39 = arith.constant 0 : index
    %c0_40 = arith.constant 0 : index
    %32 = vector.load %arg5[%c1_37, %c1_38, %c0_39, %c0_40] : memref<3x3x8x16xbf16, #tpu.memory_space<vmem>>, vector<1x1x8x16xbf16>
    %33 = vector.shape_cast %32 : vector<1x1x8x16xbf16> to vector<8x16xbf16>
    %cst_41 = arith.constant dense<0.000000e+00> : vector<256x16xf32>
    %34 = tpu.matmul %31, %33, %cst_41 {dimension_numbers = #tpu.dot_dimension_numbers<[1], [0], [0], [1], [0, 0, 1, 1], [], []>} : vector<256x8xbf16>, vector<8x16xbf16>, vector<256x16xf32> -> vector<256x16xf32>
    %35 = arith.addf %28, %34 : vector<256x16xf32>
    %c0_42 = arith.constant 0 : index
    %c2_43 = arith.constant 2 : index
    %c0_44 = arith.constant 0 : index
    %c0_45 = arith.constant 0 : index
    %36 = vector.load %arg4[%c0_42, %c2_43, %c0_44, %c0_45] : memref<1x10x32x8xbf16, #tpu.memory_space<vmem>>, vector<1x8x32x8xbf16>
    %37 = vector.shape_cast %36 : vector<1x8x32x8xbf16> to vector<8x32x8xbf16>
    %38 = vector.shape_cast %37 : vector<8x32x8xbf16> to vector<256x8xbf16>
    %c2_46 = arith.constant 2 : index
    %c1_47 = arith.constant 1 : index
    %c0_48 = arith.constant 0 : index
    %c0_49 = arith.constant 0 : index
    %39 = vector.load %arg5[%c2_46, %c1_47, %c0_48, %c0_49] : memref<3x3x8x16xbf16, #tpu.memory_space<vmem>>, vector<1x1x8x16xbf16>
    %40 = vector.shape_cast %39 : vector<1x1x8x16xbf16> to vector<8x16xbf16>
    %cst_50 = arith.constant dense<0.000000e+00> : vector<256x16xf32>
    %41 = tpu.matmul %38, %40, %cst_50 {dimension_numbers = #tpu.dot_dimension_numbers<[1], [0], [0], [1], [0, 0, 1, 1], [], []>} : vector<256x8xbf16>, vector<8x16xbf16>, vector<256x16xf32> -> vector<256x16xf32>
    %42 = arith.addf %35, %41 : vector<256x16xf32>
    %43 = vector.extract_strided_slice %42 {offsets = [1, 0], sizes = [255, 16], strides = [1, 1]} : vector<256x16xf32> to vector<255x16xf32>
    %44 = vector.extract_strided_slice %42 {offsets = [0, 0], sizes = [1, 16], strides = [1, 1]} : vector<256x16xf32> to vector<1x16xf32>
    %45 = tpu.concatenate %43, %44 in 0 : vector<255x16xf32>, vector<1x16xf32> -> vector<256x16xf32>
    %46 = arith.addf %22, %45 : vector<256x16xf32>
    %c0_51 = arith.constant 0 : index
    %c0_52 = arith.constant 0 : index
    %c0_53 = arith.constant 0 : index
    %c0_54 = arith.constant 0 : index
    %47 = vector.load %arg4[%c0_51, %c0_52, %c0_53, %c0_54] : memref<1x10x32x8xbf16, #tpu.memory_space<vmem>>, vector<1x8x32x8xbf16>
    %48 = vector.shape_cast %47 : vector<1x8x32x8xbf16> to vector<8x32x8xbf16>
    %49 = vector.shape_cast %48 : vector<8x32x8xbf16> to vector<256x8xbf16>
    %c0_55 = arith.constant 0 : index
    %c2_56 = arith.constant 2 : index
    %c0_57 = arith.constant 0 : index
    %c0_58 = arith.constant 0 : index
    %50 = vector.load %arg5[%c0_55, %c2_56, %c0_57, %c0_58] : memref<3x3x8x16xbf16, #tpu.memory_space<vmem>>, vector<1x1x8x16xbf16>
    %51 = vector.shape_cast %50 : vector<1x1x8x16xbf16> to vector<8x16xbf16>
    %cst_59 = arith.constant dense<0.000000e+00> : vector<256x16xf32>
    %52 = tpu.matmul %49, %51, %cst_59 {dimension_numbers = #tpu.dot_dimension_numbers<[1], [0], [0], [1], [0, 0, 1, 1], [], []>} : vector<256x8xbf16>, vector<8x16xbf16>, vector<256x16xf32> -> vector<256x16xf32>
    %c0_60 = arith.constant 0 : index
    %c1_61 = arith.constant 1 : index
    %c0_62 = arith.constant 0 : index
    %c0_63 = arith.constant 0 : index
    %53 = vector.load %arg4[%c0_60, %c1_61, %c0_62, %c0_63] : memref<1x10x32x8xbf16, #tpu.memory_space<vmem>>, vector<1x8x32x8xbf16>
    %54 = vector.shape_cast %53 : vector<1x8x32x8xbf16> to vector<8x32x8xbf16>
    %55 = vector.shape_cast %54 : vector<8x32x8xbf16> to vector<256x8xbf16>
    %c1_64 = arith.constant 1 : index
    %c2_65 = arith.constant 2 : index
    %c0_66 = arith.constant 0 : index
    %c0_67 = arith.constant 0 : index
    %56 = vector.load %arg5[%c1_64, %c2_65, %c0_66, %c0_67] : memref<3x3x8x16xbf16, #tpu.memory_space<vmem>>, vector<1x1x8x16xbf16>
    %57 = vector.shape_cast %56 : vector<1x1x8x16xbf16> to vector<8x16xbf16>
    %cst_68 = arith.constant dense<0.000000e+00> : vector<256x16xf32>
    %58 = tpu.matmul %55, %57, %cst_68 {dimension_numbers = #tpu.dot_dimension_numbers<[1], [0], [0], [1], [0, 0, 1, 1], [], []>} : vector<256x8xbf16>, vector<8x16xbf16>, vector<256x16xf32> -> vector<256x16xf32>
    %59 = arith.addf %52, %58 : vector<256x16xf32>
    %c0_69 = arith.constant 0 : index
    %c2_70 = arith.constant 2 : index
    %c0_71 = arith.constant 0 : index
    %c0_72 = arith.constant 0 : index
    %60 = vector.load %arg4[%c0_69, %c2_70, %c0_71, %c0_72] : memref<1x10x32x8xbf16, #tpu.memory_space<vmem>>, vector<1x8x32x8xbf16>
    %61 = vector.shape_cast %60 : vector<1x8x32x8xbf16> to vector<8x32x8xbf16>
    %62 = vector.shape_cast %61 : vector<8x32x8xbf16> to vector<256x8xbf16>
    %c2_73 = arith.constant 2 : index
    %c2_74 = arith.constant 2 : index
    %c0_75 = arith.constant 0 : index
    %c0_76 = arith.constant 0 : index
    %63 = vector.load %arg5[%c2_73, %c2_74, %c0_75, %c0_76] : memref<3x3x8x16xbf16, #tpu.memory_space<vmem>>, vector<1x1x8x16xbf16>
    %64 = vector.shape_cast %63 : vector<1x1x8x16xbf16> to vector<8x16xbf16>
    %cst_77 = arith.constant dense<0.000000e+00> : vector<256x16xf32>
    %65 = tpu.matmul %62, %64, %cst_77 {dimension_numbers = #tpu.dot_dimension_numbers<[1], [0], [0], [1], [0, 0, 1, 1], [], []>} : vector<256x8xbf16>, vector<8x16xbf16>, vector<256x16xf32> -> vector<256x16xf32>
    %66 = arith.addf %59, %65 : vector<256x16xf32>
    %67 = vector.extract_strided_slice %66 {offsets = [2, 0], sizes = [254, 16], strides = [1, 1]} : vector<256x16xf32> to vector<254x16xf32>
    %68 = vector.extract_strided_slice %66 {offsets = [0, 0], sizes = [2, 16], strides = [1, 1]} : vector<256x16xf32> to vector<2x16xf32>
    %69 = tpu.concatenate %67, %68 in 0 : vector<254x16xf32>, vector<2x16xf32> -> vector<256x16xf32>
    %70 = arith.addf %46, %69 : vector<256x16xf32>
    %c0_78 = arith.constant 0 : index
    %c0_79 = arith.constant 0 : index
    %71 = vector.load %arg8[%c0_78, %c0_79] : memref<256x16xf32, #tpu.memory_space<vmem>>, vector<256x16xf32>
    %72 = arith.addf %71, %70 : vector<256x16xf32>
    %c0_80 = arith.constant 0 : index
    %c0_81 = arith.constant 0 : index
    %73 = vector.load %arg8[%c0_80, %c0_81] : memref<256x16xf32, #tpu.memory_space<vmem>>, vector<256x16xf32>
    tpu.vector_store %arg8[%c0_80, %c0_81], %72 {strides = array<i32>} : memref<256x16xf32, #tpu.memory_space<vmem>>, vector<256x16xf32>,
    %c0_i32_82 = arith.constant 0 : i32
    %74 = arith.cmpi eq, %arg3, %c0_i32_82 : i32
    %75 = arith.extui %74 : i1 to i32
    %c0_i32_83 = arith.constant 0 : i32
    %76 = arith.cmpi ne, %75, %c0_i32_83 : i32
    scf.if %76 {
      %c0_84 = arith.constant 0 : index
      %c0_85 = arith.constant 0 : index
      %77 = vector.load %arg8[%c0_84, %c0_85] : memref<256x16xf32, #tpu.memory_space<vmem>>, vector<256x16xf32>
      %78 = vector.shape_cast %77 : vector<256x16xf32> to vector<8x32x16xf32>
      %79 = vector.extract_strided_slice %78 {offsets = [0, 0, 0], sizes = [8, 16, 16], strides = [1, 1, 1]} : vector<8x32x16xf32> to vector<8x16x16xf32>
      %c0_86 = arith.constant 0 : index
      %c0_87 = arith.constant 0 : index
      %80 = vector.load %arg6[%c0_86, %c0_87] : memref<1x16xf32, #tpu.memory_space<vmem>>, vector<1x16xf32>
      %81 = vector.shape_cast %80 : vector<1x16xf32> to vector<1x1x16xf32>
      %82 = vector.broadcast %81 : vector<1x1x16xf32> to vector<8x16x16xf32>
      %83 = arith.addf %79, %82 : vector<8x16x16xf32>
      %cst_88 = arith.constant 0.000000e+00 : f32
      %84 = vector.broadcast %cst_88 : f32 to vector<8x16x16xf32>
      %85 = arith.maximumf %83, %84 : vector<8x16x16xf32>
      %86 = arith.truncf %85 : vector<8x16x16xf32> to vector<8x16x16xbf16>
      %c0_89 = arith.constant 0 : index
      %c0_90 = arith.constant 0 : index
      %c0_91 = arith.constant 0 : index
      %c0_92 = arith.constant 0 : index
      %87 = vector.load %arg7[%c0_89, %c0_90, %c0_91, %c0_92] : memref<1x8x16x16xbf16, #tpu.memory_space<vmem>>, vector<1x8x16x16xbf16>
      %88 = vector.shape_cast %87 : vector<1x8x16x16xbf16> to vector<8x16x16xbf16>
      %89 = vector.shape_cast %86 : vector<8x16x16xbf16> to vector<1x8x16x16xbf16>
      tpu.vector_store %arg7[%c0_89, %c0_90, %c0_91, %c0_92], %89 {strides = array<i32>} : memref<1x8x16x16xbf16, #tpu.memory_space<vmem>>, vector<1x8x16x16xbf16>,
    } else {
    }
    return
  }
  func.func @transform_0(%arg0: i32, %arg1: i32, %arg2: i32, %arg3: i32) -> (i32, i32, i32, i32) {
    %c0_i32 = arith.constant 0 : i32
    %c0_i32_0 = arith.constant 0 : i32
    %c0_i32_1 = arith.constant 0 : i32
    return %arg0, %c0_i32, %c0_i32_0, %arg3 : i32, i32, i32, i32
  }
  func.func @transform_1(%arg0: i32, %arg1: i32, %arg2: i32, %arg3: i32) -> (i32, i32, i32, i32) {
    %c0_i32 = arith.constant 0 : i32
    %c0_i32_0 = arith.constant 0 : i32
    %c0_i32_1 = arith.constant 0 : i32
    return %c0_i32, %c0_i32_0, %arg3, %arg2 : i32, i32, i32, i32
  }
  func.func @transform_2(%arg0: i32, %arg1: i32, %arg2: i32, %arg3: i32) -> (i32, i32) {
    %c0_i32 = arith.constant 0 : i32
    %c0_i32_0 = arith.constant 0 : i32
    return %c0_i32, %arg2 : i32, i32
  }
  func.func @transform_3(%arg0: i32, %arg1: i32, %arg2: i32, %arg3: i32) -> (i32, i32, i32, i32) {
    %c0_i32 = arith.constant 0 : i32
    %c0_i32_0 = arith.constant 0 : i32
    return %arg0, %arg1, %c0_i32, %arg2 : i32, i32, i32, i32
  }
}

</mosaic_0001>

<llo_original>
// kernel: tpu_custom_call.1
$region0: #{tpu_custom_call.1}
  #allocation0 [shape = 'u32[]', space=smem, size = 0x4, offset = 0x4, fixed_abs, tag = 'smem constant byte address 0x4 - core index']
  #allocation1 [shape = 'u32[144,128]{1,0:T(1,128)}', space=vmem, size = 0x12000, scoped, tag = 'internal scratch']
  #allocation2 [shape = 'f32[256,16]{1,0:T(8,128)}', space=vmem, size = 0x20000, scoped, tag = 'scratch operand']
  %s0 = inlined_call_operand.vmem [shape: bf16[2,10,32,8], index: 0, kind: input, shape index: {}]
  %s1 = inlined_call_operand.vmem [shape: bf16[3,3,8,16], index: 1, kind: input, shape index: {}]
  %s2 = inlined_call_operand.vmem [shape: f32[1,16], index: 2, kind: input, shape index: {}]
  %s3 = inlined_call_operand.hbm [shape: bf16[2,8,16,16], index: 3, kind: output, shape index: {}]
  %s4 = sld [smem:[#allocation0]]
  $region53: #{tpu_custom_call.1} parent=0
    _
  %s6 = ssub.s32 1, %s4
  %s7 = scalar_select 0, %s6, %s4
  $region1: #{tpu_custom_call.1} parent=0
    #allocation3 [shape = 'u8[65536]{0}', space=vmem, size = 0x10000, scoped, tag = 'output window, operand 0']
    #allocation4 [shape = 's32[2]{0}', space=sflag, size = 0x8, scoped, tag = 'scoped memory for tpu_custom_call.1']
    %8 = vsyncpa [#allocation4], 0
    %s9 = scalar_lea.sflag [#allocation4], 1
    %10 = vsyncpa %s9, 0
    loop: start=0, step=1, limit=4
    $region2: #{tpu_custom_call.1} parent=1 // loop_pre_header
      _
    $region3: #{tpu_custom_call.1} parent=1 // loop_header
      %s12 = sphi 0, %s16
      %p13 = scmp.ge.s32.totalorder %s12, 4
      %s19 = sphi 0, %s45
      %s20 = sphi 0, %s41
      %s21 = sphi 0, %s37
      %s22 = sphi 0, %s33
      %s23 = sphi 0, %s19
      %s24 = sphi 0, %s20
      %s25 = sphi 0, %s21
      %s26 = sphi 0, %s22
      %s27 = sphi 0, %s23
      %s28 = sphi 0, %s24
      %s29 = sphi 0, %s25
      %s30 = sphi 0, %s26
      %s50 = sphi 0, %s52
      %s53 = sphi 0, %s50
      %s54 = sphi 0, %s53
      %s70 = sphi 0, %s54
      %s78 = sphi 0, %s80
      %s81 = sphi 0, %s78
      %s82 = sphi 0, %s81
      %s98 = sphi 0, %s82
      %s104 = sphi 0, %s106
      %s107 = sphi 0, %s104
      %s108 = sphi 0, %s107
      %s124 = sphi 0, %s108
      %s134 = sphi 0, %s136
      %s137 = sphi 0, %s134
      %s138 = sphi 0, %s137
      %s154 = sphi 0, %s138
    $region4: #{tpu_custom_call.1} parent=1 // loop_header_branch
      %15 = sbr.rel (%p13) target = $region8
    $region5: #{tpu_custom_call.1} parent=1 // loop_body
      %s17 = ssub.s32 %s12, 1
      %s18 = ssub.s32 %s12, 2
      %s31 = sadd.s32 1, %s22
      %p32 = scmp.ge.s32.totalorder %s31, 1
      %s33 = scalar_select %p32, 0, %s31
      %s34 = sadd.s32 1, %s21
      %s35 = scalar_select %p32, %s34, %s21
      %p36 = scmp.ge.s32.totalorder %s35, 1
      %s37 = scalar_select %p36, 0, %s35
      %s38 = sadd.s32 1, %s20
      %s39 = scalar_select %p36, %s38, %s20
      %p40 = scmp.ge.s32.totalorder %s39, 1
      %s41 = scalar_select %p40, 0, %s39
      %s42 = sadd.s32 1, %s19
      %s43 = scalar_select %p40, %s42, %s19
      %p44 = scmp.ge.s32.totalorder %s43, 2
      %s45 = scalar_select %p44, 0, %s43
      %s46 = ssub.s32 %s19, %s45
      %s47 = ssub.s32 %s22, %s33
      %s48 = sor.u32 %s46, %s47
      %p49 = scmp.eq.s32.totalorder %s48, 0
      %s51 = sadd.s32 %s50, 1
      %s52 = scalar_select %p49, %s50, %s51
      %p55 = pneg %p49
      %p56 = scmp.eq.s32.totalorder %s12, 1
      %p57 = por %p55, %p56
      %p58 = scmp.ne.s32.totalorder %s50, %s53
      %p59 = scmp.eq.s32.totalorder %s12, 0
      %p60 = por %p58, %p59
      %p61 = scmp.ne.s32.totalorder %s50, %s53
      %p62 = scmp.eq.s32.totalorder %s17, 1
      %p63 = por %p61, %p62
      %p64 = scmp.ne.s32.totalorder %s53, %s54
      %p65 = scmp.eq.s32.totalorder %s17, 0
      %p66 = por %p64, %p65
      %p67 = scmp.ne.s32.totalorder %s53, %s54
      %p68 = scmp.eq.s32.totalorder %s18, 1
      %p69 = por %p67, %p68
      %p71 = scmp.ne.s32.totalorder %s54, %s70
      %p72 = scmp.eq.s32.totalorder %s18, 0
      %p73 = por %p71, %p72
      %s74 = ssub.s32 %s22, %s33
      %s75 = ssub.s32 %s21, %s37
      %s76 = sor.u32 %s74, %s75
      %p77 = scmp.eq.s32.totalorder %s76, 0
      %s79 = sadd.s32 %s78, 1
      %s80 = scalar_select %p77, %s78, %s79
      %p83 = pneg %p77
      %p84 = scmp.eq.s32.totalorder %s12, 1
      %p85 = por %p83, %p84
      %p86 = scmp.ne.s32.totalorder %s78, %s81
      %p87 = scmp.eq.s32.totalorder %s12, 0
      %p88 = por %p86, %p87
      %p89 = scmp.ne.s32.totalorder %s78, %s81
      %p90 = scmp.eq.s32.totalorder %s17, 1
      %p91 = por %p89, %p90
      %p92 = scmp.ne.s32.totalorder %s81, %s82
      %p93 = scmp.eq.s32.totalorder %s17, 0
      %p94 = por %p92, %p93
      %p95 = scmp.ne.s32.totalorder %s81, %s82
      %p96 = scmp.eq.s32.totalorder %s18, 1
      %p97 = por %p95, %p96
      %p99 = scmp.ne.s32.totalorder %s82, %s98
      %p100 = scmp.eq.s32.totalorder %s18, 0
      %p101 = por %p99, %p100
      %s102 = ssub.s32 %s21, %s37
      %p103 = scmp.eq.s32.totalorder %s102, 0
      %s105 = sadd.s32 %s104, 1
      %s106 = scalar_select %p103, %s104, %s105
      %p109 = pneg %p103
      %p110 = scmp.eq.s32.totalorder %s12, 1
      %p111 = por %p109, %p110
      %p112 = scmp.ne.s32.totalorder %s104, %s107
      %p113 = scmp.eq.s32.totalorder %s12, 0
      %p114 = por %p112, %p113
      %p115 = scmp.ne.s32.totalorder %s104, %s107
      %p116 = scmp.eq.s32.totalorder %s17, 1
      %p117 = por %p115, %p116
      %p118 = scmp.ne.s32.totalorder %s107, %s108
      %p119 = scmp.eq.s32.totalorder %s17, 0
      %p120 = por %p118, %p119
      %p121 = scmp.ne.s32.totalorder %s107, %s108
      %p122 = scmp.eq.s32.totalorder %s18, 1
      %p123 = por %p121, %p122
      %p125 = scmp.ne.s32.totalorder %s108, %s124
      %p126 = scmp.eq.s32.totalorder %s18, 0
      %p127 = por %p125, %p126
      %s128 = ssub.s32 %s19, %s45
      %s129 = ssub.s32 %s20, %s41
      %s130 = sor.u32 %s128, %s129
      %s131 = ssub.s32 %s21, %s37
      %s132 = sor.u32 %s130, %s131
      %p133 = scmp.eq.s32.totalorder %s132, 0
      %s135 = sadd.s32 %s134, 1
      %s136 = scalar_select %p133, %s134, %s135
      %p139 = pneg %p133
      %p140 = scmp.eq.s32.totalorder %s12, 1
      %p141 = por %p139, %p140
      %p142 = scmp.ne.s32.totalorder %s134, %s137
      %p143 = scmp.eq.s32.totalorder %s12, 0
      %p144 = por %p142, %p143
      %p145 = scmp.ne.s32.totalorder %s134, %s137
      %p146 = scmp.eq.s32.totalorder %s17, 1
      %p147 = por %p145, %p146
      %p148 = scmp.ne.s32.totalorder %s137, %s138
      %p149 = scmp.eq.s32.totalorder %s17, 0
      %p150 = por %p148, %p149
      %p151 = scmp.ne.s32.totalorder %s137, %s138
      %p152 = scmp.eq.s32.totalorder %s18, 1
      %p153 = por %p151, %p152
      %p155 = scmp.ne.s32.totalorder %s138, %s154
      %p156 = scmp.eq.s32.totalorder %s18, 0
      %p157 = por %p155, %p156
      %p158 = scmp.le.s32.totalorder 1, %s12
      %p159 = scmp.lt.s32.totalorder %s12, 3
      %p160 = pnand %p158, %p159
      %p161 = pneg %p160
      // Predicated region
      $region9: #{tpu_custom_call.1} parent=5 // pred_check
        _
      $region10: #{tpu_custom_call.1} parent=5 // pred_check_branch
        %163 = sbr.rel (%p160) target = $region12
      $region11: #{tpu_custom_call.1} parent=5 // pred_region
        %s164 = ssub.s32 %s12, 1
        // Predicated region
        $region13: #{tpu_custom_call.1} parent=11 // pred_check
          %p165 = pneg %p94
        $region14: #{tpu_custom_call.1} parent=11 // pred_check_branch
          %167 = sbr.rel (%p165) target = $region16
        $region15: #{tpu_custom_call.1} parent=11 // pred_region
          %p168 = scmp.lt.s32.totalorder %s26, 0
          %s169 = scalar_select %p168, %s26, 0
          %p170 = scmp.lt.s32.totalorder %s25, 0
          %s171 = scalar_select %p170, %s25, 0
          %s172 = sadd.s32 %s171, %s169
          %s173 = smul.addr %s172, 4
          %s174 = scalar_lea.vmem %s1, %s173
        $region16: #{tpu_custom_call.1} parent=11 // pred_fallthru
          _
        // Predicated region
        $region17: #{tpu_custom_call.1} parent=11 // pred_check
          %p175 = pneg %p120
        $region18: #{tpu_custom_call.1} parent=11 // pred_check_branch
          %177 = sbr.rel (%p175) target = $region20
        $region19: #{tpu_custom_call.1} parent=11 // pred_region
          %p178 = scmp.lt.s32.totalorder %s25, 0
          %s179 = scalar_select %p178, %s25, 0
          %s180 = scalar_lea.vmem %s2, %s179
        $region20: #{tpu_custom_call.1} parent=11 // pred_fallthru
          _
      $region12: #{tpu_custom_call.1} parent=5 // pred_fallthru
        _
      %p181 = scmp.lt.s32.totalorder %s12, 2
      // Predicated region
      $region21: #{tpu_custom_call.1} parent=5 // pred_check
        %p182 = pneg %p181
      $region22: #{tpu_custom_call.1} parent=5 // pred_check_branch
        %184 = sbr.rel (%p182) target = $region24
      $region23: #{tpu_custom_call.1} parent=5 // pred_region
        // Predicated region
        $region25: #{tpu_custom_call.1} parent=23 // pred_check
          %p185 = pneg %p60
        $region26: #{tpu_custom_call.1} parent=23 // pred_check_branch
          %187 = sbr.rel (%p185) target = $region28
        $region27: #{tpu_custom_call.1} parent=23 // pred_region
          %p188 = scmp.lt.s32.totalorder %s19, 1
          %s189 = scalar_select %p188, %s19, 1
          %p190 = scmp.lt.s32.totalorder %s22, 0
          %s191 = scalar_select %p190, %s22, 0
          %s192 = smul.addr %s189, 40
          %s193 = sadd.s32 %s191, %s192
          %s194 = smul.addr %s193, 4
          %s195 = scalar_lea.vmem %s0, %s194
        $region28: #{tpu_custom_call.1} parent=23 // pred_fallthru
          _
      $region24: #{tpu_custom_call.1} parent=5 // pred_fallthru
        _
      %p196 = scmp.le.s32.totalorder 1, %s12
      %p197 = scmp.lt.s32.totalorder %s12, 3
      %p198 = pnand %p196, %p197
      %p199 = pneg %p198
      // Predicated region
      $region29: #{tpu_custom_call.1} parent=5 // pred_check
        _
      $region30: #{tpu_custom_call.1} parent=5 // pred_check_branch
        %201 = sbr.rel (%p198) target = $region32
      $region31: #{tpu_custom_call.1} parent=5 // pred_region
        %s202 = ssub.s32 %s12, 1
        %p203 = scmp.lt.s32.totalorder %s23, 1
        %s204 = scalar_select %p203, %s23, 1
        %p205 = scmp.lt.s32.totalorder %s26, 0
        %s206 = scalar_select %p205, %s26, 0
        %s207 = smul.addr %s204, 40
        %s208 = sadd.s32 %s206, %s207
        %s209 = smul.addr %s208, 4
        %s210 = scalar_lea.vmem %s0, %s209
        %p211 = pneg %p66
        %p212 = pneg %p63
        %p213 = scmp.lt.s32.totalorder %s26, 0
        %s214 = scalar_select %p213, %s26, 0
        %p215 = scmp.lt.s32.totalorder %s25, 0
        %s216 = scalar_select %p215, %s25, 0
        %s217 = sadd.s32 %s216, %s214
        %s218 = smul.addr %s217, 4
        %s219 = scalar_lea.vmem %s1, %s218
        %p220 = pneg %p94
        %p221 = pneg %p91
        %p222 = scmp.lt.s32.totalorder %s25, 0
        %s223 = scalar_select %p222, %s25, 0
        %s224 = scalar_lea.vmem %s2, %s223
        %p225 = pneg %p120
        %p226 = pneg %p117
        %p227 = pneg %p150
        %p228 = pneg %p147
        %s229 = sand.u32 %s137, 1
        %s230 = scalar_lea.sflag [#allocation4], %s229
        %s231 = sand.u32 %s137, 1
        %s232 = smul.addr %s231, 64
        %s233 = scalar_lea.vmem [#allocation3], %s232
        %p234 = scmp.lt.s32.totalorder %s23, 1
        %s235 = scalar_select %p234, %s23, 1
        %p236 = scmp.lt.s32.totalorder %s26, 0
        %s237 = scalar_select %p236, %s26, 0
        %s238 = smul.addr %s235, 40
        %s239 = sadd.s32 %s237, %s238
        %s240 = smul.addr %s239, 4
        %s241 = scalar_lea.vmem %s0, %s240
        %p242 = scmp.lt.s32.totalorder %s26, 0
        %s243 = scalar_select %p242, %s26, 0
        %p244 = scmp.lt.s32.totalorder %s25, 0
        %s245 = scalar_select %p244, %s25, 0
        %s246 = sadd.s32 %s245, %s243
        %s247 = smul.addr %s246, 4
        %s248 = scalar_lea.vmem %s1, %s247
        %p249 = scmp.lt.s32.totalorder %s25, 0
        %s250 = scalar_select %p249, %s25, 0
        %s251 = scalar_lea.vmem %s2, %s250
        %s252 = smul.u32 8, %s24
        %p254 = scmp.eq.s32.totalorder %s26, 0
        // Predicated region
        $region33: #{tpu_custom_call.1} parent=31 // pred_check
          %p255 = pneg %p254
        $region34: #{tpu_custom_call.1} parent=31 // pred_check_branch
          %257 = sbr.rel (%p255) target = $region36
        $region35: #{tpu_custom_call.1} parent=31 // pred_region
          %vm258 = vcmask 130048
          %259 = vst.msk [vmem:[#allocation2] sm:$0xff] %vm258, 0.0
          %260 = vst.msk [vmem:[#allocation2 + $0x8] sm:$0xff] %vm258, 0.0
          %261 = vst.msk [vmem:[#allocation2 + $0x10] sm:$0xff] %vm258, 0.0
          %262 = vst.msk [vmem:[#allocation2 + $0x18] sm:$0xff] %vm258, 0.0
          %263 = vst.msk [vmem:[#allocation2 + $0x20] sm:$0xff] %vm258, 0.0
          %264 = vst.msk [vmem:[#allocation2 + $0x28] sm:$0xff] %vm258, 0.0
          %265 = vst.msk [vmem:[#allocation2 + $0x30] sm:$0xff] %vm258, 0.0
          %266 = vst.msk [vmem:[#allocation2 + $0x38] sm:$0xff] %vm258, 0.0
          %267 = vst.msk [vmem:[#allocation2 + $0x40] sm:$0xff] %vm258, 0.0
          %268 = vst.msk [vmem:[#allocation2 + $0x48] sm:$0xff] %vm258, 0.0
          %269 = vst.msk [vmem:[#allocation2 + $0x50] sm:$0xff] %vm258, 0.0
          %270 = vst.msk [vmem:[#allocation2 + $0x58] sm:$0xff] %vm258, 0.0
          %271 = vst.msk [vmem:[#allocation2 + $0x60] sm:$0xff] %vm258, 0.0
          %272 = vst.msk [vmem:[#allocation2 + $0x68] sm:$0xff] %vm258, 0.0
          %273 = vst.msk [vmem:[#allocation2 + $0x70] sm:$0xff] %vm258, 0.0
          %274 = vst.msk [vmem:[#allocation2 + $0x78] sm:$0xff] %vm258, 0.0
          %275 = vst.msk [vmem:[#allocation2 + $0x80] sm:$0xff] %vm258, 0.0
          %276 = vst.msk [vmem:[#allocation2 + $0x88] sm:$0xff] %vm258, 0.0
          %277 = vst.msk [vmem:[#allocation2 + $0x90] sm:$0xff] %vm258, 0.0
          %278 = vst.msk [vmem:[#allocation2 + $0x98] sm:$0xff] %vm258, 0.0
          %279 = vst.msk [vmem:[#allocation2 + $0xa0] sm:$0xff] %vm258, 0.0
          %280 = vst.msk [vmem:[#allocation2 + $0xa8] sm:$0xff] %vm258, 0.0
          %281 = vst.msk [vmem:[#allocation2 + $0xb0] sm:$0xff] %vm258, 0.0
          %282 = vst.msk [vmem:[#allocation2 + $0xb8] sm:$0xff] %vm258, 0.0
          %283 = vst.msk [vmem:[#allocation2 + $0xc0] sm:$0xff] %vm258, 0.0
          %284 = vst.msk [vmem:[#allocation2 + $0xc8] sm:$0xff] %vm258, 0.0
          %285 = vst.msk [vmem:[#allocation2 + $0xd0] sm:$0xff] %vm258, 0.0
          %286 = vst.msk [vmem:[#allocation2 + $0xd8] sm:$0xff] %vm258, 0.0
          %287 = vst.msk [vmem:[#allocation2 + $0xe0] sm:$0xff] %vm258, 0.0
          %288 = vst.msk [vmem:[#allocation2 + $0xe8] sm:$0xff] %vm258, 0.0
          %289 = vst.msk [vmem:[#allocation2 + $0xf0] sm:$0xff] %vm258, 0.0
          %290 = vst.msk [vmem:[#allocation2 + $0xf8] sm:$0xff] %vm258, 0.0
        $region36: #{tpu_custom_call.1} parent=31 // pred_fallthru
          _
        %v291 = vld [vmem:[%s241] sm:$0xf]
        %v292 = vld [vmem:[%s241 + $0x4] sm:$0xf]
        %v293 = vld [vmem:[%s241 + $0x8] sm:$0xf]
        %v294 = vld [vmem:[%s241 + $0xc] sm:$0xf]
        %v295 = vld [vmem:[%s241 + $0x10] sm:$0xf]
        %v296 = vld [vmem:[%s241 + $0x14] sm:$0xf]
        %v297 = vld [vmem:[%s241 + $0x18] sm:$0xf]
        %v298 = vld [vmem:[%s241 + $0x1c] sm:$0xf]
        %v299 = vld [vmem:[%s241 + $0x20] sm:$0xf]
        %v300 = vld [vmem:[%s241 + $0x24] sm:$0xf]
        %v301 = vld [vmem:[%s241 + $0x28] sm:$0xf]
        %v302 = vld [vmem:[%s241 + $0x2c] sm:$0xf]
        %v303 = vld [vmem:[%s241 + $0x30] sm:$0xf]
        %v304 = vld [vmem:[%s241 + $0x34] sm:$0xf]
        %v305 = vld [vmem:[%s241 + $0x38] sm:$0xf]
        %v306 = vld [vmem:[%s241 + $0x3c] sm:$0xf]
        %v307 = vld [vmem:[%s241 + $0x40] sm:$0xf]
        %v308 = vld [vmem:[%s241 + $0x44] sm:$0xf]
        %v309 = vld [vmem:[%s241 + $0x48] sm:$0xf]
        %v310 = vld [vmem:[%s241 + $0x4c] sm:$0xf]
        %v311 = vld [vmem:[%s241 + $0x50] sm:$0xf]
        %v312 = vld [vmem:[%s241 + $0x54] sm:$0xf]
        %v313 = vld [vmem:[%s241 + $0x58] sm:$0xf]
        %v314 = vld [vmem:[%s241 + $0x5c] sm:$0xf]
        %v315 = vld [vmem:[%s241 + $0x60] sm:$0xf]
        %v316 = vld [vmem:[%s241 + $0x64] sm:$0xf]
        %v317 = vld [vmem:[%s241 + $0x68] sm:$0xf]
        %v318 = vld [vmem:[%s241 + $0x6c] sm:$0xf]
        %v319 = vld [vmem:[%s241 + $0x70] sm:$0xf]
        %v320 = vld [vmem:[%s241 + $0x74] sm:$0xf]
        %v321 = vld [vmem:[%s241 + $0x78] sm:$0xf]
        %v322 = vld [vmem:[%s241 + $0x7c] sm:$0xf]
        %v323 = vld [vmem:[%s248] sm:$0xf]
        %s324 = scalar_lea.vmem %s241, 16
        %v325 = vld [vmem:[%s324] sm:$0xf]
        %v326 = vld [vmem:[%s324 + $0x4] sm:$0xf]
        %v327 = vld [vmem:[%s324 + $0x8] sm:$0xf]
        %v328 = vld [vmem:[%s324 + $0xc] sm:$0xf]
        %v329 = vld [vmem:[%s324 + $0x10] sm:$0xf]
        %v330 = vld [vmem:[%s324 + $0x14] sm:$0xf]
        %v331 = vld [vmem:[%s324 + $0x18] sm:$0xf]
        %v332 = vld [vmem:[%s324 + $0x1c] sm:$0xf]
        %v333 = vld [vmem:[%s324 + $0x20] sm:$0xf]
        %v334 = vld [vmem:[%s324 + $0x24] sm:$0xf]
        %v335 = vld [vmem:[%s324 + $0x28] sm:$0xf]
        %v336 = vld [vmem:[%s324 + $0x2c] sm:$0xf]
        %v337 = vld [vmem:[%s324 + $0x30] sm:$0xf]
        %v338 = vld [vmem:[%s324 + $0x34] sm:$0xf]
        %v339 = vld [vmem:[%s324 + $0x38] sm:$0xf]
        %v340 = vld [vmem:[%s324 + $0x3c] sm:$0xf]
        %v341 = vld [vmem:[%s324 + $0x40] sm:$0xf]
        %v342 = vld [vmem:[%s324 + $0x44] sm:$0xf]
        %v343 = vld [vmem:[%s324 + $0x48] sm:$0xf]
        %v344 = vld [vmem:[%s324 + $0x4c] sm:$0xf]
        %v345 = vld [vmem:[%s324 + $0x50] sm:$0xf]
        %v346 = vld [vmem:[%s324 + $0x54] sm:$0xf]
        %v347 = vld [vmem:[%s324 + $0x58] sm:$0xf]
        %v348 = vld [vmem:[%s324 + $0x5c] sm:$0xf]
        %v349 = vld [vmem:[%s324 + $0x60] sm:$0xf]
        %v350 = vld [vmem:[%s324 + $0x64] sm:$0xf]
        %v351 = vld [vmem:[%s324 + $0x68] sm:$0xf]
        %v352 = vld [vmem:[%s324 + $0x6c] sm:$0xf]
        %v353 = vld [vmem:[%s324 + $0x70] sm:$0xf]
        %v354 = vld [vmem:[%s324 + $0x74] sm:$0xf]
        %v355 = vld [vmem:[%s324 + $0x78] sm:$0xf]
        %v356 = vld [vmem:[%s324 + $0x7c] sm:$0xf]
        %s357 = scalar_lea.vmem %s248, 12
        %v358 = vld [vmem:[%s357] sm:$0xf]
        %v391 = vunpack.c.l.b16 %v325
        %v392 = vunpack.c.l.b16 %v326
        %v393 = vunpack.c.l.b16 %v327
        %v394 = vunpack.c.l.b16 %v328
        %v395 = vunpack.c.l.b16 %v329
        %v396 = vunpack.c.l.b16 %v330
        %v397 = vunpack.c.l.b16 %v331
        %v398 = vunpack.c.l.b16 %v332
        %v399 = vunpack.c.l.b16 %v333
        %v400 = vunpack.c.l.b16 %v334
        %v401 = vunpack.c.l.b16 %v335
        %v402 = vunpack.c.l.b16 %v336
        %v403 = vunpack.c.l.b16 %v337
        %v404 = vunpack.c.l.b16 %v338
        %v405 = vunpack.c.l.b16 %v339
        %v406 = vunpack.c.l.b16 %v340
        %v407 = vunpack.c.l.b16 %v341
        %v408 = vunpack.c.l.b16 %v342
        %v409 = vunpack.c.l.b16 %v343
        %v410 = vunpack.c.l.b16 %v344
        %v411 = vunpack.c.l.b16 %v345
        %v412 = vunpack.c.l.b16 %v346
        %v413 = vunpack.c.l.b16 %v347
        %v414 = vunpack.c.l.b16 %v348
        %v415 = vunpack.c.l.b16 %v349
        %v416 = vunpack.c.l.b16 %v350
        %v417 = vunpack.c.l.b16 %v351
        %v418 = vunpack.c.l.b16 %v352
        %v419 = vunpack.c.l.b16 %v353
        %v420 = vunpack.c.l.b16 %v354
        %v421 = vunpack.c.l.b16 %v355
        %v422 = vunpack.c.l.b16 %v356
        %v423 = vpack.c.b16 %v392, %v391
        %v424 = vpack.c.b16 %v394, %v393
        %v425 = vpack.c.b16 %v396, %v395
        %v426 = vpack.c.b16 %v398, %v397
        %v427 = vpack.c.b16 %v400, %v399
        %v428 = vpack.c.b16 %v402, %v401
        %v429 = vpack.c.b16 %v404, %v403
        %v430 = vpack.c.b16 %v406, %v405
        %v431 = vpack.c.b16 %v408, %v407
        %v432 = vpack.c.b16 %v410, %v409
        %v433 = vpack.c.b16 %v412, %v411
        %v434 = vpack.c.b16 %v414, %v413
        %v435 = vpack.c.b16 %v416, %v415
        %v436 = vpack.c.b16 %v418, %v417
        %v437 = vpack.c.b16 %v420, %v419
        %v438 = vpack.c.b16 %v422, %v421
        %vm439 = vcmask 64512
        %v441 = vsel %vm439, %v423, 0
        %v444 = vsel %vm439, %v424, 0
        %v447 = vsel %vm439, %v425, 0
        %v450 = vsel %vm439, %v426, 0
        %v453 = vsel %vm439, %v427, 0
        %v456 = vsel %vm439, %v428, 0
        %v459 = vsel %vm439, %v429, 0
        %v462 = vsel %vm439, %v430, 0
        %v465 = vsel %vm439, %v431, 0
        %v468 = vsel %vm439, %v432, 0
        %v471 = vsel %vm439, %v433, 0
        %v474 = vsel %vm439, %v434, 0
        %v477 = vsel %vm439, %v435, 0
        %v480 = vsel %vm439, %v436, 0
        %v483 = vsel %vm439, %v437, 0
        %v486 = vsel %vm439, %v438, 0
        %vm488 = vcmask 1043456
        %v490 = vsel %vm488, %v358, 0
        %492 = vmatprep.subr.bf16.mxu0 0
        %493 = vmatpush1.bf16.msra.mxu0 %v490
        %494 = vmatprep.subr.bf16.mxu0 0
        %495 = vmatpush1.bf16.msra.mxu0 0
        %496 = vmatprep.subr.bf16.mxu0 0
        %497 = vmatpush1.bf16.msra.mxu0 0
        %498 = vmatprep.subr.bf16.mxu0 0
        %499 = vmatpush1.bf16.msra.mxu0 0
        %500 = vmatprep.subr.bf16.mxu0 0
        %501 = vmatpush1.bf16.msra.mxu0 0
        %502 = vmatprep.subr.bf16.mxu0 0
        %503 = vmatpush1.bf16.msra.mxu0 0
        %504 = vmatprep.subr.bf16.mxu0 0
        %505 = vmatpush1.bf16.msra.mxu0 0
        %506 = vmatprep.subr.bf16.mxu0 0
        %507 = vmatpush1.bf16.msra.mxu0 0
        %508 = vmatprep.subr.bf16.mxu0 0
        %509 = vmatpush1.bf16.msra.mxu0 0
        %510 = vmatprep.subr.bf16.mxu0 0
        %511 = vmatpush1.bf16.msra.mxu0 0
        %512 = vmatprep.subr.bf16.mxu0 0
        %513 = vmatpush1.bf16.msra.mxu0 0
        %514 = vmatprep.subr.bf16.mxu0 0
        %515 = vmatpush1.bf16.msra.mxu0 0
        %516 = vmatprep.subr.bf16.mxu0 0
        %517 = vmatpush1.bf16.msra.mxu0 0
        %518 = vmatprep.subr.bf16.mxu0 0
        %519 = vmatpush1.bf16.msra.mxu0 0
        %520 = vmatprep.subr.bf16.mxu0 0
        %521 = vmatpush1.bf16.msra.mxu0 0
        %522 = vmatprep.subr.bf16.mxu0 0
        %523 = vmatpush1.bf16.msra.mxu0 0
        %524 = vmatprep.mubr.bf16.mxu0 0
        %525 = vmatmul.mubr.bf16.gmra.mrb[0].mxu0 %v441
        %v526 = vpop.f32.mrb[0].mxu0
        %v527 = vadd.f32 0.0, %v526
        %v528 = vpop.f32.mrb[0].mxu0
        %v529 = vpop.f32.mrb[0].mxu0
        %v530 = vadd.f32 0.0, %v529
        %v531 = vpop.f32.mrb[0].mxu0
        %532 = vmatprep.mubr.bf16.mxu0 0
        %533 = vmatmul.mubr.bf16.gmra.mrb[0].mxu0 %v444
        %v534 = vpop.f32.mrb[0].mxu0
        %v535 = vadd.f32 0.0, %v534
        %v536 = vpop.f32.mrb[0].mxu0
        %v537 = vpop.f32.mrb[0].mxu0
        %v538 = vadd.f32 0.0, %v537
        %v539 = vpop.f32.mrb[0].mxu0
        %540 = vmatprep.mubr.bf16.mxu0 0
        %541 = vmatmul.mubr.bf16.gmra.mrb[0].mxu0 %v447
        %v542 = vpop.f32.mrb[0].mxu0
        %v543 = vadd.f32 0.0, %v542
        %v544 = vpop.f32.mrb[0].mxu0
        %v545 = vpop.f32.mrb[0].mxu0
        %v546 = vadd.f32 0.0, %v545
        %v547 = vpop.f32.mrb[0].mxu0
        %548 = vmatprep.mubr.bf16.mxu0 0
        %549 = vmatmul.mubr.bf16.gmra.mrb[0].mxu0 %v450
        %v550 = vpop.f32.mrb[0].mxu0
        %v551 = vadd.f32 0.0, %v550
        %v552 = vpop.f32.mrb[0].mxu0
        %v553 = vpop.f32.mrb[0].mxu0
        %v554 = vadd.f32 0.0, %v553
        %v555 = vpop.f32.mrb[0].mxu0
        %556 = vmatprep.mubr.bf16.mxu0 0
        %557 = vmatmul.mubr.bf16.gmra.mrb[0].mxu0 %v453
        %v558 = vpop.f32.mrb[0].mxu0
        %v559 = vadd.f32 0.0, %v558
        %v560 = vpop.f32.mrb[0].mxu0
        %v561 = vpop.f32.mrb[0].mxu0
        %v562 = vadd.f32 0.0, %v561
        %v563 = vpop.f32.mrb[0].mxu0
        %564 = vmatprep.mubr.bf16.mxu0 0
        %565 = vmatmul.mubr.bf16.gmra.mrb[0].mxu0 %v456
        %v566 = vpop.f32.mrb[0].mxu0
        %v567 = vadd.f32 0.0, %v566
        %v568 = vpop.f32.mrb[0].mxu0
        %v569 = vpop.f32.mrb[0].mxu0
        %v570 = vadd.f32 0.0, %v569
        %v571 = vpop.f32.mrb[0].mxu0
        %572 = vmatprep.mubr.bf16.mxu0 0
        %573 = vmatmul.mubr.bf16.gmra.mrb[0].mxu0 %v459
        %v574 = vpop.f32.mrb[0].mxu0
        %v575 = vadd.f32 0.0, %v574
        %v576 = vpop.f32.mrb[0].mxu0
        %v577 = vpop.f32.mrb[0].mxu0
        %v578 = vadd.f32 0.0, %v577
        %v579 = vpop.f32.mrb[0].mxu0
        %580 = vmatprep.mubr.bf16.mxu0 0
        %581 = vmatmul.mubr.bf16.gmra.mrb[0].mxu0 %v462
        %v582 = vpop.f32.mrb[0].mxu0
        %v583 = vadd.f32 0.0, %v582
        %v584 = vpop.f32.mrb[0].mxu0
        %v585 = vpop.f32.mrb[0].mxu0
        %v586 = vadd.f32 0.0, %v585
        %v587 = vpop.f32.mrb[0].mxu0
        %588 = vmatprep.mubr.bf16.mxu0 0
        %589 = vmatmul.mubr.bf16.gmra.mrb[0].mxu0 %v465
        %v590 = vpop.f32.mrb[0].mxu0
        %v591 = vadd.f32 0.0, %v590
        %v592 = vpop.f32.mrb[0].mxu0
        %v593 = vpop.f32.mrb[0].mxu0
        %v594 = vadd.f32 0.0, %v593
        %v595 = vpop.f32.mrb[0].mxu0
        %596 = vmatprep.mubr.bf16.mxu0 0
        %597 = vmatmul.mubr.bf16.gmra.mrb[0].mxu0 %v468
        %v598 = vpop.f32.mrb[0].mxu0
        %v599 = vadd.f32 0.0, %v598
        %v600 = vpop.f32.mrb[0].mxu0
        %v601 = vpop.f32.mrb[0].mxu0
        %v602 = vadd.f32 0.0, %v601
        %v603 = vpop.f32.mrb[0].mxu0
        %604 = vmatprep.mubr.bf16.mxu0 0
        %605 = vmatmul.mubr.bf16.gmra.mrb[0].mxu0 %v471
        %v606 = vpop.f32.mrb[0].mxu0
        %v607 = vadd.f32 0.0, %v606
        %v608 = vpop.f32.mrb[0].mxu0
        %v609 = vpop.f32.mrb[0].mxu0
        %v610 = vadd.f32 0.0, %v609
        %v611 = vpop.f32.mrb[0].mxu0
        %612 = vmatprep.mubr.bf16.mxu0 0
        %613 = vmatmul.mubr.bf16.gmra.mrb[0].mxu0 %v474
        %v614 = vpop.f32.mrb[0].mxu0
        %v615 = vadd.f32 0.0, %v614
        %v616 = vpop.f32.mrb[0].mxu0
        %v617 = vpop.f32.mrb[0].mxu0
        %v618 = vadd.f32 0.0, %v617
        %v619 = vpop.f32.mrb[0].mxu0
        %620 = vmatprep.mubr.bf16.mxu0 0
        %621 = vmatmul.mubr.bf16.gmra.mrb[0].mxu0 %v477
        %v622 = vpop.f32.mrb[0].mxu0
        %v623 = vadd.f32 0.0, %v622
        %v624 = vpop.f32.mrb[0].mxu0
        %v625 = vpop.f32.mrb[0].mxu0
        %v626 = vadd.f32 0.0, %v625
        %v627 = vpop.f32.mrb[0].mxu0
        %628 = vmatprep.mubr.bf16.mxu0 0
        %629 = vmatmul.mubr.bf16.gmra.mrb[0].mxu0 %v480
        %v630 = vpop.f32.mrb[0].mxu0
        %v631 = vadd.f32 0.0, %v630
        %v632 = vpop.f32.mrb[0].mxu0
        %v633 = vpop.f32.mrb[0].mxu0
        %v634 = vadd.f32 0.0, %v633
        %v635 = vpop.f32.mrb[0].mxu0
        %636 = vmatprep.mubr.bf16.mxu0 0
        %637 = vmatmul.mubr.bf16.gmra.mrb[0].mxu0 %v483
        %v638 = vpop.f32.mrb[0].mxu0
        %v639 = vadd.f32 0.0, %v638
        %v640 = vpop.f32.mrb[0].mxu0
        %v641 = vpop.f32.mrb[0].mxu0
        %v642 = vadd.f32 0.0, %v641
        %v643 = vpop.f32.mrb[0].mxu0
        %644 = vmatprep.mubr.bf16.mxu0 0
        %645 = vmatmul.mubr.bf16.gmra.mrb[0].mxu0 %v486
        %v646 = vpop.f32.mrb[0].mxu0
        %v647 = vadd.f32 0.0, %v646
        %v648 = vpop.f32.mrb[0].mxu0
        %v649 = vpop.f32.mrb[0].mxu0
        %v650 = vadd.f32 0.0, %v649
        %v651 = vpop.f32.mrb[0].mxu0
        %652 = vdwg.mxu0
        %v685 = vunpack.c.l.b16 %v291
        %v686 = vunpack.c.l.b16 %v292
        %v687 = vunpack.c.l.b16 %v293
        %v688 = vunpack.c.l.b16 %v294
        %v689 = vunpack.c.l.b16 %v295
        %v690 = vunpack.c.l.b16 %v296
        %v691 = vunpack.c.l.b16 %v297
        %v692 = vunpack.c.l.b16 %v298
        %v693 = vunpack.c.l.b16 %v299
        %v694 = vunpack.c.l.b16 %v300
        %v695 = vunpack.c.l.b16 %v301
        %v696 = vunpack.c.l.b16 %v302
        %v697 = vunpack.c.l.b16 %v303
        %v698 = vunpack.c.l.b16 %v304
        %v699 = vunpack.c.l.b16 %v305
        %v700 = vunpack.c.l.b16 %v306
        %v701 = vunpack.c.l.b16 %v307
        %v702 = vunpack.c.l.b16 %v308
        %v703 = vunpack.c.l.b16 %v309
        %v704 = vunpack.c.l.b16 %v310
        %v705 = vunpack.c.l.b16 %v311
        %v706 = vunpack.c.l.b16 %v312
        %v707 = vunpack.c.l.b16 %v313
        %v708 = vunpack.c.l.b16 %v314
        %v709 = vunpack.c.l.b16 %v315
        %v710 = vunpack.c.l.b16 %v316
        %v711 = vunpack.c.l.b16 %v317
        %v712 = vunpack.c.l.b16 %v318
        %v713 = vunpack.c.l.b16 %v319
        %v714 = vunpack.c.l.b16 %v320
        %v715 = vunpack.c.l.b16 %v321
        %v716 = vunpack.c.l.b16 %v322
        %v717 = vpack.c.b16 %v686, %v685
        %v718 = vpack.c.b16 %v688, %v687
        %v719 = vpack.c.b16 %v690, %v689
        %v720 = vpack.c.b16 %v692, %v691
        %v721 = vpack.c.b16 %v694, %v693
        %v722 = vpack.c.b16 %v696, %v695
        %v723 = vpack.c.b16 %v698, %v697
        %v724 = vpack.c.b16 %v700, %v699
        %v725 = vpack.c.b16 %v702, %v701
        %v726 = vpack.c.b16 %v704, %v703
        %v727 = vpack.c.b16 %v706, %v705
        %v728 = vpack.c.b16 %v708, %v707
        %v729 = vpack.c.b16 %v710, %v709
        %v730 = vpack.c.b16 %v712, %v711
        %v731 = vpack.c.b16 %v714, %v713
        %v732 = vpack.c.b16 %v716, %v715
        %v734 = vsel %vm439, %v717, 0
        %v737 = vsel %vm439, %v718, 0
        %v740 = vsel %vm439, %v719, 0
        %v743 = vsel %vm439, %v720, 0
        %v746 = vsel %vm439, %v721, 0
        %v749 = vsel %vm439, %v722, 0
        %v752 = vsel %vm439, %v723, 0
        %v755 = vsel %vm439, %v724, 0
        %v758 = vsel %vm439, %v725, 0
        %v761 = vsel %vm439, %v726, 0
        %v764 = vsel %vm439, %v727, 0
        %v767 = vsel %vm439, %v728, 0
        %v770 = vsel %vm439, %v729, 0
        %v773 = vsel %vm439, %v730, 0
        %v776 = vsel %vm439, %v731, 0
        %v779 = vsel %vm439, %v732, 0
        %v782 = vsel %vm488, %v323, 0
        %784 = vmatprep.subr.bf16.mxu0 0
        %785 = vmatpush1.bf16.msra.mxu0 %v782
        %786 = vmatprep.subr.bf16.mxu0 0
        %787 = vmatpush1.bf16.msra.mxu0 0
        %788 = vmatprep.subr.bf16.mxu0 0
        %789 = vmatpush1.bf16.msra.mxu0 0
        %790 = vmatprep.subr.bf16.mxu0 0
        %791 = vmatpush1.bf16.msra.mxu0 0
        %792 = vmatprep.subr.bf16.mxu0 0
        %793 = vmatpush1.bf16.msra.mxu0 0
        %794 = vmatprep.subr.bf16.mxu0 0
        %795 = vmatpush1.bf16.msra.mxu0 0
        %796 = vmatprep.subr.bf16.mxu0 0
        %797 = vmatpush1.bf16.msra.mxu0 0
        %798 = vmatprep.subr.bf16.mxu0 0
        %799 = vmatpush1.bf16.msra.mxu0 0
        %800 = vmatprep.subr.bf16.mxu0 0
        %801 = vmatpush1.bf16.msra.mxu0 0
        %802 = vmatprep.subr.bf16.mxu0 0
        %803 = vmatpush1.bf16.msra.mxu0 0
        %804 = vmatprep.subr.bf16.mxu0 0
        %805 = vmatpush1.bf16.msra.mxu0 0
        %806 = vmatprep.subr.bf16.mxu0 0
        %807 = vmatpush1.bf16.msra.mxu0 0
        %808 = vmatprep.subr.bf16.mxu0 0
        %809 = vmatpush1.bf16.msra.mxu0 0
        %810 = vmatprep.subr.bf16.mxu0 0
        %811 = vmatpush1.bf16.msra.mxu0 0
        %812 = vmatprep.subr.bf16.mxu0 0
        %813 = vmatpush1.bf16.msra.mxu0 0
        %814 = vmatprep.subr.bf16.mxu0 0
        %815 = vmatpush1.bf16.msra.mxu0 0
        %816 = vmatprep.mubr.bf16.mxu0 0
        %817 = vmatmul.mubr.bf16.gmra.mrb[0].mxu0 %v734
        %v818 = vpop.f32.mrb[0].mxu0
        %v819 = vadd.f32 %v527, %v818
        %v820 = vpop.f32.mrb[0].mxu0
        %v821 = vpop.f32.mrb[0].mxu0
        %v822 = vadd.f32 %v530, %v821
        %v823 = vpop.f32.mrb[0].mxu0
        %824 = vmatprep.mubr.bf16.mxu0 0
        %825 = vmatmul.mubr.bf16.gmra.mrb[0].mxu0 %v737
        %v826 = vpop.f32.mrb[0].mxu0
        %v827 = vadd.f32 %v535, %v826
        %v828 = vpop.f32.mrb[0].mxu0
        %v829 = vpop.f32.mrb[0].mxu0
        %v830 = vadd.f32 %v538, %v829
        %v831 = vpop.f32.mrb[0].mxu0
        %832 = vmatprep.mubr.bf16.mxu0 0
        %833 = vmatmul.mubr.bf16.gmra.mrb[0].mxu0 %v740
        %v834 = vpop.f32.mrb[0].mxu0
        %v835 = vadd.f32 %v543, %v834
        %v836 = vpop.f32.mrb[0].mxu0
        %v837 = vpop.f32.mrb[0].mxu0
        %v838 = vadd.f32 %v546, %v837
        %v839 = vpop.f32.mrb[0].mxu0
        %840 = vmatprep.mubr.bf16.mxu0 0
        %841 = vmatmul.mubr.bf16.gmra.mrb[0].mxu0 %v743
        %v842 = vpop.f32.mrb[0].mxu0
        %v843 = vadd.f32 %v551, %v842
        %v844 = vpop.f32.mrb[0].mxu0
        %v845 = vpop.f32.mrb[0].mxu0
        %v846 = vadd.f32 %v554, %v845
        %v847 = vpop.f32.mrb[0].mxu0
        %848 = vmatprep.mubr.bf16.mxu0 0
        %849 = vmatmul.mubr.bf16.gmra.mrb[0].mxu0 %v746
        %v850 = vpop.f32.mrb[0].mxu0
        %v851 = vadd.f32 %v559, %v850
        %v852 = vpop.f32.mrb[0].mxu0
        %v853 = vpop.f32.mrb[0].mxu0
        %v854 = vadd.f32 %v562, %v853
        %v855 = vpop.f32.mrb[0].mxu0
        %856 = vmatprep.mubr.bf16.mxu0 0
        %857 = vmatmul.mubr.bf16.gmra.mrb[0].mxu0 %v749
        %v858 = vpop.f32.mrb[0].mxu0
        %v859 = vadd.f32 %v567, %v858
        %v860 = vpop.f32.mrb[0].mxu0
        %v861 = vpop.f32.mrb[0].mxu0
        %v862 = vadd.f32 %v570, %v861
        %v863 = vpop.f32.mrb[0].mxu0
        %864 = vmatprep.mubr.bf16.mxu0 0
        %865 = vmatmul.mubr.bf16.gmra.mrb[0].mxu0 %v752
        %v866 = vpop.f32.mrb[0].mxu0
        %v867 = vadd.f32 %v575, %v866
        %v868 = vpop.f32.mrb[0].mxu0
        %v869 = vpop.f32.mrb[0].mxu0
        %v870 = vadd.f32 %v578, %v869
        %v871 = vpop.f32.mrb[0].mxu0
        %872 = vmatprep.mubr.bf16.mxu0 0
        %873 = vmatmul.mubr.bf16.gmra.mrb[0].mxu0 %v755
        %v874 = vpop.f32.mrb[0].mxu0
        %v875 = vadd.f32 %v583, %v874
        %v876 = vpop.f32.mrb[0].mxu0
        %v877 = vpop.f32.mrb[0].mxu0
        %v878 = vadd.f32 %v586, %v877
        %v879 = vpop.f32.mrb[0].mxu0
        %880 = vmatprep.mubr.bf16.mxu0 0
        %881 = vmatmul.mubr.bf16.gmra.mrb[0].mxu0 %v758
        %v882 = vpop.f32.mrb[0].mxu0
        %v883 = vadd.f32 %v591, %v882
        %v884 = vpop.f32.mrb[0].mxu0
        %v885 = vpop.f32.mrb[0].mxu0
        %v886 = vadd.f32 %v594, %v885
        %v887 = vpop.f32.mrb[0].mxu0
        %888 = vmatprep.mubr.bf16.mxu0 0
        %889 = vmatmul.mubr.bf16.gmra.mrb[0].mxu0 %v761
        %v890 = vpop.f32.mrb[0].mxu0
        %v891 = vadd.f32 %v599, %v890
        %v892 = vpop.f32.mrb[0].mxu0
        %v893 = vpop.f32.mrb[0].mxu0
        %v894 = vadd.f32 %v602, %v893
        %v895 = vpop.f32.mrb[0].mxu0
        %896 = vmatprep.mubr.bf16.mxu0 0
        %897 = vmatmul.mubr.bf16.gmra.mrb[0].mxu0 %v764
        %v898 = vpop.f32.mrb[0].mxu0
        %v899 = vadd.f32 %v607, %v898
        %v900 = vpop.f32.mrb[0].mxu0
        %v901 = vpop.f32.mrb[0].mxu0
        %v902 = vadd.f32 %v610, %v901
        %v903 = vpop.f32.mrb[0].mxu0
        %904 = vmatprep.mubr.bf16.mxu0 0
        %905 = vmatmul.mubr.bf16.gmra.mrb[0].mxu0 %v767
        %v906 = vpop.f32.mrb[0].mxu0
        %v907 = vadd.f32 %v615, %v906
        %v908 = vpop.f32.mrb[0].mxu0
        %v909 = vpop.f32.mrb[0].mxu0
        %v910 = vadd.f32 %v618, %v909
        %v911 = vpop.f32.mrb[0].mxu0
        %912 = vmatprep.mubr.bf16.mxu0 0
        %913 = vmatmul.mubr.bf16.gmra.mrb[0].mxu0 %v770
        %v914 = vpop.f32.mrb[0].mxu0
        %v915 = vadd.f32 %v623, %v914
        %v916 = vpop.f32.mrb[0].mxu0
        %v917 = vpop.f32.mrb[0].mxu0
        %v918 = vadd.f32 %v626, %v917
        %v919 = vpop.f32.mrb[0].mxu0
        %920 = vmatprep.mubr.bf16.mxu0 0
        %921 = vmatmul.mubr.bf16.gmra.mrb[0].mxu0 %v773
        %v922 = vpop.f32.mrb[0].mxu0
        %v923 = vadd.f32 %v631, %v922
        %v924 = vpop.f32.mrb[0].mxu0
        %v925 = vpop.f32.mrb[0].mxu0
        %v926 = vadd.f32 %v634, %v925
        %v927 = vpop.f32.mrb[0].mxu0
        %928 = vmatprep.mubr.bf16.mxu0 0
        %929 = vmatmul.mubr.bf16.gmra.mrb[0].mxu0 %v776
        %v930 = vpop.f32.mrb[0].mxu0
        %v931 = vadd.f32 %v639, %v930
        %v932 = vpop.f32.mrb[0].mxu0
        %v933 = vpop.f32.mrb[0].mxu0
        %v934 = vadd.f32 %v642, %v933
        %v935 = vpop.f32.mrb[0].mxu0
        %936 = vmatprep.mubr.bf16.mxu0 0
        %937 = vmatmul.mubr.bf16.gmra.mrb[0].mxu0 %v779
        %v938 = vpop.f32.mrb[0].mxu0
        %v939 = vadd.f32 %v647, %v938
        %v940 = vpop.f32.mrb[0].mxu0
        %v941 = vpop.f32.mrb[0].mxu0
        %v942 = vadd.f32 %v650, %v941
        %v943 = vpop.f32.mrb[0].mxu0
        %944 = vdwg.mxu0
        %s945 = scalar_lea.vmem %s241, 32
        %v946 = vld [vmem:[%s945] sm:$0xf]
        %v947 = vld [vmem:[%s945 + $0x4] sm:$0xf]
        %v948 = vld [vmem:[%s945 + $0x8] sm:$0xf]
        %v949 = vld [vmem:[%s945 + $0xc] sm:$0xf]
        %v950 = vld [vmem:[%s945 + $0x10] sm:$0xf]
        %v951 = vld [vmem:[%s945 + $0x14] sm:$0xf]
        %v952 = vld [vmem:[%s945 + $0x18] sm:$0xf]
        %v953 = vld [vmem:[%s945 + $0x1c] sm:$0xf]
        %v954 = vld [vmem:[%s945 + $0x20] sm:$0xf]
        %v955 = vld [vmem:[%s945 + $0x24] sm:$0xf]
        %v956 = vld [vmem:[%s945 + $0x28] sm:$0xf]
        %v957 = vld [vmem:[%s945 + $0x2c] sm:$0xf]
        %v958 = vld [vmem:[%s945 + $0x30] sm:$0xf]
        %v959 = vld [vmem:[%s945 + $0x34] sm:$0xf]
        %v960 = vld [vmem:[%s945 + $0x38] sm:$0xf]
        %v961 = vld [vmem:[%s945 + $0x3c] sm:$0xf]
        %v962 = vld [vmem:[%s945 + $0x40] sm:$0xf]
        %v963 = vld [vmem:[%s945 + $0x44] sm:$0xf]
        %v964 = vld [vmem:[%s945 + $0x48] sm:$0xf]
        %v965 = vld [vmem:[%s945 + $0x4c] sm:$0xf]
        %v966 = vld [vmem:[%s945 + $0x50] sm:$0xf]
        %v967 = vld [vmem:[%s945 + $0x54] sm:$0xf]
        %v968 = vld [vmem:[%s945 + $0x58] sm:$0xf]
        %v969 = vld [vmem:[%s945 + $0x5c] sm:$0xf]
        %v970 = vld [vmem:[%s945 + $0x60] sm:$0xf]
        %v971 = vld [vmem:[%s945 + $0x64] sm:$0xf]
        %v972 = vld [vmem:[%s945 + $0x68] sm:$0xf]
        %v973 = vld [vmem:[%s945 + $0x6c] sm:$0xf]
        %v974 = vld [vmem:[%s945 + $0x70] sm:$0xf]
        %v975 = vld [vmem:[%s945 + $0x74] sm:$0xf]
        %v976 = vld [vmem:[%s945 + $0x78] sm:$0xf]
        %v977 = vld [vmem:[%s945 + $0x7c] sm:$0xf]
        %s978 = scalar_lea.vmem %s248, 24
        %v979 = vld [vmem:[%s978] sm:$0xf]
        %v1012 = vunpack.c.l.b16 %v946
        %v1013 = vunpack.c.l.b16 %v947
        %v1014 = vunpack.c.l.b16 %v948
        %v1015 = vunpack.c.l.b16 %v949
        %v1016 = vunpack.c.l.b16 %v950
        %v1017 = vunpack.c.l.b16 %v951
        %v1018 = vunpack.c.l.b16 %v952
        %v1019 = vunpack.c.l.b16 %v953
        %v1020 = vunpack.c.l.b16 %v954
        %v1021 = vunpack.c.l.b16 %v955
        %v1022 = vunpack.c.l.b16 %v956
        %v1023 = vunpack.c.l.b16 %v957
        %v1024 = vunpack.c.l.b16 %v958
        %v1025 = vunpack.c.l.b16 %v959
        %v1026 = vunpack.c.l.b16 %v960
        %v1027 = vunpack.c.l.b16 %v961
        %v1028 = vunpack.c.l.b16 %v962
        %v1029 = vunpack.c.l.b16 %v963
        %v1030 = vunpack.c.l.b16 %v964
        %v1031 = vunpack.c.l.b16 %v965
        %v1032 = vunpack.c.l.b16 %v966
        %v1033 = vunpack.c.l.b16 %v967
        %v1034 = vunpack.c.l.b16 %v968
        %v1035 = vunpack.c.l.b16 %v969
        %v1036 = vunpack.c.l.b16 %v970
        %v1037 = vunpack.c.l.b16 %v971
        %v1038 = vunpack.c.l.b16 %v972
        %v1039 = vunpack.c.l.b16 %v973
        %v1040 = vunpack.c.l.b16 %v974
        %v1041 = vunpack.c.l.b16 %v975
        %v1042 = vunpack.c.l.b16 %v976
        %v1043 = vunpack.c.l.b16 %v977
        %v1044 = vpack.c.b16 %v1013, %v1012
        %v1045 = vpack.c.b16 %v1015, %v1014
        %v1046 = vpack.c.b16 %v1017, %v1016
        %v1047 = vpack.c.b16 %v1019, %v1018
        %v1048 = vpack.c.b16 %v1021, %v1020
        %v1049 = vpack.c.b16 %v1023, %v1022
        %v1050 = vpack.c.b16 %v1025, %v1024
        %v1051 = vpack.c.b16 %v1027, %v1026
        %v1052 = vpack.c.b16 %v1029, %v1028
        %v1053 = vpack.c.b16 %v1031, %v1030
        %v1054 = vpack.c.b16 %v1033, %v1032
        %v1055 = vpack.c.b16 %v1035, %v1034
        %v1056 = vpack.c.b16 %v1037, %v1036
        %v1057 = vpack.c.b16 %v1039, %v1038
        %v1058 = vpack.c.b16 %v1041, %v1040
        %v1059 = vpack.c.b16 %v1043, %v1042
        %v1061 = vsel %vm439, %v1044, 0
        %v1064 = vsel %vm439, %v1045, 0
        %v1067 = vsel %vm439, %v1046, 0
        %v1070 = vsel %vm439, %v1047, 0
        %v1073 = vsel %vm439, %v1048, 0
        %v1076 = vsel %vm439, %v1049, 0
        %v1079 = vsel %vm439, %v1050, 0
        %v1082 = vsel %vm439, %v1051, 0
        %v1085 = vsel %vm439, %v1052, 0
        %v1088 = vsel %vm439, %v1053, 0
        %v1091 = vsel %vm439, %v1054, 0
        %v1094 = vsel %vm439, %v1055, 0
        %v1097 = vsel %vm439, %v1056, 0
        %v1100 = vsel %vm439, %v1057, 0
        %v1103 = vsel %vm439, %v1058, 0
        %v1106 = vsel %vm439, %v1059, 0
        %v1109 = vsel %vm488, %v979, 0
        %1111 = vmatprep.subr.bf16.mxu0 0
        %1112 = vmatpush1.bf16.msra.mxu0 %v1109
        %1113 = vmatprep.subr.bf16.mxu0 0
        %1114 = vmatpush1.bf16.msra.mxu0 0
        %1115 = vmatprep.subr.bf16.mxu0 0
        %1116 = vmatpush1.bf16.msra.mxu0 0
        %1117 = vmatprep.subr.bf16.mxu0 0
        %1118 = vmatpush1.bf16.msra.mxu0 0
        %1119 = vmatprep.subr.bf16.mxu0 0
        %1120 = vmatpush1.bf16.msra.mxu0 0
        %1121 = vmatprep.subr.bf16.mxu0 0
        %1122 = vmatpush1.bf16.msra.mxu0 0
        %1123 = vmatprep.subr.bf16.mxu0 0
        %1124 = vmatpush1.bf16.msra.mxu0 0
        %1125 = vmatprep.subr.bf16.mxu0 0
        %1126 = vmatpush1.bf16.msra.mxu0 0
        %1127 = vmatprep.subr.bf16.mxu0 0
        %1128 = vmatpush1.bf16.msra.mxu0 0
        %1129 = vmatprep.subr.bf16.mxu0 0
        %1130 = vmatpush1.bf16.msra.mxu0 0
        %1131 = vmatprep.subr.bf16.mxu0 0
        %1132 = vmatpush1.bf16.msra.mxu0 0
        %1133 = vmatprep.subr.bf16.mxu0 0
        %1134 = vmatpush1.bf16.msra.mxu0 0
        %1135 = vmatprep.subr.bf16.mxu0 0
        %1136 = vmatpush1.bf16.msra.mxu0 0
        %1137 = vmatprep.subr.bf16.mxu0 0
        %1138 = vmatpush1.bf16.msra.mxu0 0
        %1139 = vmatprep.subr.bf16.mxu0 0
        %1140 = vmatpush1.bf16.msra.mxu0 0
        %1141 = vmatprep.subr.bf16.mxu0 0
        %1142 = vmatpush1.bf16.msra.mxu0 0
        %1143 = vmatprep.mubr.bf16.mxu0 0
        %1144 = vmatmul.mubr.bf16.gmra.mrb[0].mxu0 %v1061
        %v1145 = vpop.f32.mrb[0].mxu0
        %v1146 = vadd.f32 0.0, %v1145
        %v1147 = vpop.f32.mrb[0].mxu0
        %v1148 = vpop.f32.mrb[0].mxu0
        %v1149 = vadd.f32 0.0, %v1148
        %v1150 = vpop.f32.mrb[0].mxu0
        %1151 = vmatprep.mubr.bf16.mxu0 0
        %1152 = vmatmul.mubr.bf16.gmra.mrb[0].mxu0 %v1064
        %v1153 = vpop.f32.mrb[0].mxu0
        %v1154 = vadd.f32 0.0, %v1153
        %v1155 = vpop.f32.mrb[0].mxu0
        %v1156 = vpop.f32.mrb[0].mxu0
        %v1157 = vadd.f32 0.0, %v1156
        %v1158 = vpop.f32.mrb[0].mxu0
        %1159 = vmatprep.mubr.bf16.mxu0 0
        %1160 = vmatmul.mubr.bf16.gmra.mrb[0].mxu0 %v1067
        %v1161 = vpop.f32.mrb[0].mxu0
        %v1162 = vadd.f32 0.0, %v1161
        %v1163 = vpop.f32.mrb[0].mxu0
        %v1164 = vpop.f32.mrb[0].mxu0
        %v1165 = vadd.f32 0.0, %v1164
        %v1166 = vpop.f32.mrb[0].mxu0
        %1167 = vmatprep.mubr.bf16.mxu0 0
        %1168 = vmatmul.mubr.bf16.gmra.mrb[0].mxu0 %v1070
        %v1169 = vpop.f32.mrb[0].mxu0
        %v1170 = vadd.f32 0.0, %v1169
        %v1171 = vpop.f32.mrb[0].mxu0
        %v1172 = vpop.f32.mrb[0].mxu0
        %v1173 = vadd.f32 0.0, %v1172
        %v1174 = vpop.f32.mrb[0].mxu0
        %1175 = vmatprep.mubr.bf16.mxu0 0
        %1176 = vmatmul.mubr.bf16.gmra.mrb[0].mxu0 %v1073
        %v1177 = vpop.f32.mrb[0].mxu0
        %v1178 = vadd.f32 0.0, %v1177
        %v1179 = vpop.f32.mrb[0].mxu0
        %v1180 = vpop.f32.mrb[0].mxu0
        %v1181 = vadd.f32 0.0, %v1180
        %v1182 = vpop.f32.mrb[0].mxu0
        %1183 = vmatprep.mubr.bf16.mxu0 0
        %1184 = vmatmul.mubr.bf16.gmra.mrb[0].mxu0 %v1076
        %v1185 = vpop.f32.mrb[0].mxu0
        %v1186 = vadd.f32 0.0, %v1185
        %v1187 = vpop.f32.mrb[0].mxu0
        %v1188 = vpop.f32.mrb[0].mxu0
        %v1189 = vadd.f32 0.0, %v1188
        %v1190 = vpop.f32.mrb[0].mxu0
        %1191 = vmatprep.mubr.bf16.mxu0 0
        %1192 = vmatmul.mubr.bf16.gmra.mrb[0].mxu0 %v1079
        %v1193 = vpop.f32.mrb[0].mxu0
        %v1194 = vadd.f32 0.0, %v1193
        %v1195 = vpop.f32.mrb[0].mxu0
        %v1196 = vpop.f32.mrb[0].mxu0
        %v1197 = vadd.f32 0.0, %v1196
        %v1198 = vpop.f32.mrb[0].mxu0
        %1199 = vmatprep.mubr.bf16.mxu0 0
        %1200 = vmatmul.mubr.bf16.gmra.mrb[0].mxu0 %v1082
        %v1201 = vpop.f32.mrb[0].mxu0
        %v1202 = vadd.f32 0.0, %v1201
        %v1203 = vpop.f32.mrb[0].mxu0
        %v1204 = vpop.f32.mrb[0].mxu0
        %v1205 = vadd.f32 0.0, %v1204
        %v1206 = vpop.f32.mrb[0].mxu0
        %1207 = vmatprep.mubr.bf16.mxu0 0
        %1208 = vmatmul.mubr.bf16.gmra.mrb[0].mxu0 %v1085
        %v1209 = vpop.f32.mrb[0].mxu0
        %v1210 = vadd.f32 0.0, %v1209
        %v1211 = vpop.f32.mrb[0].mxu0
        %v1212 = vpop.f32.mrb[0].mxu0
        %v1213 = vadd.f32 0.0, %v1212
        %v1214 = vpop.f32.mrb[0].mxu0
        %1215 = vmatprep.mubr.bf16.mxu0 0
        %1216 = vmatmul.mubr.bf16.gmra.mrb[0].mxu0 %v1088
        %v1217 = vpop.f32.mrb[0].mxu0
        %v1218 = vadd.f32 0.0, %v1217
        %v1219 = vpop.f32.mrb[0].mxu0
        %v1220 = vpop.f32.mrb[0].mxu0
        %v1221 = vadd.f32 0.0, %v1220
        %v1222 = vpop.f32.mrb[0].mxu0
        %1223 = vmatprep.mubr.bf16.mxu0 0
        %1224 = vmatmul.mubr.bf16.gmra.mrb[0].mxu0 %v1091
        %v1225 = vpop.f32.mrb[0].mxu0
        %v1226 = vadd.f32 0.0, %v1225
        %v1227 = vpop.f32.mrb[0].mxu0
        %v1228 = vpop.f32.mrb[0].mxu0
        %v1229 = vadd.f32 0.0, %v1228
        %v1230 = vpop.f32.mrb[0].mxu0
        %1231 = vmatprep.mubr.bf16.mxu0 0
        %1232 = vmatmul.mubr.bf16.gmra.mrb[0].mxu0 %v1094
        %v1233 = vpop.f32.mrb[0].mxu0
        %v1234 = vadd.f32 0.0, %v1233
        %v1235 = vpop.f32.mrb[0].mxu0
        %v1236 = vpop.f32.mrb[0].mxu0
        %v1237 = vadd.f32 0.0, %v1236
        %v1238 = vpop.f32.mrb[0].mxu0
        %1239 = vmatprep.mubr.bf16.mxu0 0
        %1240 = vmatmul.mubr.bf16.gmra.mrb[0].mxu0 %v1097
        %v1241 = vpop.f32.mrb[0].mxu0
        %v1242 = vadd.f32 0.0, %v1241
        %v1243 = vpop.f32.mrb[0].mxu0
        %v1244 = vpop.f32.mrb[0].mxu0
        %v1245 = vadd.f32 0.0, %v1244
        %v1246 = vpop.f32.mrb[0].mxu0
        %1247 = vmatprep.mubr.bf16.mxu0 0
        %1248 = vmatmul.mubr.bf16.gmra.mrb[0].mxu0 %v1100
        %v1249 = vpop.f32.mrb[0].mxu0
        %v1250 = vadd.f32 0.0, %v1249
        %v1251 = vpop.f32.mrb[0].mxu0
        %v1252 = vpop.f32.mrb[0].mxu0
        %v1253 = vadd.f32 0.0, %v1252
        %v1254 = vpop.f32.mrb[0].mxu0
        %1255 = vmatprep.mubr.bf16.mxu0 0
        %1256 = vmatmul.mubr.bf16.gmra.mrb[0].mxu0 %v1103
        %v1257 = vpop.f32.mrb[0].mxu0
        %v1258 = vadd.f32 0.0, %v1257
        %v1259 = vpop.f32.mrb[0].mxu0
        %v1260 = vpop.f32.mrb[0].mxu0
        %v1261 = vadd.f32 0.0, %v1260
        %v1262 = vpop.f32.mrb[0].mxu0
        %1263 = vmatprep.mubr.bf16.mxu0 0
        %1264 = vmatmul.mubr.bf16.gmra.mrb[0].mxu0 %v1106
        %v1265 = vpop.f32.mrb[0].mxu0
        %v1266 = vadd.f32 0.0, %v1265
        %v1267 = vpop.f32.mrb[0].mxu0
        %v1268 = vpop.f32.mrb[0].mxu0
        %v1269 = vadd.f32 0.0, %v1268
        %v1270 = vpop.f32.mrb[0].mxu0
        %1271 = vdwg.mxu0
        %v1272 = vadd.f32 %v819, %v1146
        %v1273 = vadd.f32 %v822, %v1149
        %v1274 = vadd.f32 %v827, %v1154
        %v1275 = vadd.f32 %v830, %v1157
        %v1276 = vadd.f32 %v835, %v1162
        %v1277 = vadd.f32 %v838, %v1165
        %v1278 = vadd.f32 %v843, %v1170
        %v1279 = vadd.f32 %v846, %v1173
        %v1280 = vadd.f32 %v851, %v1178
        %v1281 = vadd.f32 %v854, %v1181
        %v1282 = vadd.f32 %v859, %v1186
        %v1283 = vadd.f32 %v862, %v1189
        %v1284 = vadd.f32 %v867, %v1194
        %v1285 = vadd.f32 %v870, %v1197
        %v1286 = vadd.f32 %v875, %v1202
        %v1287 = vadd.f32 %v878, %v1205
        %v1288 = vadd.f32 %v883, %v1210
        %v1289 = vadd.f32 %v886, %v1213
        %v1290 = vadd.f32 %v891, %v1218
        %v1291 = vadd.f32 %v894, %v1221
        %v1292 = vadd.f32 %v899, %v1226
        %v1293 = vadd.f32 %v902, %v1229
        %v1294 = vadd.f32 %v907, %v1234
        %v1295 = vadd.f32 %v910, %v1237
        %v1296 = vadd.f32 %v915, %v1242
        %v1297 = vadd.f32 %v918, %v1245
        %v1298 = vadd.f32 %v923, %v1250
        %v1299 = vadd.f32 %v926, %v1253
        %v1300 = vadd.f32 %v931, %v1258
        %v1301 = vadd.f32 %v934, %v1261
        %v1302 = vadd.f32 %v939, %v1266
        %v1303 = vadd.f32 %v942, %v1269
        %s1304 = scalar_lea.vmem %s248, 4
        %v1305 = vld [vmem:[%s1304] sm:$0xf]
        %s1306 = scalar_lea.vmem %s248, 16
        %v1307 = vld [vmem:[%s1306] sm:$0xf]
        %v1309 = vsel %vm488, %v1307, 0
        %1311 = vmatprep.subr.bf16.mxu0 0
        %1312 = vmatpush1.bf16.msra.mxu0 %v1309
        %1313 = vmatprep.subr.bf16.mxu0 0
        %1314 = vmatpush1.bf16.msra.mxu0 0
        %1315 = vmatprep.subr.bf16.mxu0 0
        %1316 = vmatpush1.bf16.msra.mxu0 0
        %1317 = vmatprep.subr.bf16.mxu0 0
        %1318 = vmatpush1.bf16.msra.mxu0 0
        %1319 = vmatprep.subr.bf16.mxu0 0
        %1320 = vmatpush1.bf16.msra.mxu0 0
        %1321 = vmatprep.subr.bf16.mxu0 0
        %1322 = vmatpush1.bf16.msra.mxu0 0
        %1323 = vmatprep.subr.bf16.mxu0 0
        %1324 = vmatpush1.bf16.msra.mxu0 0
        %1325 = vmatprep.subr.bf16.mxu0 0
        %1326 = vmatpush1.bf16.msra.mxu0 0
        %1327 = vmatprep.subr.bf16.mxu0 0
        %1328 = vmatpush1.bf16.msra.mxu0 0
        %1329 = vmatprep.subr.bf16.mxu0 0
        %1330 = vmatpush1.bf16.msra.mxu0 0
        %1331 = vmatprep.subr.bf16.mxu0 0
        %1332 = vmatpush1.bf16.msra.mxu0 0
        %1333 = vmatprep.subr.bf16.mxu0 0
        %1334 = vmatpush1.bf16.msra.mxu0 0
        %1335 = vmatprep.subr.bf16.mxu0 0
        %1336 = vmatpush1.bf16.msra.mxu0 0
        %1337 = vmatprep.subr.bf16.mxu0 0
        %1338 = vmatpush1.bf16.msra.mxu0 0
        %1339 = vmatprep.subr.bf16.mxu0 0
        %1340 = vmatpush1.bf16.msra.mxu0 0
        %1341 = vmatprep.subr.bf16.mxu0 0
        %1342 = vmatpush1.bf16.msra.mxu0 0
        %1343 = vmatprep.mubr.bf16.mxu0 0
        %1344 = vmatmul.mubr.bf16.gmra.mrb[0].mxu0 %v441
        %v1345 = vpop.f32.mrb[0].mxu0
        %v1346 = vadd.f32 0.0, %v1345
        %v1347 = vpop.f32.mrb[0].mxu0
        %v1348 = vpop.f32.mrb[0].mxu0
        %v1349 = vadd.f32 0.0, %v1348
        %v1350 = vpop.f32.mrb[0].mxu0
        %1351 = vmatprep.mubr.bf16.mxu0 0
        %1352 = vmatmul.mubr.bf16.gmra.mrb[0].mxu0 %v444
        %v1353 = vpop.f32.mrb[0].mxu0
        %v1354 = vadd.f32 0.0, %v1353
        %v1355 = vpop.f32.mrb[0].mxu0
        %v1356 = vpop.f32.mrb[0].mxu0
        %v1357 = vadd.f32 0.0, %v1356
        %v1358 = vpop.f32.mrb[0].mxu0
        %1359 = vmatprep.mubr.bf16.mxu0 0
        %1360 = vmatmul.mubr.bf16.gmra.mrb[0].mxu0 %v447
        %v1361 = vpop.f32.mrb[0].mxu0
        %v1362 = vadd.f32 0.0, %v1361
        %v1363 = vpop.f32.mrb[0].mxu0
        %v1364 = vpop.f32.mrb[0].mxu0
        %v1365 = vadd.f32 0.0, %v1364
        %v1366 = vpop.f32.mrb[0].mxu0
        %1367 = vmatprep.mubr.bf16.mxu0 0
        %1368 = vmatmul.mubr.bf16.gmra.mrb[0].mxu0 %v450
        %v1369 = vpop.f32.mrb[0].mxu0
        %v1370 = vadd.f32 0.0, %v1369
        %v1371 = vpop.f32.mrb[0].mxu0
        %v1372 = vpop.f32.mrb[0].mxu0
        %v1373 = vadd.f32 0.0, %v1372
        %v1374 = vpop.f32.mrb[0].mxu0
        %1375 = vmatprep.mubr.bf16.mxu0 0
        %1376 = vmatmul.mubr.bf16.gmra.mrb[0].mxu0 %v453
        %v1377 = vpop.f32.mrb[0].mxu0
        %v1378 = vadd.f32 0.0, %v1377
        %v1379 = vpop.f32.mrb[0].mxu0
        %v1380 = vpop.f32.mrb[0].mxu0
        %v1381 = vadd.f32 0.0, %v1380
        %v1382 = vpop.f32.mrb[0].mxu0
        %1383 = vmatprep.mubr.bf16.mxu0 0
        %1384 = vmatmul.mubr.bf16.gmra.mrb[0].mxu0 %v456
        %v1385 = vpop.f32.mrb[0].mxu0
        %v1386 = vadd.f32 0.0, %v1385
        %v1387 = vpop.f32.mrb[0].mxu0
        %v1388 = vpop.f32.mrb[0].mxu0
        %v1389 = vadd.f32 0.0, %v1388
        %v1390 = vpop.f32.mrb[0].mxu0
        %1391 = vmatprep.mubr.bf16.mxu0 0
        %1392 = vmatmul.mubr.bf16.gmra.mrb[0].mxu0 %v459
        %v1393 = vpop.f32.mrb[0].mxu0
        %v1394 = vadd.f32 0.0, %v1393
        %v1395 = vpop.f32.mrb[0].mxu0
        %v1396 = vpop.f32.mrb[0].mxu0
        %v1397 = vadd.f32 0.0, %v1396
        %v1398 = vpop.f32.mrb[0].mxu0
        %1399 = vmatprep.mubr.bf16.mxu0 0
        %1400 = vmatmul.mubr.bf16.gmra.mrb[0].mxu0 %v462
        %v1401 = vpop.f32.mrb[0].mxu0
        %v1402 = vadd.f32 0.0, %v1401
        %v1403 = vpop.f32.mrb[0].mxu0
        %v1404 = vpop.f32.mrb[0].mxu0
        %v1405 = vadd.f32 0.0, %v1404
        %v1406 = vpop.f32.mrb[0].mxu0
        %1407 = vmatprep.mubr.bf16.mxu0 0
        %1408 = vmatmul.mubr.bf16.gmra.mrb[0].mxu0 %v465
        %v1409 = vpop.f32.mrb[0].mxu0
        %v1410 = vadd.f32 0.0, %v1409
        %v1411 = vpop.f32.mrb[0].mxu0
        %v1412 = vpop.f32.mrb[0].mxu0
        %v1413 = vadd.f32 0.0, %v1412
        %v1414 = vpop.f32.mrb[0].mxu0
        %1415 = vmatprep.mubr.bf16.mxu0 0
        %1416 = vmatmul.mubr.bf16.gmra.mrb[0].mxu0 %v468
        %v1417 = vpop.f32.mrb[0].mxu0
        %v1418 = vadd.f32 0.0, %v1417
        %v1419 = vpop.f32.mrb[0].mxu0
        %v1420 = vpop.f32.mrb[0].mxu0
        %v1421 = vadd.f32 0.0, %v1420
        %v1422 = vpop.f32.mrb[0].mxu0
        %1423 = vmatprep.mubr.bf16.mxu0 0
        %1424 = vmatmul.mubr.bf16.gmra.mrb[0].mxu0 %v471
        %v1425 = vpop.f32.mrb[0].mxu0
        %v1426 = vadd.f32 0.0, %v1425
        %v1427 = vpop.f32.mrb[0].mxu0
        %v1428 = vpop.f32.mrb[0].mxu0
        %v1429 = vadd.f32 0.0, %v1428
        %v1430 = vpop.f32.mrb[0].mxu0
        %1431 = vmatprep.mubr.bf16.mxu0 0
        %1432 = vmatmul.mubr.bf16.gmra.mrb[0].mxu0 %v474
        %v1433 = vpop.f32.mrb[0].mxu0
        %v1434 = vadd.f32 0.0, %v1433
        %v1435 = vpop.f32.mrb[0].mxu0
        %v1436 = vpop.f32.mrb[0].mxu0
        %v1437 = vadd.f32 0.0, %v1436
        %v1438 = vpop.f32.mrb[0].mxu0
        %1439 = vmatprep.mubr.bf16.mxu0 0
        %1440 = vmatmul.mubr.bf16.gmra.mrb[0].mxu0 %v477
        %v1441 = vpop.f32.mrb[0].mxu0
        %v1442 = vadd.f32 0.0, %v1441
        %v1443 = vpop.f32.mrb[0].mxu0
        %v1444 = vpop.f32.mrb[0].mxu0
        %v1445 = vadd.f32 0.0, %v1444
        %v1446 = vpop.f32.mrb[0].mxu0
        %1447 = vmatprep.mubr.bf16.mxu0 0
        %1448 = vmatmul.mubr.bf16.gmra.mrb[0].mxu0 %v480
        %v1449 = vpop.f32.mrb[0].mxu0
        %v1450 = vadd.f32 0.0, %v1449
        %v1451 = vpop.f32.mrb[0].mxu0
        %v1452 = vpop.f32.mrb[0].mxu0
        %v1453 = vadd.f32 0.0, %v1452
        %v1454 = vpop.f32.mrb[0].mxu0
        %1455 = vmatprep.mubr.bf16.mxu0 0
        %1456 = vmatmul.mubr.bf16.gmra.mrb[0].mxu0 %v483
        %v1457 = vpop.f32.mrb[0].mxu0
        %v1458 = vadd.f32 0.0, %v1457
        %v1459 = vpop.f32.mrb[0].mxu0
        %v1460 = vpop.f32.mrb[0].mxu0
        %v1461 = vadd.f32 0.0, %v1460
        %v1462 = vpop.f32.mrb[0].mxu0
        %1463 = vmatprep.mubr.bf16.mxu0 0
        %1464 = vmatmul.mubr.bf16.gmra.mrb[0].mxu0 %v486
        %v1465 = vpop.f32.mrb[0].mxu0
        %v1466 = vadd.f32 0.0, %v1465
        %v1467 = vpop.f32.mrb[0].mxu0
        %v1468 = vpop.f32.mrb[0].mxu0
        %v1469 = vadd.f32 0.0, %v1468
        %v1470 = vpop.f32.mrb[0].mxu0
        %1471 = vdwg.mxu0
        %v1473 = vsel %vm488, %v1305, 0
        %1475 = vmatprep.subr.bf16.mxu0 0
        %1476 = vmatpush1.bf16.msra.mxu0 %v1473
        %1477 = vmatprep.subr.bf16.mxu0 0
        %1478 = vmatpush1.bf16.msra.mxu0 0
        %1479 = vmatprep.subr.bf16.mxu0 0
        %1480 = vmatpush1.bf16.msra.mxu0 0
        %1481 = vmatprep.subr.bf16.mxu0 0
        %1482 = vmatpush1.bf16.msra.mxu0 0
        %1483 = vmatprep.subr.bf16.mxu0 0
        %1484 = vmatpush1.bf16.msra.mxu0 0
        %1485 = vmatprep.subr.bf16.mxu0 0
        %1486 = vmatpush1.bf16.msra.mxu0 0
        %1487 = vmatprep.subr.bf16.mxu0 0
        %1488 = vmatpush1.bf16.msra.mxu0 0
        %1489 = vmatprep.subr.bf16.mxu0 0
        %1490 = vmatpush1.bf16.msra.mxu0 0
        %1491 = vmatprep.subr.bf16.mxu0 0
        %1492 = vmatpush1.bf16.msra.mxu0 0
        %1493 = vmatprep.subr.bf16.mxu0 0
        %1494 = vmatpush1.bf16.msra.mxu0 0
        %1495 = vmatprep.subr.bf16.mxu0 0
        %1496 = vmatpush1.bf16.msra.mxu0 0
        %1497 = vmatprep.subr.bf16.mxu0 0
        %1498 = vmatpush1.bf16.msra.mxu0 0
        %1499 = vmatprep.subr.bf16.mxu0 0
        %1500 = vmatpush1.bf16.msra.mxu0 0
        %1501 = vmatprep.subr.bf16.mxu0 0
        %1502 = vmatpush1.bf16.msra.mxu0 0
        %1503 = vmatprep.subr.bf16.mxu0 0
        %1504 = vmatpush1.bf16.msra.mxu0 0
        %1505 = vmatprep.subr.bf16.mxu0 0
        %1506 = vmatpush1.bf16.msra.mxu0 0
        %1507 = vmatprep.mubr.bf16.mxu0 0
        %1508 = vmatmul.mubr.bf16.gmra.mrb[0].mxu0 %v734
        %v1509 = vpop.f32.mrb[0].mxu0
        %v1510 = vadd.f32 %v1346, %v1509
        %v1511 = vpop.f32.mrb[0].mxu0
        %v1512 = vpop.f32.mrb[0].mxu0
        %v1513 = vadd.f32 %v1349, %v1512
        %v1514 = vpop.f32.mrb[0].mxu0
        %1515 = vmatprep.mubr.bf16.mxu0 0
        %1516 = vmatmul.mubr.bf16.gmra.mrb[0].mxu0 %v737
        %v1517 = vpop.f32.mrb[0].mxu0
        %v1518 = vadd.f32 %v1354, %v1517
        %v1519 = vpop.f32.mrb[0].mxu0
        %v1520 = vpop.f32.mrb[0].mxu0
        %v1521 = vadd.f32 %v1357, %v1520
        %v1522 = vpop.f32.mrb[0].mxu0
        %1523 = vmatprep.mubr.bf16.mxu0 0
        %1524 = vmatmul.mubr.bf16.gmra.mrb[0].mxu0 %v740
        %v1525 = vpop.f32.mrb[0].mxu0
        %v1526 = vadd.f32 %v1362, %v1525
        %v1527 = vpop.f32.mrb[0].mxu0
        %v1528 = vpop.f32.mrb[0].mxu0
        %v1529 = vadd.f32 %v1365, %v1528
        %v1530 = vpop.f32.mrb[0].mxu0
        %1531 = vmatprep.mubr.bf16.mxu0 0
        %1532 = vmatmul.mubr.bf16.gmra.mrb[0].mxu0 %v743
        %v1533 = vpop.f32.mrb[0].mxu0
        %v1534 = vadd.f32 %v1370, %v1533
        %v1535 = vpop.f32.mrb[0].mxu0
        %v1536 = vpop.f32.mrb[0].mxu0
        %v1537 = vadd.f32 %v1373, %v1536
        %v1538 = vpop.f32.mrb[0].mxu0
        %1539 = vmatprep.mubr.bf16.mxu0 0
        %1540 = vmatmul.mubr.bf16.gmra.mrb[0].mxu0 %v746
        %v1541 = vpop.f32.mrb[0].mxu0
        %v1542 = vadd.f32 %v1378, %v1541
        %v1543 = vpop.f32.mrb[0].mxu0
        %v1544 = vpop.f32.mrb[0].mxu0
        %v1545 = vadd.f32 %v1381, %v1544
        %v1546 = vpop.f32.mrb[0].mxu0
        %1547 = vmatprep.mubr.bf16.mxu0 0
        %1548 = vmatmul.mubr.bf16.gmra.mrb[0].mxu0 %v749
        %v1549 = vpop.f32.mrb[0].mxu0
        %v1550 = vadd.f32 %v1386, %v1549
        %v1551 = vpop.f32.mrb[0].mxu0
        %v1552 = vpop.f32.mrb[0].mxu0
        %v1553 = vadd.f32 %v1389, %v1552
        %v1554 = vpop.f32.mrb[0].mxu0
        %1555 = vmatprep.mubr.bf16.mxu0 0
        %1556 = vmatmul.mubr.bf16.gmra.mrb[0].mxu0 %v752
        %v1557 = vpop.f32.mrb[0].mxu0
        %v1558 = vadd.f32 %v1394, %v1557
        %v1559 = vpop.f32.mrb[0].mxu0
        %v1560 = vpop.f32.mrb[0].mxu0
        %v1561 = vadd.f32 %v1397, %v1560
        %v1562 = vpop.f32.mrb[0].mxu0
        %1563 = vmatprep.mubr.bf16.mxu0 0
        %1564 = vmatmul.mubr.bf16.gmra.mrb[0].mxu0 %v755
        %v1565 = vpop.f32.mrb[0].mxu0
        %v1566 = vadd.f32 %v1402, %v1565
        %v1567 = vpop.f32.mrb[0].mxu0
        %v1568 = vpop.f32.mrb[0].mxu0
        %v1569 = vadd.f32 %v1405, %v1568
        %v1570 = vpop.f32.mrb[0].mxu0
        %1571 = vmatprep.mubr.bf16.mxu0 0
        %1572 = vmatmul.mubr.bf16.gmra.mrb[0].mxu0 %v758
        %v1573 = vpop.f32.mrb[0].mxu0
        %v1574 = vadd.f32 %v1410, %v1573
        %v1575 = vpop.f32.mrb[0].mxu0
        %v1576 = vpop.f32.mrb[0].mxu0
        %v1577 = vadd.f32 %v1413, %v1576
        %v1578 = vpop.f32.mrb[0].mxu0
        %1579 = vmatprep.mubr.bf16.mxu0 0
        %1580 = vmatmul.mubr.bf16.gmra.mrb[0].mxu0 %v761
        %v1581 = vpop.f32.mrb[0].mxu0
        %v1582 = vadd.f32 %v1418, %v1581
        %v1583 = vpop.f32.mrb[0].mxu0
        %v1584 = vpop.f32.mrb[0].mxu0
        %v1585 = vadd.f32 %v1421, %v1584
        %v1586 = vpop.f32.mrb[0].mxu0
        %1587 = vmatprep.mubr.bf16.mxu0 0
        %1588 = vmatmul.mubr.bf16.gmra.mrb[0].mxu0 %v764
        %v1589 = vpop.f32.mrb[0].mxu0
        %v1590 = vadd.f32 %v1426, %v1589
        %v1591 = vpop.f32.mrb[0].mxu0
        %v1592 = vpop.f32.mrb[0].mxu0
        %v1593 = vadd.f32 %v1429, %v1592
        %v1594 = vpop.f32.mrb[0].mxu0
        %1595 = vmatprep.mubr.bf16.mxu0 0
        %1596 = vmatmul.mubr.bf16.gmra.mrb[0].mxu0 %v767
        %v1597 = vpop.f32.mrb[0].mxu0
        %v1598 = vadd.f32 %v1434, %v1597
        %v1599 = vpop.f32.mrb[0].mxu0
        %v1600 = vpop.f32.mrb[0].mxu0
        %v1601 = vadd.f32 %v1437, %v1600
        %v1602 = vpop.f32.mrb[0].mxu0
        %1603 = vmatprep.mubr.bf16.mxu0 0
        %1604 = vmatmul.mubr.bf16.gmra.mrb[0].mxu0 %v770
        %v1605 = vpop.f32.mrb[0].mxu0
        %v1606 = vadd.f32 %v1442, %v1605
        %v1607 = vpop.f32.mrb[0].mxu0
        %v1608 = vpop.f32.mrb[0].mxu0
        %v1609 = vadd.f32 %v1445, %v1608
        %v1610 = vpop.f32.mrb[0].mxu0
        %1611 = vmatprep.mubr.bf16.mxu0 0
        %1612 = vmatmul.mubr.bf16.gmra.mrb[0].mxu0 %v773
        %v1613 = vpop.f32.mrb[0].mxu0
        %v1614 = vadd.f32 %v1450, %v1613
        %v1615 = vpop.f32.mrb[0].mxu0
        %v1616 = vpop.f32.mrb[0].mxu0
        %v1617 = vadd.f32 %v1453, %v1616
        %v1618 = vpop.f32.mrb[0].mxu0
        %1619 = vmatprep.mubr.bf16.mxu0 0
        %1620 = vmatmul.mubr.bf16.gmra.mrb[0].mxu0 %v776
        %v1621 = vpop.f32.mrb[0].mxu0
        %v1622 = vadd.f32 %v1458, %v1621
        %v1623 = vpop.f32.mrb[0].mxu0
        %v1624 = vpop.f32.mrb[0].mxu0
        %v1625 = vadd.f32 %v1461, %v1624
        %v1626 = vpop.f32.mrb[0].mxu0
        %1627 = vmatprep.mubr.bf16.mxu0 0
        %1628 = vmatmul.mubr.bf16.gmra.mrb[0].mxu0 %v779
        %v1629 = vpop.f32.mrb[0].mxu0
        %v1630 = vadd.f32 %v1466, %v1629
        %v1631 = vpop.f32.mrb[0].mxu0
        %v1632 = vpop.f32.mrb[0].mxu0
        %v1633 = vadd.f32 %v1469, %v1632
        %v1634 = vpop.f32.mrb[0].mxu0
        %1635 = vdwg.mxu0
        %s1636 = scalar_lea.vmem %s248, 28
        %v1637 = vld [vmem:[%s1636] sm:$0xf]
        %v1639 = vsel %vm488, %v1637, 0
        %1641 = vmatprep.subr.bf16.mxu0 0
        %1642 = vmatpush1.bf16.msra.mxu0 %v1639
        %1643 = vmatprep.subr.bf16.mxu0 0
        %1644 = vmatpush1.bf16.msra.mxu0 0
        %1645 = vmatprep.subr.bf16.mxu0 0
        %1646 = vmatpush1.bf16.msra.mxu0 0
        %1647 = vmatprep.subr.bf16.mxu0 0
        %1648 = vmatpush1.bf16.msra.mxu0 0
        %1649 = vmatprep.subr.bf16.mxu0 0
        %1650 = vmatpush1.bf16.msra.mxu0 0
        %1651 = vmatprep.subr.bf16.mxu0 0
        %1652 = vmatpush1.bf16.msra.mxu0 0
        %1653 = vmatprep.subr.bf16.mxu0 0
        %1654 = vmatpush1.bf16.msra.mxu0 0
        %1655 = vmatprep.subr.bf16.mxu0 0
        %1656 = vmatpush1.bf16.msra.mxu0 0
        %1657 = vmatprep.subr.bf16.mxu0 0
        %1658 = vmatpush1.bf16.msra.mxu0 0
        %1659 = vmatprep.subr.bf16.mxu0 0
        %1660 = vmatpush1.bf16.msra.mxu0 0
        %1661 = vmatprep.subr.bf16.mxu0 0
        %1662 = vmatpush1.bf16.msra.mxu0 0
        %1663 = vmatprep.subr.bf16.mxu0 0
        %1664 = vmatpush1.bf16.msra.mxu0 0
        %1665 = vmatprep.subr.bf16.mxu0 0
        %1666 = vmatpush1.bf16.msra.mxu0 0
        %1667 = vmatprep.subr.bf16.mxu0 0
        %1668 = vmatpush1.bf16.msra.mxu0 0
        %1669 = vmatprep.subr.bf16.mxu0 0
        %1670 = vmatpush1.bf16.msra.mxu0 0
        %1671 = vmatprep.subr.bf16.mxu0 0
        %1672 = vmatpush1.bf16.msra.mxu0 0
        %1673 = vmatprep.mubr.bf16.mxu0 0
        %1674 = vmatmul.mubr.bf16.gmra.mrb[0].mxu0 %v1061
        %v1675 = vpop.f32.mrb[0].mxu0
        %v1676 = vadd.f32 0.0, %v1675
        %v1677 = vpop.f32.mrb[0].mxu0
        %v1678 = vpop.f32.mrb[0].mxu0
        %v1679 = vadd.f32 0.0, %v1678
        %v1680 = vpop.f32.mrb[0].mxu0
        %1681 = vmatprep.mubr.bf16.mxu0 0
        %1682 = vmatmul.mubr.bf16.gmra.mrb[0].mxu0 %v1064
        %v1683 = vpop.f32.mrb[0].mxu0
        %v1684 = vadd.f32 0.0, %v1683
        %v1685 = vpop.f32.mrb[0].mxu0
        %v1686 = vpop.f32.mrb[0].mxu0
        %v1687 = vadd.f32 0.0, %v1686
        %v1688 = vpop.f32.mrb[0].mxu0
        %1689 = vmatprep.mubr.bf16.mxu0 0
        %1690 = vmatmul.mubr.bf16.gmra.mrb[0].mxu0 %v1067
        %v1691 = vpop.f32.mrb[0].mxu0
        %v1692 = vadd.f32 0.0, %v1691
        %v1693 = vpop.f32.mrb[0].mxu0
        %v1694 = vpop.f32.mrb[0].mxu0
        %v1695 = vadd.f32 0.0, %v1694
        %v1696 = vpop.f32.mrb[0].mxu0
        %1697 = vmatprep.mubr.bf16.mxu0 0
        %1698 = vmatmul.mubr.bf16.gmra.mrb[0].mxu0 %v1070
        %v1699 = vpop.f32.mrb[0].mxu0
        %v1700 = vadd.f32 0.0, %v1699
        %v1701 = vpop.f32.mrb[0].mxu0
        %v1702 = vpop.f32.mrb[0].mxu0
        %v1703 = vadd.f32 0.0, %v1702
        %v1704 = vpop.f32.mrb[0].mxu0
        %1705 = vmatprep.mubr.bf16.mxu0 0
        %1706 = vmatmul.mubr.bf16.gmra.mrb[0].mxu0 %v1073
        %v1707 = vpop.f32.mrb[0].mxu0
        %v1708 = vadd.f32 0.0, %v1707
        %v1709 = vpop.f32.mrb[0].mxu0
        %v1710 = vpop.f32.mrb[0].mxu0
        %v1711 = vadd.f32 0.0, %v1710
        %v1712 = vpop.f32.mrb[0].mxu0
        %1713 = vmatprep.mubr.bf16.mxu0 0
        %1714 = vmatmul.mubr.bf16.gmra.mrb[0].mxu0 %v1076
        %v1715 = vpop.f32.mrb[0].mxu0
        %v1716 = vadd.f32 0.0, %v1715
        %v1717 = vpop.f32.mrb[0].mxu0
        %v1718 = vpop.f32.mrb[0].mxu0
        %v1719 = vadd.f32 0.0, %v1718
        %v1720 = vpop.f32.mrb[0].mxu0
        %1721 = vmatprep.mubr.bf16.mxu0 0
        %1722 = vmatmul.mubr.bf16.gmra.mrb[0].mxu0 %v1079
        %v1723 = vpop.f32.mrb[0].mxu0
        %v1724 = vadd.f32 0.0, %v1723
        %v1725 = vpop.f32.mrb[0].mxu0
        %v1726 = vpop.f32.mrb[0].mxu0
        %v1727 = vadd.f32 0.0, %v1726
        %v1728 = vpop.f32.mrb[0].mxu0
        %1729 = vmatprep.mubr.bf16.mxu0 0
        %1730 = vmatmul.mubr.bf16.gmra.mrb[0].mxu0 %v1082
        %v1731 = vpop.f32.mrb[0].mxu0
        %v1732 = vadd.f32 0.0, %v1731
        %v1733 = vpop.f32.mrb[0].mxu0
        %v1734 = vpop.f32.mrb[0].mxu0
        %v1735 = vadd.f32 0.0, %v1734
        %v1736 = vpop.f32.mrb[0].mxu0
        %1737 = vmatprep.mubr.bf16.mxu0 0
        %1738 = vmatmul.mubr.bf16.gmra.mrb[0].mxu0 %v1085
        %v1739 = vpop.f32.mrb[0].mxu0
        %v1740 = vadd.f32 0.0, %v1739
        %v1741 = vpop.f32.mrb[0].mxu0
        %v1742 = vpop.f32.mrb[0].mxu0
        %v1743 = vadd.f32 0.0, %v1742
        %v1744 = vpop.f32.mrb[0].mxu0
        %1745 = vmatprep.mubr.bf16.mxu0 0
        %1746 = vmatmul.mubr.bf16.gmra.mrb[0].mxu0 %v1088
        %v1747 = vpop.f32.mrb[0].mxu0
        %v1748 = vadd.f32 0.0, %v1747
        %v1749 = vpop.f32.mrb[0].mxu0
        %v1750 = vpop.f32.mrb[0].mxu0
        %v1751 = vadd.f32 0.0, %v1750
        %v1752 = vpop.f32.mrb[0].mxu0
        %1753 = vmatprep.mubr.bf16.mxu0 0
        %1754 = vmatmul.mubr.bf16.gmra.mrb[0].mxu0 %v1091
        %v1755 = vpop.f32.mrb[0].mxu0
        %v1756 = vadd.f32 0.0, %v1755
        %v1757 = vpop.f32.mrb[0].mxu0
        %v1758 = vpop.f32.mrb[0].mxu0
        %v1759 = vadd.f32 0.0, %v1758
        %v1760 = vpop.f32.mrb[0].mxu0
        %1761 = vmatprep.mubr.bf16.mxu0 0
        %1762 = vmatmul.mubr.bf16.gmra.mrb[0].mxu0 %v1094
        %v1763 = vpop.f32.mrb[0].mxu0
        %v1764 = vadd.f32 0.0, %v1763
        %v1765 = vpop.f32.mrb[0].mxu0
        %v1766 = vpop.f32.mrb[0].mxu0
        %v1767 = vadd.f32 0.0, %v1766
        %v1768 = vpop.f32.mrb[0].mxu0
        %1769 = vmatprep.mubr.bf16.mxu0 0
        %1770 = vmatmul.mubr.bf16.gmra.mrb[0].mxu0 %v1097
        %v1771 = vpop.f32.mrb[0].mxu0
        %v1772 = vadd.f32 0.0, %v1771
        %v1773 = vpop.f32.mrb[0].mxu0
        %v1774 = vpop.f32.mrb[0].mxu0
        %v1775 = vadd.f32 0.0, %v1774
        %v1776 = vpop.f32.mrb[0].mxu0
        %1777 = vmatprep.mubr.bf16.mxu0 0
        %1778 = vmatmul.mubr.bf16.gmra.mrb[0].mxu0 %v1100
        %v1779 = vpop.f32.mrb[0].mxu0
        %v1780 = vadd.f32 0.0, %v1779
        %v1781 = vpop.f32.mrb[0].mxu0
        %v1782 = vpop.f32.mrb[0].mxu0
        %v1783 = vadd.f32 0.0, %v1782
        %v1784 = vpop.f32.mrb[0].mxu0
        %1785 = vmatprep.mubr.bf16.mxu0 0
        %1786 = vmatmul.mubr.bf16.gmra.mrb[0].mxu0 %v1103
        %v1787 = vpop.f32.mrb[0].mxu0
        %v1788 = vadd.f32 0.0, %v1787
        %v1789 = vpop.f32.mrb[0].mxu0
        %v1790 = vpop.f32.mrb[0].mxu0
        %v1791 = vadd.f32 0.0, %v1790
        %v1792 = vpop.f32.mrb[0].mxu0
        %1793 = vmatprep.mubr.bf16.mxu0 0
        %1794 = vmatmul.mubr.bf16.gmra.mrb[0].mxu0 %v1106
        %v1795 = vpop.f32.mrb[0].mxu0
        %v1796 = vadd.f32 0.0, %v1795
        %v1797 = vpop.f32.mrb[0].mxu0
        %v1798 = vpop.f32.mrb[0].mxu0
        %v1799 = vadd.f32 0.0, %v1798
        %v1800 = vpop.f32.mrb[0].mxu0
        %1801 = vdwg.mxu0
        %v1802 = vadd.f32 %v1510, %v1676
        %v1803 = vadd.f32 %v1513, %v1679
        %v1804 = vadd.f32 %v1518, %v1684
        %v1805 = vadd.f32 %v1521, %v1687
        %v1806 = vadd.f32 %v1526, %v1692
        %v1807 = vadd.f32 %v1529, %v1695
        %v1808 = vadd.f32 %v1534, %v1700
        %v1809 = vadd.f32 %v1537, %v1703
        %v1810 = vadd.f32 %v1542, %v1708
        %v1811 = vadd.f32 %v1545, %v1711
        %v1812 = vadd.f32 %v1550, %v1716
        %v1813 = vadd.f32 %v1553, %v1719
        %v1814 = vadd.f32 %v1558, %v1724
        %v1815 = vadd.f32 %v1561, %v1727
        %v1816 = vadd.f32 %v1566, %v1732
        %v1817 = vadd.f32 %v1569, %v1735
        %v1818 = vadd.f32 %v1574, %v1740
        %v1819 = vadd.f32 %v1577, %v1743
        %v1820 = vadd.f32 %v1582, %v1748
        %v1821 = vadd.f32 %v1585, %v1751
        %v1822 = vadd.f32 %v1590, %v1756
        %v1823 = vadd.f32 %v1593, %v1759
        %v1824 = vadd.f32 %v1598, %v1764
        %v1825 = vadd.f32 %v1601, %v1767
        %v1826 = vadd.f32 %v1606, %v1772
        %v1827 = vadd.f32 %v1609, %v1775
        %v1828 = vadd.f32 %v1614, %v1780
        %v1829 = vadd.f32 %v1617, %v1783
        %v1830 = vadd.f32 %v1622, %v1788
        %v1831 = vadd.f32 %v1625, %v1791
        %v1832 = vadd.f32 %v1630, %v1796
        %v1833 = vadd.f32 %v1633, %v1799
        %vm1866 = vcmask 1046528
        %v1867 = vrot.slane %v1802, 1
        %v1868 = vrot.slane %v1803, 1
        %v1869 = vsel %vm1866, %v1867, %v1868
        %v1870 = vrot.slane %v1804, 1
        %v1871 = vsel %vm1866, %v1868, %v1870
        %v1872 = vrot.slane %v1805, 1
        %v1873 = vsel %vm1866, %v1870, %v1872
        %v1874 = vrot.slane %v1806, 1
        %v1875 = vsel %vm1866, %v1872, %v1874
        %v1876 = vrot.slane %v1807, 1
        %v1877 = vsel %vm1866, %v1874, %v1876
        %v1878 = vrot.slane %v1808, 1
        %v1879 = vsel %vm1866, %v1876, %v1878
        %v1880 = vrot.slane %v1809, 1
        %v1881 = vsel %vm1866, %v1878, %v1880
        %v1882 = vrot.slane %v1810, 1
        %v1883 = vsel %vm1866, %v1880, %v1882
        %v1884 = vrot.slane %v1811, 1
        %v1885 = vsel %vm1866, %v1882, %v1884
        %v1886 = vrot.slane %v1812, 1
        %v1887 = vsel %vm1866, %v1884, %v1886
        %v1888 = vrot.slane %v1813, 1
        %v1889 = vsel %vm1866, %v1886, %v1888
        %v1890 = vrot.slane %v1814, 1
        %v1891 = vsel %vm1866, %v1888, %v1890
        %v1892 = vrot.slane %v1815, 1
        %v1893 = vsel %vm1866, %v1890, %v1892
        %v1894 = vrot.slane %v1816, 1
        %v1895 = vsel %vm1866, %v1892, %v1894
        %v1896 = vrot.slane %v1817, 1
        %v1897 = vsel %vm1866, %v1894, %v1896
        %v1898 = vrot.slane %v1818, 1
        %v1899 = vsel %vm1866, %v1896, %v1898
        %v1900 = vrot.slane %v1819, 1
        %v1901 = vsel %vm1866, %v1898, %v1900
        %v1902 = vrot.slane %v1820, 1
        %v1903 = vsel %vm1866, %v1900, %v1902
        %v1904 = vrot.slane %v1821, 1
        %v1905 = vsel %vm1866, %v1902, %v1904
        %v1906 = vrot.slane %v1822, 1
        %v1907 = vsel %vm1866, %v1904, %v1906
        %v1908 = vrot.slane %v1823, 1
        %v1909 = vsel %vm1866, %v1906, %v1908
        %v1910 = vrot.slane %v1824, 1
        %v1911 = vsel %vm1866, %v1908, %v1910
        %v1912 = vrot.slane %v1825, 1
        %v1913 = vsel %vm1866, %v1910, %v1912
        %v1914 = vrot.slane %v1826, 1
        %v1915 = vsel %vm1866, %v1912, %v1914
        %v1916 = vrot.slane %v1827, 1
        %v1917 = vsel %vm1866, %v1914, %v1916
        %v1918 = vrot.slane %v1828, 1
        %v1919 = vsel %vm1866, %v1916, %v1918
        %v1920 = vrot.slane %v1829, 1
        %v1921 = vsel %vm1866, %v1918, %v1920
        %v1922 = vrot.slane %v1830, 1
        %v1923 = vsel %vm1866, %v1920, %v1922
        %v1924 = vrot.slane %v1831, 1
        %v1925 = vsel %vm1866, %v1922, %v1924
        %v1926 = vrot.slane %v1832, 1
        %v1927 = vsel %vm1866, %v1924, %v1926
        %v1928 = vrot.slane %v1833, 1
        %v1929 = vsel %vm1866, %v1926, %v1928
        %v1963 = vsel %vm1866, %v1928, %v1867
        %v1964 = vadd.f32 %v1272, %v1869
        %v1965 = vadd.f32 %v1273, %v1871
        %v1966 = vadd.f32 %v1274, %v1873
        %v1967 = vadd.f32 %v1275, %v1875
        %v1968 = vadd.f32 %v1276, %v1877
        %v1969 = vadd.f32 %v1277, %v1879
        %v1970 = vadd.f32 %v1278, %v1881
        %v1971 = vadd.f32 %v1279, %v1883
        %v1972 = vadd.f32 %v1280, %v1885
        %v1973 = vadd.f32 %v1281, %v1887
        %v1974 = vadd.f32 %v1282, %v1889
        %v1975 = vadd.f32 %v1283, %v1891
        %v1976 = vadd.f32 %v1284, %v1893
        %v1977 = vadd.f32 %v1285, %v1895
        %v1978 = vadd.f32 %v1286, %v1897
        %v1979 = vadd.f32 %v1287, %v1899
        %v1980 = vadd.f32 %v1288, %v1901
        %v1981 = vadd.f32 %v1289, %v1903
        %v1982 = vadd.f32 %v1290, %v1905
        %v1983 = vadd.f32 %v1291, %v1907
        %v1984 = vadd.f32 %v1292, %v1909
        %v1985 = vadd.f32 %v1293, %v1911
        %v1986 = vadd.f32 %v1294, %v1913
        %v1987 = vadd.f32 %v1295, %v1915
        %v1988 = vadd.f32 %v1296, %v1917
        %v1989 = vadd.f32 %v1297, %v1919
        %v1990 = vadd.f32 %v1298, %v1921
        %v1991 = vadd.f32 %v1299, %v1923
        %v1992 = vadd.f32 %v1300, %v1925
        %v1993 = vadd.f32 %v1301, %v1927
        %v1994 = vadd.f32 %v1302, %v1929
        %v1995 = vadd.f32 %v1303, %v1963
        %s1996 = scalar_lea.vmem %s248, 8
        %v1997 = vld [vmem:[%s1996] sm:$0xf]
        %s1998 = scalar_lea.vmem %s248, 20
        %v1999 = vld [vmem:[%s1998] sm:$0xf]
        %v2001 = vsel %vm488, %v1999, 0
        %2003 = vmatprep.subr.bf16.mxu0 0
        %2004 = vmatpush1.bf16.msra.mxu0 %v2001
        %2005 = vmatprep.subr.bf16.mxu0 0
        %2006 = vmatpush1.bf16.msra.mxu0 0
        %2007 = vmatprep.subr.bf16.mxu0 0
        %2008 = vmatpush1.bf16.msra.mxu0 0
        %2009 = vmatprep.subr.bf16.mxu0 0
        %2010 = vmatpush1.bf16.msra.mxu0 0
        %2011 = vmatprep.subr.bf16.mxu0 0
        %2012 = vmatpush1.bf16.msra.mxu0 0
        %2013 = vmatprep.subr.bf16.mxu0 0
        %2014 = vmatpush1.bf16.msra.mxu0 0
        %2015 = vmatprep.subr.bf16.mxu0 0
        %2016 = vmatpush1.bf16.msra.mxu0 0
        %2017 = vmatprep.subr.bf16.mxu0 0
        %2018 = vmatpush1.bf16.msra.mxu0 0
        %2019 = vmatprep.subr.bf16.mxu0 0
        %2020 = vmatpush1.bf16.msra.mxu0 0
        %2021 = vmatprep.subr.bf16.mxu0 0
        %2022 = vmatpush1.bf16.msra.mxu0 0
        %2023 = vmatprep.subr.bf16.mxu0 0
        %2024 = vmatpush1.bf16.msra.mxu0 0
        %2025 = vmatprep.subr.bf16.mxu0 0
        %2026 = vmatpush1.bf16.msra.mxu0 0
        %2027 = vmatprep.subr.bf16.mxu0 0
        %2028 = vmatpush1.bf16.msra.mxu0 0
        %2029 = vmatprep.subr.bf16.mxu0 0
        %2030 = vmatpush1.bf16.msra.mxu0 0
        %2031 = vmatprep.subr.bf16.mxu0 0
        %2032 = vmatpush1.bf16.msra.mxu0 0
        %2033 = vmatprep.subr.bf16.mxu0 0
        %2034 = vmatpush1.bf16.msra.mxu0 0
        %2035 = vmatprep.mubr.bf16.mxu0 0
        %2036 = vmatmul.mubr.bf16.gmra.mrb[0].mxu0 %v441
        %v2037 = vpop.f32.mrb[0].mxu0
        %v2038 = vadd.f32 0.0, %v2037
        %v2039 = vpop.f32.mrb[0].mxu0
        %v2040 = vpop.f32.mrb[0].mxu0
        %v2041 = vadd.f32 0.0, %v2040
        %v2042 = vpop.f32.mrb[0].mxu0
        %2043 = vmatprep.mubr.bf16.mxu0 0
        %2044 = vmatmul.mubr.bf16.gmra.mrb[0].mxu0 %v444
        %v2045 = vpop.f32.mrb[0].mxu0
        %v2046 = vadd.f32 0.0, %v2045
        %v2047 = vpop.f32.mrb[0].mxu0
        %v2048 = vpop.f32.mrb[0].mxu0
        %v2049 = vadd.f32 0.0, %v2048
        %v2050 = vpop.f32.mrb[0].mxu0
        %2051 = vmatprep.mubr.bf16.mxu0 0
        %2052 = vmatmul.mubr.bf16.gmra.mrb[0].mxu0 %v447
        %v2053 = vpop.f32.mrb[0].mxu0
        %v2054 = vadd.f32 0.0, %v2053
        %v2055 = vpop.f32.mrb[0].mxu0
        %v2056 = vpop.f32.mrb[0].mxu0
        %v2057 = vadd.f32 0.0, %v2056
        %v2058 = vpop.f32.mrb[0].mxu0
        %2059 = vmatprep.mubr.bf16.mxu0 0
        %2060 = vmatmul.mubr.bf16.gmra.mrb[0].mxu0 %v450
        %v2061 = vpop.f32.mrb[0].mxu0
        %v2062 = vadd.f32 0.0, %v2061
        %v2063 = vpop.f32.mrb[0].mxu0
        %v2064 = vpop.f32.mrb[0].mxu0
        %v2065 = vadd.f32 0.0, %v2064
        %v2066 = vpop.f32.mrb[0].mxu0
        %2067 = vmatprep.mubr.bf16.mxu0 0
        %2068 = vmatmul.mubr.bf16.gmra.mrb[0].mxu0 %v453
        %v2069 = vpop.f32.mrb[0].mxu0
        %v2070 = vadd.f32 0.0, %v2069
        %v2071 = vpop.f32.mrb[0].mxu0
        %v2072 = vpop.f32.mrb[0].mxu0
        %v2073 = vadd.f32 0.0, %v2072
        %v2074 = vpop.f32.mrb[0].mxu0
        %2075 = vmatprep.mubr.bf16.mxu0 0
        %2076 = vmatmul.mubr.bf16.gmra.mrb[0].mxu0 %v456
        %v2077 = vpop.f32.mrb[0].mxu0
        %v2078 = vadd.f32 0.0, %v2077
        %v2079 = vpop.f32.mrb[0].mxu0
        %v2080 = vpop.f32.mrb[0].mxu0
        %v2081 = vadd.f32 0.0, %v2080
        %v2082 = vpop.f32.mrb[0].mxu0
        %2083 = vmatprep.mubr.bf16.mxu0 0
        %2084 = vmatmul.mubr.bf16.gmra.mrb[0].mxu0 %v459
        %v2085 = vpop.f32.mrb[0].mxu0
        %v2086 = vadd.f32 0.0, %v2085
        %v2087 = vpop.f32.mrb[0].mxu0
        %v2088 = vpop.f32.mrb[0].mxu0
        %v2089 = vadd.f32 0.0, %v2088
        %v2090 = vpop.f32.mrb[0].mxu0
        %2091 = vmatprep.mubr.bf16.mxu0 0
        %2092 = vmatmul.mubr.bf16.gmra.mrb[0].mxu0 %v462
        %v2093 = vpop.f32.mrb[0].mxu0
        %v2094 = vadd.f32 0.0, %v2093
        %v2095 = vpop.f32.mrb[0].mxu0
        %v2096 = vpop.f32.mrb[0].mxu0
        %v2097 = vadd.f32 0.0, %v2096
        %v2098 = vpop.f32.mrb[0].mxu0
        %2099 = vmatprep.mubr.bf16.mxu0 0
        %2100 = vmatmul.mubr.bf16.gmra.mrb[0].mxu0 %v465
        %v2101 = vpop.f32.mrb[0].mxu0
        %v2102 = vadd.f32 0.0, %v2101
        %v2103 = vpop.f32.mrb[0].mxu0
        %v2104 = vpop.f32.mrb[0].mxu0
        %v2105 = vadd.f32 0.0, %v2104
        %v2106 = vpop.f32.mrb[0].mxu0
        %2107 = vmatprep.mubr.bf16.mxu0 0
        %2108 = vmatmul.mubr.bf16.gmra.mrb[0].mxu0 %v468
        %v2109 = vpop.f32.mrb[0].mxu0
        %v2110 = vadd.f32 0.0, %v2109
        %v2111 = vpop.f32.mrb[0].mxu0
        %v2112 = vpop.f32.mrb[0].mxu0
        %v2113 = vadd.f32 0.0, %v2112
        %v2114 = vpop.f32.mrb[0].mxu0
        %2115 = vmatprep.mubr.bf16.mxu0 0
        %2116 = vmatmul.mubr.bf16.gmra.mrb[0].mxu0 %v471
        %v2117 = vpop.f32.mrb[0].mxu0
        %v2118 = vadd.f32 0.0, %v2117
        %v2119 = vpop.f32.mrb[0].mxu0
        %v2120 = vpop.f32.mrb[0].mxu0
        %v2121 = vadd.f32 0.0, %v2120
        %v2122 = vpop.f32.mrb[0].mxu0
        %2123 = vmatprep.mubr.bf16.mxu0 0
        %2124 = vmatmul.mubr.bf16.gmra.mrb[0].mxu0 %v474
        %v2125 = vpop.f32.mrb[0].mxu0
        %v2126 = vadd.f32 0.0, %v2125
        %v2127 = vpop.f32.mrb[0].mxu0
        %v2128 = vpop.f32.mrb[0].mxu0
        %v2129 = vadd.f32 0.0, %v2128
        %v2130 = vpop.f32.mrb[0].mxu0
        %2131 = vmatprep.mubr.bf16.mxu0 0
        %2132 = vmatmul.mubr.bf16.gmra.mrb[0].mxu0 %v477
        %v2133 = vpop.f32.mrb[0].mxu0
        %v2134 = vadd.f32 0.0, %v2133
        %v2135 = vpop.f32.mrb[0].mxu0
        %v2136 = vpop.f32.mrb[0].mxu0
        %v2137 = vadd.f32 0.0, %v2136
        %v2138 = vpop.f32.mrb[0].mxu0
        %2139 = vmatprep.mubr.bf16.mxu0 0
        %2140 = vmatmul.mubr.bf16.gmra.mrb[0].mxu0 %v480
        %v2141 = vpop.f32.mrb[0].mxu0
        %v2142 = vadd.f32 0.0, %v2141
        %v2143 = vpop.f32.mrb[0].mxu0
        %v2144 = vpop.f32.mrb[0].mxu0
        %v2145 = vadd.f32 0.0, %v2144
        %v2146 = vpop.f32.mrb[0].mxu0
        %2147 = vmatprep.mubr.bf16.mxu0 0
        %2148 = vmatmul.mubr.bf16.gmra.mrb[0].mxu0 %v483
        %v2149 = vpop.f32.mrb[0].mxu0
        %v2150 = vadd.f32 0.0, %v2149
        %v2151 = vpop.f32.mrb[0].mxu0
        %v2152 = vpop.f32.mrb[0].mxu0
        %v2153 = vadd.f32 0.0, %v2152
        %v2154 = vpop.f32.mrb[0].mxu0
        %2155 = vmatprep.mubr.bf16.mxu0 0
        %2156 = vmatmul.mubr.bf16.gmra.mrb[0].mxu0 %v486
        %v2157 = vpop.f32.mrb[0].mxu0
        %v2158 = vadd.f32 0.0, %v2157
        %v2159 = vpop.f32.mrb[0].mxu0
        %v2160 = vpop.f32.mrb[0].mxu0
        %v2161 = vadd.f32 0.0, %v2160
        %v2162 = vpop.f32.mrb[0].mxu0
        %2163 = vdwg.mxu0
        %v2165 = vsel %vm488, %v1997, 0
        %2167 = vmatprep.subr.bf16.mxu0 0
        %2168 = vmatpush1.bf16.msra.mxu0 %v2165
        %2169 = vmatprep.subr.bf16.mxu0 0
        %2170 = vmatpush1.bf16.msra.mxu0 0
        %2171 = vmatprep.subr.bf16.mxu0 0
        %2172 = vmatpush1.bf16.msra.mxu0 0
        %2173 = vmatprep.subr.bf16.mxu0 0
        %2174 = vmatpush1.bf16.msra.mxu0 0
        %2175 = vmatprep.subr.bf16.mxu0 0
        %2176 = vmatpush1.bf16.msra.mxu0 0
        %2177 = vmatprep.subr.bf16.mxu0 0
        %2178 = vmatpush1.bf16.msra.mxu0 0
        %2179 = vmatprep.subr.bf16.mxu0 0
        %2180 = vmatpush1.bf16.msra.mxu0 0
        %2181 = vmatprep.subr.bf16.mxu0 0
        %2182 = vmatpush1.bf16.msra.mxu0 0
        %2183 = vmatprep.subr.bf16.mxu0 0
        %2184 = vmatpush1.bf16.msra.mxu0 0
        %2185 = vmatprep.subr.bf16.mxu0 0
        %2186 = vmatpush1.bf16.msra.mxu0 0
        %2187 = vmatprep.subr.bf16.mxu0 0
        %2188 = vmatpush1.bf16.msra.mxu0 0
        %2189 = vmatprep.subr.bf16.mxu0 0
        %2190 = vmatpush1.bf16.msra.mxu0 0
        %2191 = vmatprep.subr.bf16.mxu0 0
        %2192 = vmatpush1.bf16.msra.mxu0 0
        %2193 = vmatprep.subr.bf16.mxu0 0
        %2194 = vmatpush1.bf16.msra.mxu0 0
        %2195 = vmatprep.subr.bf16.mxu0 0
        %2196 = vmatpush1.bf16.msra.mxu0 0
        %2197 = vmatprep.subr.bf16.mxu0 0
        %2198 = vmatpush1.bf16.msra.mxu0 0
        %2199 = vmatprep.mubr.bf16.mxu0 0
        %2200 = vmatmul.mubr.bf16.gmra.mrb[0].mxu0 %v734
        %v2201 = vpop.f32.mrb[0].mxu0
        %v2202 = vadd.f32 %v2038, %v2201
        %v2203 = vpop.f32.mrb[0].mxu0
        %v2204 = vpop.f32.mrb[0].mxu0
        %v2205 = vadd.f32 %v2041, %v2204
        %v2206 = vpop.f32.mrb[0].mxu0
        %2207 = vmatprep.mubr.bf16.mxu0 0
        %2208 = vmatmul.mubr.bf16.gmra.mrb[0].mxu0 %v737
        %v2209 = vpop.f32.mrb[0].mxu0
        %v2210 = vadd.f32 %v2046, %v2209
        %v2211 = vpop.f32.mrb[0].mxu0
        %v2212 = vpop.f32.mrb[0].mxu0
        %v2213 = vadd.f32 %v2049, %v2212
        %v2214 = vpop.f32.mrb[0].mxu0
        %2215 = vmatprep.mubr.bf16.mxu0 0
        %2216 = vmatmul.mubr.bf16.gmra.mrb[0].mxu0 %v740
        %v2217 = vpop.f32.mrb[0].mxu0
        %v2218 = vadd.f32 %v2054, %v2217
        %v2219 = vpop.f32.mrb[0].mxu0
        %v2220 = vpop.f32.mrb[0].mxu0
        %v2221 = vadd.f32 %v2057, %v2220
        %v2222 = vpop.f32.mrb[0].mxu0
        %2223 = vmatprep.mubr.bf16.mxu0 0
        %2224 = vmatmul.mubr.bf16.gmra.mrb[0].mxu0 %v743
        %v2225 = vpop.f32.mrb[0].mxu0
        %v2226 = vadd.f32 %v2062, %v2225
        %v2227 = vpop.f32.mrb[0].mxu0
        %v2228 = vpop.f32.mrb[0].mxu0
        %v2229 = vadd.f32 %v2065, %v2228
        %v2230 = vpop.f32.mrb[0].mxu0
        %2231 = vmatprep.mubr.bf16.mxu0 0
        %2232 = vmatmul.mubr.bf16.gmra.mrb[0].mxu0 %v746
        %v2233 = vpop.f32.mrb[0].mxu0
        %v2234 = vadd.f32 %v2070, %v2233
        %v2235 = vpop.f32.mrb[0].mxu0
        %v2236 = vpop.f32.mrb[0].mxu0
        %v2237 = vadd.f32 %v2073, %v2236
        %v2238 = vpop.f32.mrb[0].mxu0
        %2239 = vmatprep.mubr.bf16.mxu0 0
        %2240 = vmatmul.mubr.bf16.gmra.mrb[0].mxu0 %v749
        %v2241 = vpop.f32.mrb[0].mxu0
        %v2242 = vadd.f32 %v2078, %v2241
        %v2243 = vpop.f32.mrb[0].mxu0
        %v2244 = vpop.f32.mrb[0].mxu0
        %v2245 = vadd.f32 %v2081, %v2244
        %v2246 = vpop.f32.mrb[0].mxu0
        %2247 = vmatprep.mubr.bf16.mxu0 0
        %2248 = vmatmul.mubr.bf16.gmra.mrb[0].mxu0 %v752
        %v2249 = vpop.f32.mrb[0].mxu0
        %v2250 = vadd.f32 %v2086, %v2249
        %v2251 = vpop.f32.mrb[0].mxu0
        %v2252 = vpop.f32.mrb[0].mxu0
        %v2253 = vadd.f32 %v2089, %v2252
        %v2254 = vpop.f32.mrb[0].mxu0
        %2255 = vmatprep.mubr.bf16.mxu0 0
        %2256 = vmatmul.mubr.bf16.gmra.mrb[0].mxu0 %v755
        %v2257 = vpop.f32.mrb[0].mxu0
        %v2258 = vadd.f32 %v2094, %v2257
        %v2259 = vpop.f32.mrb[0].mxu0
        %v2260 = vpop.f32.mrb[0].mxu0
        %v2261 = vadd.f32 %v2097, %v2260
        %v2262 = vpop.f32.mrb[0].mxu0
        %2263 = vmatprep.mubr.bf16.mxu0 0
        %2264 = vmatmul.mubr.bf16.gmra.mrb[0].mxu0 %v758
        %v2265 = vpop.f32.mrb[0].mxu0
        %v2266 = vadd.f32 %v2102, %v2265
        %v2267 = vpop.f32.mrb[0].mxu0
        %v2268 = vpop.f32.mrb[0].mxu0
        %v2269 = vadd.f32 %v2105, %v2268
        %v2270 = vpop.f32.mrb[0].mxu0
        %2271 = vmatprep.mubr.bf16.mxu0 0
        %2272 = vmatmul.mubr.bf16.gmra.mrb[0].mxu0 %v761
        %v2273 = vpop.f32.mrb[0].mxu0
        %v2274 = vadd.f32 %v2110, %v2273
        %v2275 = vpop.f32.mrb[0].mxu0
        %v2276 = vpop.f32.mrb[0].mxu0
        %v2277 = vadd.f32 %v2113, %v2276
        %v2278 = vpop.f32.mrb[0].mxu0
        %2279 = vmatprep.mubr.bf16.mxu0 0
        %2280 = vmatmul.mubr.bf16.gmra.mrb[0].mxu0 %v764
        %v2281 = vpop.f32.mrb[0].mxu0
        %v2282 = vadd.f32 %v2118, %v2281
        %v2283 = vpop.f32.mrb[0].mxu0
        %v2284 = vpop.f32.mrb[0].mxu0
        %v2285 = vadd.f32 %v2121, %v2284
        %v2286 = vpop.f32.mrb[0].mxu0
        %2287 = vmatprep.mubr.bf16.mxu0 0
        %2288 = vmatmul.mubr.bf16.gmra.mrb[0].mxu0 %v767
        %v2289 = vpop.f32.mrb[0].mxu0
        %v2290 = vadd.f32 %v2126, %v2289
        %v2291 = vpop.f32.mrb[0].mxu0
        %v2292 = vpop.f32.mrb[0].mxu0
        %v2293 = vadd.f32 %v2129, %v2292
        %v2294 = vpop.f32.mrb[0].mxu0
        %2295 = vmatprep.mubr.bf16.mxu0 0
        %2296 = vmatmul.mubr.bf16.gmra.mrb[0].mxu0 %v770
        %v2297 = vpop.f32.mrb[0].mxu0
        %v2298 = vadd.f32 %v2134, %v2297
        %v2299 = vpop.f32.mrb[0].mxu0
        %v2300 = vpop.f32.mrb[0].mxu0
        %v2301 = vadd.f32 %v2137, %v2300
        %v2302 = vpop.f32.mrb[0].mxu0
        %2303 = vmatprep.mubr.bf16.mxu0 0
        %2304 = vmatmul.mubr.bf16.gmra.mrb[0].mxu0 %v773
        %v2305 = vpop.f32.mrb[0].mxu0
        %v2306 = vadd.f32 %v2142, %v2305
        %v2307 = vpop.f32.mrb[0].mxu0
        %v2308 = vpop.f32.mrb[0].mxu0
        %v2309 = vadd.f32 %v2145, %v2308
        %v2310 = vpop.f32.mrb[0].mxu0
        %2311 = vmatprep.mubr.bf16.mxu0 0
        %2312 = vmatmul.mubr.bf16.gmra.mrb[0].mxu0 %v776
        %v2313 = vpop.f32.mrb[0].mxu0
        %v2314 = vadd.f32 %v2150, %v2313
        %v2315 = vpop.f32.mrb[0].mxu0
        %v2316 = vpop.f32.mrb[0].mxu0
        %v2317 = vadd.f32 %v2153, %v2316
        %v2318 = vpop.f32.mrb[0].mxu0
        %2319 = vmatprep.mubr.bf16.mxu0 0
        %2320 = vmatmul.mubr.bf16.gmra.mrb[0].mxu0 %v779
        %v2321 = vpop.f32.mrb[0].mxu0
        %v2322 = vadd.f32 %v2158, %v2321
        %v2323 = vpop.f32.mrb[0].mxu0
        %v2324 = vpop.f32.mrb[0].mxu0
        %v2325 = vadd.f32 %v2161, %v2324
        %v2326 = vpop.f32.mrb[0].mxu0
        %2327 = vdwg.mxu0
        %s2328 = scalar_lea.vmem %s248, 32
        %v2329 = vld [vmem:[%s2328] sm:$0xf]
        %v2331 = vsel %vm488, %v2329, 0
        %2333 = vmatprep.subr.bf16.mxu0 0
        %2334 = vmatpush1.bf16.msra.mxu0 %v2331
        %2335 = vmatprep.subr.bf16.mxu0 0
        %2336 = vmatpush1.bf16.msra.mxu0 0
        %2337 = vmatprep.subr.bf16.mxu0 0
        %2338 = vmatpush1.bf16.msra.mxu0 0
        %2339 = vmatprep.subr.bf16.mxu0 0
        %2340 = vmatpush1.bf16.msra.mxu0 0
        %2341 = vmatprep.subr.bf16.mxu0 0
        %2342 = vmatpush1.bf16.msra.mxu0 0
        %2343 = vmatprep.subr.bf16.mxu0 0
        %2344 = vmatpush1.bf16.msra.mxu0 0
        %2345 = vmatprep.subr.bf16.mxu0 0
        %2346 = vmatpush1.bf16.msra.mxu0 0
        %2347 = vmatprep.subr.bf16.mxu0 0
        %2348 = vmatpush1.bf16.msra.mxu0 0
        %2349 = vmatprep.subr.bf16.mxu0 0
        %2350 = vmatpush1.bf16.msra.mxu0 0
        %2351 = vmatprep.subr.bf16.mxu0 0
        %2352 = vmatpush1.bf16.msra.mxu0 0
        %2353 = vmatprep.subr.bf16.mxu0 0
        %2354 = vmatpush1.bf16.msra.mxu0 0
        %2355 = vmatprep.subr.bf16.mxu0 0
        %2356 = vmatpush1.bf16.msra.mxu0 0
        %2357 = vmatprep.subr.bf16.mxu0 0
        %2358 = vmatpush1.bf16.msra.mxu0 0
        %2359 = vmatprep.subr.bf16.mxu0 0
        %2360 = vmatpush1.bf16.msra.mxu0 0
        %2361 = vmatprep.subr.bf16.mxu0 0
        %2362 = vmatpush1.bf16.msra.mxu0 0
        %2363 = vmatprep.subr.bf16.mxu0 0
        %2364 = vmatpush1.bf16.msra.mxu0 0
        %2365 = vmatprep.mubr.bf16.mxu0 0
        %2366 = vmatmul.mubr.bf16.gmra.mrb[0].mxu0 %v1061
        %v2367 = vpop.f32.mrb[0].mxu0
        %v2368 = vadd.f32 0.0, %v2367
        %v2369 = vpop.f32.mrb[0].mxu0
        %v2370 = vpop.f32.mrb[0].mxu0
        %v2371 = vadd.f32 0.0, %v2370
        %v2372 = vpop.f32.mrb[0].mxu0
        %2373 = vmatprep.mubr.bf16.mxu0 0
        %2374 = vmatmul.mubr.bf16.gmra.mrb[0].mxu0 %v1064
        %v2375 = vpop.f32.mrb[0].mxu0
        %v2376 = vadd.f32 0.0, %v2375
        %v2377 = vpop.f32.mrb[0].mxu0
        %v2378 = vpop.f32.mrb[0].mxu0
        %v2379 = vadd.f32 0.0, %v2378
        %v2380 = vpop.f32.mrb[0].mxu0
        %2381 = vmatprep.mubr.bf16.mxu0 0
        %2382 = vmatmul.mubr.bf16.gmra.mrb[0].mxu0 %v1067
        %v2383 = vpop.f32.mrb[0].mxu0
        %v2384 = vadd.f32 0.0, %v2383
        %v2385 = vpop.f32.mrb[0].mxu0
        %v2386 = vpop.f32.mrb[0].mxu0
        %v2387 = vadd.f32 0.0, %v2386
        %v2388 = vpop.f32.mrb[0].mxu0
        %2389 = vmatprep.mubr.bf16.mxu0 0
        %2390 = vmatmul.mubr.bf16.gmra.mrb[0].mxu0 %v1070
        %v2391 = vpop.f32.mrb[0].mxu0
        %v2392 = vadd.f32 0.0, %v2391
        %v2393 = vpop.f32.mrb[0].mxu0
        %v2394 = vpop.f32.mrb[0].mxu0
        %v2395 = vadd.f32 0.0, %v2394
        %v2396 = vpop.f32.mrb[0].mxu0
        %2397 = vmatprep.mubr.bf16.mxu0 0
        %2398 = vmatmul.mubr.bf16.gmra.mrb[0].mxu0 %v1073
        %v2399 = vpop.f32.mrb[0].mxu0
        %v2400 = vadd.f32 0.0, %v2399
        %v2401 = vpop.f32.mrb[0].mxu0
        %v2402 = vpop.f32.mrb[0].mxu0
        %v2403 = vadd.f32 0.0, %v2402
        %v2404 = vpop.f32.mrb[0].mxu0
        %2405 = vmatprep.mubr.bf16.mxu0 0
        %2406 = vmatmul.mubr.bf16.gmra.mrb[0].mxu0 %v1076
        %v2407 = vpop.f32.mrb[0].mxu0
        %v2408 = vadd.f32 0.0, %v2407
        %v2409 = vpop.f32.mrb[0].mxu0
        %v2410 = vpop.f32.mrb[0].mxu0
        %v2411 = vadd.f32 0.0, %v2410
        %v2412 = vpop.f32.mrb[0].mxu0
        %2413 = vmatprep.mubr.bf16.mxu0 0
        %2414 = vmatmul.mubr.bf16.gmra.mrb[0].mxu0 %v1079
        %v2415 = vpop.f32.mrb[0].mxu0
        %v2416 = vadd.f32 0.0, %v2415
        %v2417 = vpop.f32.mrb[0].mxu0
        %v2418 = vpop.f32.mrb[0].mxu0
        %v2419 = vadd.f32 0.0, %v2418
        %v2420 = vpop.f32.mrb[0].mxu0
        %2421 = vmatprep.mubr.bf16.mxu0 0
        %2422 = vmatmul.mubr.bf16.gmra.mrb[0].mxu0 %v1082
        %v2423 = vpop.f32.mrb[0].mxu0
        %v2424 = vadd.f32 0.0, %v2423
        %v2425 = vpop.f32.mrb[0].mxu0
        %v2426 = vpop.f32.mrb[0].mxu0
        %v2427 = vadd.f32 0.0, %v2426
        %v2428 = vpop.f32.mrb[0].mxu0
        %2429 = vmatprep.mubr.bf16.mxu0 0
        %2430 = vmatmul.mubr.bf16.gmra.mrb[0].mxu0 %v1085
        %v2431 = vpop.f32.mrb[0].mxu0
        %v2432 = vadd.f32 0.0, %v2431
        %v2433 = vpop.f32.mrb[0].mxu0
        %v2434 = vpop.f32.mrb[0].mxu0
        %v2435 = vadd.f32 0.0, %v2434
        %v2436 = vpop.f32.mrb[0].mxu0
        %2437 = vmatprep.mubr.bf16.mxu0 0
        %2438 = vmatmul.mubr.bf16.gmra.mrb[0].mxu0 %v1088
        %v2439 = vpop.f32.mrb[0].mxu0
        %v2440 = vadd.f32 0.0, %v2439
        %v2441 = vpop.f32.mrb[0].mxu0
        %v2442 = vpop.f32.mrb[0].mxu0
        %v2443 = vadd.f32 0.0, %v2442
        %v2444 = vpop.f32.mrb[0].mxu0
        %2445 = vmatprep.mubr.bf16.mxu0 0
        %2446 = vmatmul.mubr.bf16.gmra.mrb[0].mxu0 %v1091
        %v2447 = vpop.f32.mrb[0].mxu0
        %v2448 = vadd.f32 0.0, %v2447
        %v2449 = vpop.f32.mrb[0].mxu0
        %v2450 = vpop.f32.mrb[0].mxu0
        %v2451 = vadd.f32 0.0, %v2450
        %v2452 = vpop.f32.mrb[0].mxu0
        %2453 = vmatprep.mubr.bf16.mxu0 0
        %2454 = vmatmul.mubr.bf16.gmra.mrb[0].mxu0 %v1094
        %v2455 = vpop.f32.mrb[0].mxu0
        %v2456 = vadd.f32 0.0, %v2455
        %v2457 = vpop.f32.mrb[0].mxu0
        %v2458 = vpop.f32.mrb[0].mxu0
        %v2459 = vadd.f32 0.0, %v2458
        %v2460 = vpop.f32.mrb[0].mxu0
        %2461 = vmatprep.mubr.bf16.mxu0 0
        %2462 = vmatmul.mubr.bf16.gmra.mrb[0].mxu0 %v1097
        %v2463 = vpop.f32.mrb[0].mxu0
        %v2464 = vadd.f32 0.0, %v2463
        %v2465 = vpop.f32.mrb[0].mxu0
        %v2466 = vpop.f32.mrb[0].mxu0
        %v2467 = vadd.f32 0.0, %v2466
        %v2468 = vpop.f32.mrb[0].mxu0
        %2469 = vmatprep.mubr.bf16.mxu0 0
        %2470 = vmatmul.mubr.bf16.gmra.mrb[0].mxu0 %v1100
        %v2471 = vpop.f32.mrb[0].mxu0
        %v2472 = vadd.f32 0.0, %v2471
        %v2473 = vpop.f32.mrb[0].mxu0
        %v2474 = vpop.f32.mrb[0].mxu0
        %v2475 = vadd.f32 0.0, %v2474
        %v2476 = vpop.f32.mrb[0].mxu0
        %2477 = vmatprep.mubr.bf16.mxu0 0
        %2478 = vmatmul.mubr.bf16.gmra.mrb[0].mxu0 %v1103
        %v2479 = vpop.f32.mrb[0].mxu0
        %v2480 = vadd.f32 0.0, %v2479
        %v2481 = vpop.f32.mrb[0].mxu0
        %v2482 = vpop.f32.mrb[0].mxu0
        %v2483 = vadd.f32 0.0, %v2482
        %v2484 = vpop.f32.mrb[0].mxu0
        %2485 = vmatprep.mubr.bf16.mxu0 0
        %2486 = vmatmul.mubr.bf16.gmra.mrb[0].mxu0 %v1106
        %v2487 = vpop.f32.mrb[0].mxu0
        %v2488 = vadd.f32 0.0, %v2487
        %v2489 = vpop.f32.mrb[0].mxu0
        %v2490 = vpop.f32.mrb[0].mxu0
        %v2491 = vadd.f32 0.0, %v2490
        %v2492 = vpop.f32.mrb[0].mxu0
        %2493 = vdwg.mxu0
        %v2494 = vadd.f32 %v2202, %v2368
        %v2495 = vadd.f32 %v2205, %v2371
        %v2496 = vadd.f32 %v2210, %v2376
        %v2497 = vadd.f32 %v2213, %v2379
        %v2498 = vadd.f32 %v2218, %v2384
        %v2499 = vadd.f32 %v2221, %v2387
        %v2500 = vadd.f32 %v2226, %v2392
        %v2501 = vadd.f32 %v2229, %v2395
        %v2502 = vadd.f32 %v2234, %v2400
        %v2503 = vadd.f32 %v2237, %v2403
        %v2504 = vadd.f32 %v2242, %v2408
        %v2505 = vadd.f32 %v2245, %v2411
        %v2506 = vadd.f32 %v2250, %v2416
        %v2507 = vadd.f32 %v2253, %v2419
        %v2508 = vadd.f32 %v2258, %v2424
        %v2509 = vadd.f32 %v2261, %v2427
        %v2510 = vadd.f32 %v2266, %v2432
        %v2511 = vadd.f32 %v2269, %v2435
        %v2512 = vadd.f32 %v2274, %v2440
        %v2513 = vadd.f32 %v2277, %v2443
        %v2514 = vadd.f32 %v2282, %v2448
        %v2515 = vadd.f32 %v2285, %v2451
        %v2516 = vadd.f32 %v2290, %v2456
        %v2517 = vadd.f32 %v2293, %v2459
        %v2518 = vadd.f32 %v2298, %v2464
        %v2519 = vadd.f32 %v2301, %v2467
        %v2520 = vadd.f32 %v2306, %v2472
        %v2521 = vadd.f32 %v2309, %v2475
        %v2522 = vadd.f32 %v2314, %v2480
        %v2523 = vadd.f32 %v2317, %v2483
        %v2524 = vadd.f32 %v2322, %v2488
        %v2525 = vadd.f32 %v2325, %v2491
        %vm2558 = vcmask 1045504
        %v2559 = vrot.slane %v2494, 2
        %v2560 = vrot.slane %v2495, 2
        %v2561 = vsel %vm2558, %v2559, %v2560
        %v2562 = vrot.slane %v2496, 2
        %v2563 = vsel %vm2558, %v2560, %v2562
        %v2564 = vrot.slane %v2497, 2
        %v2565 = vsel %vm2558, %v2562, %v2564
        %v2566 = vrot.slane %v2498, 2
        %v2567 = vsel %vm2558, %v2564, %v2566
        %v2568 = vrot.slane %v2499, 2
        %v2569 = vsel %vm2558, %v2566, %v2568
        %v2570 = vrot.slane %v2500, 2
        %v2571 = vsel %vm2558, %v2568, %v2570
        %v2572 = vrot.slane %v2501, 2
        %v2573 = vsel %vm2558, %v2570, %v2572
        %v2574 = vrot.slane %v2502, 2
        %v2575 = vsel %vm2558, %v2572, %v2574
        %v2576 = vrot.slane %v2503, 2
        %v2577 = vsel %vm2558, %v2574, %v2576
        %v2578 = vrot.slane %v2504, 2
        %v2579 = vsel %vm2558, %v2576, %v2578
        %v2580 = vrot.slane %v2505, 2
        %v2581 = vsel %vm2558, %v2578, %v2580
        %v2582 = vrot.slane %v2506, 2
        %v2583 = vsel %vm2558, %v2580, %v2582
        %v2584 = vrot.slane %v2507, 2
        %v2585 = vsel %vm2558, %v2582, %v2584
        %v2586 = vrot.slane %v2508, 2
        %v2587 = vsel %vm2558, %v2584, %v2586
        %v2588 = vrot.slane %v2509, 2
        %v2589 = vsel %vm2558, %v2586, %v2588
        %v2590 = vrot.slane %v2510, 2
        %v2591 = vsel %vm2558, %v2588, %v2590
        %v2592 = vrot.slane %v2511, 2
        %v2593 = vsel %vm2558, %v2590, %v2592
        %v2594 = vrot.slane %v2512, 2
        %v2595 = vsel %vm2558, %v2592, %v2594
        %v2596 = vrot.slane %v2513, 2
        %v2597 = vsel %vm2558, %v2594, %v2596
        %v2598 = vrot.slane %v2514, 2
        %v2599 = vsel %vm2558, %v2596, %v2598
        %v2600 = vrot.slane %v2515, 2
        %v2601 = vsel %vm2558, %v2598, %v2600
        %v2602 = vrot.slane %v2516, 2
        %v2603 = vsel %vm2558, %v2600, %v2602
        %v2604 = vrot.slane %v2517, 2
        %v2605 = vsel %vm2558, %v2602, %v2604
        %v2606 = vrot.slane %v2518, 2
        %v2607 = vsel %vm2558, %v2604, %v2606
        %v2608 = vrot.slane %v2519, 2
        %v2609 = vsel %vm2558, %v2606, %v2608
        %v2610 = vrot.slane %v2520, 2
        %v2611 = vsel %vm2558, %v2608, %v2610
        %v2612 = vrot.slane %v2521, 2
        %v2613 = vsel %vm2558, %v2610, %v2612
        %v2614 = vrot.slane %v2522, 2
        %v2615 = vsel %vm2558, %v2612, %v2614
        %v2616 = vrot.slane %v2523, 2
        %v2617 = vsel %vm2558, %v2614, %v2616
        %v2618 = vrot.slane %v2524, 2
        %v2619 = vsel %vm2558, %v2616, %v2618
        %v2620 = vrot.slane %v2525, 2
        %v2621 = vsel %vm2558, %v2618, %v2620
        %v2655 = vsel %vm2558, %v2620, %v2559
        %v2656 = vadd.f32 %v1964, %v2561
        %v2657 = vadd.f32 %v1965, %v2563
        %v2658 = vadd.f32 %v1966, %v2565
        %v2659 = vadd.f32 %v1967, %v2567
        %v2660 = vadd.f32 %v1968, %v2569
        %v2661 = vadd.f32 %v1969, %v2571
        %v2662 = vadd.f32 %v1970, %v2573
        %v2663 = vadd.f32 %v1971, %v2575
        %v2664 = vadd.f32 %v1972, %v2577
        %v2665 = vadd.f32 %v1973, %v2579
        %v2666 = vadd.f32 %v1974, %v2581
        %v2667 = vadd.f32 %v1975, %v2583
        %v2668 = vadd.f32 %v1976, %v2585
        %v2669 = vadd.f32 %v1977, %v2587
        %v2670 = vadd.f32 %v1978, %v2589
        %v2671 = vadd.f32 %v1979, %v2591
        %v2672 = vadd.f32 %v1980, %v2593
        %v2673 = vadd.f32 %v1981, %v2595
        %v2674 = vadd.f32 %v1982, %v2597
        %v2675 = vadd.f32 %v1983, %v2599
        %v2676 = vadd.f32 %v1984, %v2601
        %v2677 = vadd.f32 %v1985, %v2603
        %v2678 = vadd.f32 %v1986, %v2605
        %v2679 = vadd.f32 %v1987, %v2607
        %v2680 = vadd.f32 %v1988, %v2609
        %v2681 = vadd.f32 %v1989, %v2611
        %v2682 = vadd.f32 %v1990, %v2613
        %v2683 = vadd.f32 %v1991, %v2615
        %v2684 = vadd.f32 %v1992, %v2617
        %v2685 = vadd.f32 %v1993, %v2619
        %v2686 = vadd.f32 %v1994, %v2621
        %v2687 = vadd.f32 %v1995, %v2655
        %v2688 = vld [vmem:[#allocation2] sm:$0xff]
        %v2689 = vld [vmem:[#allocation2 + $0x8] sm:$0xff]
        %v2690 = vld [vmem:[#allocation2 + $0x10] sm:$0xff]
        %v2691 = vld [vmem:[#allocation2 + $0x18] sm:$0xff]
        %v2692 = vld [vmem:[#allocation2 + $0x20] sm:$0xff]
        %v2693 = vld [vmem:[#allocation2 + $0x28] sm:$0xff]
        %v2694 = vld [vmem:[#allocation2 + $0x30] sm:$0xff]
        %v2695 = vld [vmem:[#allocation2 + $0x38] sm:$0xff]
        %v2696 = vld [vmem:[#allocation2 + $0x40] sm:$0xff]
        %v2697 = vld [vmem:[#allocation2 + $0x48] sm:$0xff]
        %v2698 = vld [vmem:[#allocation2 + $0x50] sm:$0xff]
        %v2699 = vld [vmem:[#allocation2 + $0x58] sm:$0xff]
        %v2700 = vld [vmem:[#allocation2 + $0x60] sm:$0xff]
        %v2701 = vld [vmem:[#allocation2 + $0x68] sm:$0xff]
        %v2702 = vld [vmem:[#allocation2 + $0x70] sm:$0xff]
        %v2703 = vld [vmem:[#allocation2 + $0x78] sm:$0xff]
        %v2704 = vld [vmem:[#allocation2 + $0x80] sm:$0xff]
        %v2705 = vld [vmem:[#allocation2 + $0x88] sm:$0xff]
        %v2706 = vld [vmem:[#allocation2 + $0x90] sm:$0xff]
        %v2707 = vld [vmem:[#allocation2 + $0x98] sm:$0xff]
        %v2708 = vld [vmem:[#allocation2 + $0xa0] sm:$0xff]
        %v2709 = vld [vmem:[#allocation2 + $0xa8] sm:$0xff]
        %v2710 = vld [vmem:[#allocation2 + $0xb0] sm:$0xff]
        %v2711 = vld [vmem:[#allocation2 + $0xb8] sm:$0xff]
        %v2712 = vld [vmem:[#allocation2 + $0xc0] sm:$0xff]
        %v2713 = vld [vmem:[#allocation2 + $0xc8] sm:$0xff]
        %v2714 = vld [vmem:[#allocation2 + $0xd0] sm:$0xff]
        %v2715 = vld [vmem:[#allocation2 + $0xd8] sm:$0xff]
        %v2716 = vld [vmem:[#allocation2 + $0xe0] sm:$0xff]
        %v2717 = vld [vmem:[#allocation2 + $0xe8] sm:$0xff]
        %v2718 = vld [vmem:[#allocation2 + $0xf0] sm:$0xff]
        %v2719 = vld [vmem:[#allocation2 + $0xf8] sm:$0xff]
        %v2720 = vadd.f32 %v2688, %v2656
        %v2721 = vadd.f32 %v2689, %v2657
        %v2722 = vadd.f32 %v2690, %v2658
        %v2723 = vadd.f32 %v2691, %v2659
        %v2724 = vadd.f32 %v2692, %v2660
        %v2725 = vadd.f32 %v2693, %v2661
        %v2726 = vadd.f32 %v2694, %v2662
        %v2727 = vadd.f32 %v2695, %v2663
        %v2728 = vadd.f32 %v2696, %v2664
        %v2729 = vadd.f32 %v2697, %v2665
        %v2730 = vadd.f32 %v2698, %v2666
        %v2731 = vadd.f32 %v2699, %v2667
        %v2732 = vadd.f32 %v2700, %v2668
        %v2733 = vadd.f32 %v2701, %v2669
        %v2734 = vadd.f32 %v2702, %v2670
        %v2735 = vadd.f32 %v2703, %v2671
        %v2736 = vadd.f32 %v2704, %v2672
        %v2737 = vadd.f32 %v2705, %v2673
        %v2738 = vadd.f32 %v2706, %v2674
        %v2739 = vadd.f32 %v2707, %v2675
        %v2740 = vadd.f32 %v2708, %v2676
        %v2741 = vadd.f32 %v2709, %v2677
        %v2742 = vadd.f32 %v2710, %v2678
        %v2743 = vadd.f32 %v2711, %v2679
        %v2744 = vadd.f32 %v2712, %v2680
        %v2745 = vadd.f32 %v2713, %v2681
        %v2746 = vadd.f32 %v2714, %v2682
        %v2747 = vadd.f32 %v2715, %v2683
        %v2748 = vadd.f32 %v2716, %v2684
        %v2749 = vadd.f32 %v2717, %v2685
        %v2750 = vadd.f32 %v2718, %v2686
        %v2751 = vadd.f32 %v2719, %v2687
        %vm2752 = vcmask 130048
        %2753 = vst.msk [vmem:[#allocation2] sm:$0xff] %vm2752, %v2720
        %2754 = vst.msk [vmem:[#allocation2 + $0x8] sm:$0xff] %vm2752, %v2721
        %2755 = vst.msk [vmem:[#allocation2 + $0x10] sm:$0xff] %vm2752, %v2722
        %2756 = vst.msk [vmem:[#allocation2 + $0x18] sm:$0xff] %vm2752, %v2723
        %2757 = vst.msk [vmem:[#allocation2 + $0x20] sm:$0xff] %vm2752, %v2724
        %2758 = vst.msk [vmem:[#allocation2 + $0x28] sm:$0xff] %vm2752, %v2725
        %2759 = vst.msk [vmem:[#allocation2 + $0x30] sm:$0xff] %vm2752, %v2726
        %2760 = vst.msk [vmem:[#allocation2 + $0x38] sm:$0xff] %vm2752, %v2727
        %2761 = vst.msk [vmem:[#allocation2 + $0x40] sm:$0xff] %vm2752, %v2728
        %2762 = vst.msk [vmem:[#allocation2 + $0x48] sm:$0xff] %vm2752, %v2729
        %2763 = vst.msk [vmem:[#allocation2 + $0x50] sm:$0xff] %vm2752, %v2730
        %2764 = vst.msk [vmem:[#allocation2 + $0x58] sm:$0xff] %vm2752, %v2731
        %2765 = vst.msk [vmem:[#allocation2 + $0x60] sm:$0xff] %vm2752, %v2732
        %2766 = vst.msk [vmem:[#allocation2 + $0x68] sm:$0xff] %vm2752, %v2733
        %2767 = vst.msk [vmem:[#allocation2 + $0x70] sm:$0xff] %vm2752, %v2734
        %2768 = vst.msk [vmem:[#allocation2 + $0x78] sm:$0xff] %vm2752, %v2735
        %2769 = vst.msk [vmem:[#allocation2 + $0x80] sm:$0xff] %vm2752, %v2736
        %2770 = vst.msk [vmem:[#allocation2 + $0x88] sm:$0xff] %vm2752, %v2737
        %2771 = vst.msk [vmem:[#allocation2 + $0x90] sm:$0xff] %vm2752, %v2738
        %2772 = vst.msk [vmem:[#allocation2 + $0x98] sm:$0xff] %vm2752, %v2739
        %2773 = vst.msk [vmem:[#allocation2 + $0xa0] sm:$0xff] %vm2752, %v2740
        %2774 = vst.msk [vmem:[#allocation2 + $0xa8] sm:$0xff] %vm2752, %v2741
        %2775 = vst.msk [vmem:[#allocation2 + $0xb0] sm:$0xff] %vm2752, %v2742
        %2776 = vst.msk [vmem:[#allocation2 + $0xb8] sm:$0xff] %vm2752, %v2743
        %2777 = vst.msk [vmem:[#allocation2 + $0xc0] sm:$0xff] %vm2752, %v2744
        %2778 = vst.msk [vmem:[#allocation2 + $0xc8] sm:$0xff] %vm2752, %v2745
        %2779 = vst.msk [vmem:[#allocation2 + $0xd0] sm:$0xff] %vm2752, %v2746
        %2780 = vst.msk [vmem:[#allocation2 + $0xd8] sm:$0xff] %vm2752, %v2747
        %2781 = vst.msk [vmem:[#allocation2 + $0xe0] sm:$0xff] %vm2752, %v2748
        %2782 = vst.msk [vmem:[#allocation2 + $0xe8] sm:$0xff] %vm2752, %v2749
        %2783 = vst.msk [vmem:[#allocation2 + $0xf0] sm:$0xff] %vm2752, %v2750
        %2784 = vst.msk [vmem:[#allocation2 + $0xf8] sm:$0xff] %vm2752, %v2751
        // Predicated region
        $region37: #{tpu_custom_call.1} parent=31 // pred_check
          %p2785 = pneg %p254
        $region38: #{tpu_custom_call.1} parent=31 // pred_check_branch
          %2787 = sbr.rel (%p2785) target = $region40
        $region39: #{tpu_custom_call.1} parent=31 // pred_region
          %v2788 = vld [vmem:[#allocation2] sm:$0xff]
          %v2789 = vld [vmem:[#allocation2 + $0x8] sm:$0xff]
          %v2790 = vld [vmem:[#allocation2 + $0x20] sm:$0xff]
          %v2791 = vld [vmem:[#allocation2 + $0x28] sm:$0xff]
          %v2792 = vld [vmem:[#allocation2 + $0x40] sm:$0xff]
          %v2793 = vld [vmem:[#allocation2 + $0x48] sm:$0xff]
          %v2794 = vld [vmem:[#allocation2 + $0x60] sm:$0xff]
          %v2795 = vld [vmem:[#allocation2 + $0x68] sm:$0xff]
          %v2796 = vld [vmem:[#allocation2 + $0x80] sm:$0xff]
          %v2797 = vld [vmem:[#allocation2 + $0x88] sm:$0xff]
          %v2798 = vld [vmem:[#allocation2 + $0xa0] sm:$0xff]
          %v2799 = vld [vmem:[#allocation2 + $0xa8] sm:$0xff]
          %v2800 = vld [vmem:[#allocation2 + $0xc0] sm:$0xff]
          %v2801 = vld [vmem:[#allocation2 + $0xc8] sm:$0xff]
          %v2802 = vld [vmem:[#allocation2 + $0xe0] sm:$0xff]
          %v2803 = vld [vmem:[#allocation2 + $0xe8] sm:$0xff]
          %v2804 = vld [vmem:[%s251] sm:$0x1]
          %v2806 = vlaneseq
          %v2807 = vshrl.u32 %v2806, 7
          %v2808 = vsub.s32 0, %v2807
          %v2809 = vrot.slane %v2804, %v2808
          %v2811 = vadd.f32 %v2788, %v2809
          %v2812 = vadd.f32 %v2789, %v2809
          %v2813 = vadd.f32 %v2790, %v2809
          %v2814 = vadd.f32 %v2791, %v2809
          %v2815 = vadd.f32 %v2792, %v2809
          %v2816 = vadd.f32 %v2793, %v2809
          %v2817 = vadd.f32 %v2794, %v2809
          %v2818 = vadd.f32 %v2795, %v2809
          %v2819 = vadd.f32 %v2796, %v2809
          %v2820 = vadd.f32 %v2797, %v2809
          %v2821 = vadd.f32 %v2798, %v2809
          %v2822 = vadd.f32 %v2799, %v2809
          %v2823 = vadd.f32 %v2800, %v2809
          %v2824 = vadd.f32 %v2801, %v2809
          %v2825 = vadd.f32 %v2802, %v2809
          %v2826 = vadd.f32 %v2803, %v2809
          %v2827 = vmax.f32 %v2811, 0.0
          %v2828 = vmax.f32 %v2812, 0.0
          %v2829 = vmax.f32 %v2813, 0.0
          %v2830 = vmax.f32 %v2814, 0.0
          %v2831 = vmax.f32 %v2815, 0.0
          %v2832 = vmax.f32 %v2816, 0.0
          %v2833 = vmax.f32 %v2817, 0.0
          %v2834 = vmax.f32 %v2818, 0.0
          %v2835 = vmax.f32 %v2819, 0.0
          %v2836 = vmax.f32 %v2820, 0.0
          %v2837 = vmax.f32 %v2821, 0.0
          %v2838 = vmax.f32 %v2822, 0.0
          %v2839 = vmax.f32 %v2823, 0.0
          %v2840 = vmax.f32 %v2824, 0.0
          %v2841 = vmax.f32 %v2825, 0.0
          %v2842 = vmax.f32 %v2826, 0.0
          %v2843 = vpack.c.bf16 %v2828, %v2827
          %v2844 = vpack.c.bf16 %v2830, %v2829
          %v2845 = vpack.c.bf16 %v2832, %v2831
          %v2846 = vpack.c.bf16 %v2834, %v2833
          %v2847 = vpack.c.bf16 %v2836, %v2835
          %v2848 = vpack.c.bf16 %v2838, %v2837
          %v2849 = vpack.c.bf16 %v2840, %v2839
          %v2850 = vpack.c.bf16 %v2842, %v2841
          %v2859 = vunpack.c.l.b16 %v2843
          %v2860 = vunpack.c.h.b16 %v2843
          %v2861 = vunpack.c.l.b16 %v2844
          %v2862 = vunpack.c.h.b16 %v2844
          %v2863 = vunpack.c.l.b16 %v2845
          %v2864 = vunpack.c.h.b16 %v2845
          %v2865 = vunpack.c.l.b16 %v2846
          %v2866 = vunpack.c.h.b16 %v2846
          %v2867 = vunpack.c.l.b16 %v2847
          %v2868 = vunpack.c.h.b16 %v2847
          %v2869 = vunpack.c.l.b16 %v2848
          %v2870 = vunpack.c.h.b16 %v2848
          %v2871 = vunpack.c.l.b16 %v2849
          %v2872 = vunpack.c.h.b16 %v2849
          %v2873 = vunpack.c.l.b16 %v2850
          %v2874 = vunpack.c.h.b16 %v2850
          %v2875 = vpack.c.b16 %v2859, %v2859
          %v2876 = vpack.c.b16 %v2860, %v2860
          %v2877 = vpack.c.b16 %v2861, %v2861
          %v2878 = vpack.c.b16 %v2862, %v2862
          %v2879 = vpack.c.b16 %v2863, %v2863
          %v2880 = vpack.c.b16 %v2864, %v2864
          %v2881 = vpack.c.b16 %v2865, %v2865
          %v2882 = vpack.c.b16 %v2866, %v2866
          %v2883 = vpack.c.b16 %v2867, %v2867
          %v2884 = vpack.c.b16 %v2868, %v2868
          %v2885 = vpack.c.b16 %v2869, %v2869
          %v2886 = vpack.c.b16 %v2870, %v2870
          %v2887 = vpack.c.b16 %v2871, %v2871
          %v2888 = vpack.c.b16 %v2872, %v2872
          %v2889 = vpack.c.b16 %v2873, %v2873
          %v2890 = vpack.c.b16 %v2874, %v2874
          %vm2907 = vcmask 125952
          %2908 = vst.msk [vmem:[%s233] sm:$0xf] %vm2907, %v2875
          %2909 = vst.msk [vmem:[%s233 + $0x4] sm:$0xf] %vm2907, %v2876
          %2910 = vst.msk [vmem:[%s233 + $0x8] sm:$0xf] %vm2907, %v2877
          %2911 = vst.msk [vmem:[%s233 + $0xc] sm:$0xf] %vm2907, %v2878
          %2912 = vst.msk [vmem:[%s233 + $0x10] sm:$0xf] %vm2907, %v2879
          %2913 = vst.msk [vmem:[%s233 + $0x14] sm:$0xf] %vm2907, %v2880
          %2914 = vst.msk [vmem:[%s233 + $0x18] sm:$0xf] %vm2907, %v2881
          %2915 = vst.msk [vmem:[%s233 + $0x1c] sm:$0xf] %vm2907, %v2882
          %2916 = vst.msk [vmem:[%s233 + $0x20] sm:$0xf] %vm2907, %v2883
          %2917 = vst.msk [vmem:[%s233 + $0x24] sm:$0xf] %vm2907, %v2884
          %2918 = vst.msk [vmem:[%s233 + $0x28] sm:$0xf] %vm2907, %v2885
          %2919 = vst.msk [vmem:[%s233 + $0x2c] sm:$0xf] %vm2907, %v2886
          %2920 = vst.msk [vmem:[%s233 + $0x30] sm:$0xf] %vm2907, %v2887
          %2921 = vst.msk [vmem:[%s233 + $0x34] sm:$0xf] %vm2907, %v2888
          %2922 = vst.msk [vmem:[%s233 + $0x38] sm:$0xf] %vm2907, %v2889
          %2923 = vst.msk [vmem:[%s233 + $0x3c] sm:$0xf] %vm2907, %v2890
        $region40: #{tpu_custom_call.1} parent=31 // pred_fallthru
          _
        %s2924 = sand.u32 %s137, 1
        %s2925 = scalar_lea.sflag [#allocation4], %s2924
        %s2926 = sand.u32 %s137, 1
        %s2927 = smul.addr %s2926, 64
        %s2928 = scalar_lea.vmem [#allocation3], %s2927
        // Predicated region
        $region41: #{tpu_custom_call.1} parent=31 // pred_check
          %p2929 = pneg %p147
        $region42: #{tpu_custom_call.1} parent=31 // pred_check_branch
          %2931 = sbr.rel (%p2929) target = $region44
        $region43: #{tpu_custom_call.1} parent=31 // pred_region
          %s2932 = smul.u32 8, %s24
          %s2934 = ssub.s32 1024, 1024
          %2935 = vsyncadd %s2925, %s2934
          %s2936 = smul.addr %s2932, 2
          %s2937 = sadd.s32 %s25, %s2936
          %s2938 = smul.addr %s23, 16
          %s2939 = sadd.s32 %s2937, %s2938
          %s2940 = smul.addr %s2939, 64
          %s2941 = scalar_lea.hbm %s3, %s2940
          %s2942 = sshll.u32 %s2928, 4
          %s2943 = int_to_ptr.vmem [resolvable:$true] %s2942
          %2948 = dma.vmem_to_hbm [thread:$0]  %s2943, 1024, %s2941, %s2925, 64, 64, 4
        $region44: #{tpu_custom_call.1} parent=31 // pred_fallthru
          _
      $region32: #{tpu_custom_call.1} parent=5 // pred_fallthru
        _
      %p2949 = scmp.le.s32.totalorder 2, %s12
      // Predicated region
      $region45: #{tpu_custom_call.1} parent=5 // pred_check
        %p2950 = pneg %p2949
      $region46: #{tpu_custom_call.1} parent=5 // pred_check_branch
        %2952 = sbr.rel (%p2950) target = $region48
      $region47: #{tpu_custom_call.1} parent=5 // pred_region
        %s2953 = ssub.s32 %s12, 2
        // Predicated region
        $region49: #{tpu_custom_call.1} parent=47 // pred_check
          %p2954 = pneg %p153
        $region50: #{tpu_custom_call.1} parent=47 // pred_check_branch
          %2956 = sbr.rel (%p2954) target = $region52
        $region51: #{tpu_custom_call.1} parent=47 // pred_region
          %s2957 = sand.u32 %s138, 1
          %s2958 = scalar_lea.sflag [#allocation4], %s2957
          %s2959 = sand.u32 %s138, 1
          %s2960 = smul.addr %s2959, 64
          %s2961 = scalar_lea.vmem [#allocation3], %s2960
          %2962 = dma.done %s2958, 1024
        $region52: #{tpu_custom_call.1} parent=47 // pred_fallthru
          _
      $region48: #{tpu_custom_call.1} parent=5 // pred_fallthru
        _
    $region6: #{tpu_custom_call.1} parent=1 // loop_footer
      %s16 = sadd.s32 1, %s12
    $region7: #{tpu_custom_call.1} parent=1 // loop_footer_branch
      %11 = sbr.rel target = $region3
    $region8: #{tpu_custom_call.1} parent=1 // loop_exit
      _
    %2963 = vsyncpa [#allocation4], 1
    %s2964 = scalar_lea.sflag [#allocation4], 1
    %2965 = vsyncpa %s2964, 1

</llo_original>
